<compile_context>
chip_gen: v6e
topology: v6e:2x2x1
jax: 0.10.0
libtpu: 0.0.40
codegen_flags: <defaults>
</compile_context>

<pallas_src>
import math
import functools

import jax
import jax.numpy as jnp
import numpy as np
from jax import lax
from jax.experimental import pallas as pl
from jax.experimental.pallas import tpu as pltpu


def kernel_size(in_channel):
    k = int((math.log2(in_channel) + 1) // 2)
    return k + 1 if k % 2 == 0 else k


def _round_up(x, m):
    return ((x + m - 1) // m) * m


def _tfam_kernel(t1_ref, t2_ref, cw_ref, cb_ref, sw_ref, sb_ref,
                 out_ref, cpad_ref, spad_ref,
                 *, C, H, W, ck, start, pad_w):
    """One batch element.  t1_ref / t2_ref / out_ref are (C, H*W) in VMEM;
    cw_ref (ck, 4) and sw_ref (4, 49) hold the pre-subtracted conv weight
    differences in VMEM; cb_ref / sb_ref are the scalar bias differences."""
    HW = H * W
    P = ck // 2

    # Load the two feature maps once; reused by both pools and the fusion.
    t1 = t1_ref[...]                                           # (C, HW)
    t2 = t2_ref[...]

    # ---------------- channel attention ----------------
    # Global avg/max pool over H*W (lane reductions); column order matches the
    # PyTorch channel_pool: [t1_avg, t1_max, t2_avg, t2_max].
    cp = jnp.concatenate(
        [jnp.mean(t1, axis=1, keepdims=True),
         jnp.max(t1, axis=1, keepdims=True),
         jnp.mean(t2, axis=1, keepdims=True),
         jnp.max(t2, axis=1, keepdims=True)], axis=1)          # (C, 4)

    # Tiny zero-padded staging buffer along C for the ck-tap 1-D conv.
    if P > 0:
        cpad_ref[0:P, :] = jnp.zeros((P, 4), jnp.float32)
        cpad_ref[P + C:C + 2 * P, :] = jnp.zeros((P, 4), jnp.float32)
    cpad_ref[P:P + C, :] = cp

    # Single "difference" conv (conv1 - conv2 == conv_{w1-w2, b1-b2}),
    # vectorized over the 4 pooled channels: per tap one (C, 4) slice times a
    # (1, 4) weight row, then a lane reduction.
    ch = jnp.zeros((C, 1), jnp.float32)
    for j in range(ck):
        wrow = cw_ref[j:j + 1, :]                              # (1, 4)
        ch = ch + jnp.sum(cpad_ref[j:j + C, :] * wrow,
                          axis=1, keepdims=True)               # (C, 1)
    # softmax over a 2-stack == [sigmoid(a-b), 1 - sigmoid(a-b)]
    ca1 = jax.nn.sigmoid(ch + cb_ref[0])                       # (C, 1)

    # ---------------- spatial attention ----------------
    # Channel pools (sublane reductions) stacked into one (4, HW) matrix.
    spool = jnp.concatenate(
        [jnp.mean(t1, axis=0, keepdims=True),
         jnp.max(t1, axis=0, keepdims=True),
         jnp.mean(t2, axis=0, keepdims=True),
         jnp.max(t2, axis=0, keepdims=True)], axis=0)          # (4, HW)

    # Lane-aligned padded staging buffer: valid data starts at lane offset
    # `start` (multiple of 128) so the writeback is an unmasked full-lane
    # store.  Only the pad strips are zeroed (the select below makes even that
    # optional, but it is two cheap aligned stores).
    spad_ref[:, 0:start] = jnp.zeros((4, start), jnp.float32)
    spad_ref[:, start:start + HW] = spool
    spad_ref[:, start + HW:pad_w] = jnp.zeros((4, pad_w - start - HW),
                                              jnp.float32)

    # Boundary-validity masks for the flattened 7x7 conv (a flat shift wraps
    # across image rows, so taps whose 2-D neighbour is out of range are
    # masked with a select).  Only the 7 column masks stay live; the row mask
    # is recomputed per dy.
    pos = lax.broadcasted_iota(jnp.int32, (1, HW), 1)
    if (W & (W - 1)) == 0:                 # power-of-two fast path (test case)
        xi = jnp.bitwise_and(pos, W - 1)
        yi = jnp.right_shift(pos, int(math.log2(W)))
    else:                                   # general path
        xi = pos % W
        yi = pos // W
    col_ok = [jnp.logical_and(xi >= 3 - dx, xi <= (W - 1) + 3 - dx)
              for dx in range(7)]

    # 49-tap difference conv with the 4 pooled maps folded into the sublane
    # axis; two partial accumulators break the serial add chain; one sublane
    # reduction at the end.
    acc0 = jnp.zeros((4, HW), jnp.float32)
    acc1 = jnp.zeros((4, HW), jnp.float32)
    tap = 0
    for dy in range(7):
        row_ok = jnp.logical_and(yi >= 3 - dy, yi <= (H - 1) + 3 - dy)
        for dx in range(7):
            off = start + (dy - 3) * W + (dx - 3)
            valid = jnp.logical_and(row_ok, col_ok[dx])        # (1, HW)
            sl = spad_ref[:, off:off + HW]                     # (4, HW)
            wcol = sw_ref[:, tap:tap + 1]                      # (4, 1)
            contrib = jnp.where(valid, sl, 0.0) * wcol         # select, not mul
            if tap & 1:
                acc1 = acc1 + contrib
            else:
                acc0 = acc0 + contrib
            tap += 1
    sd = jnp.sum(acc0 + acc1, axis=0, keepdims=True) + sb_ref[0]   # (1, HW)
    sp1 = jax.nn.sigmoid(sd)                                       # (1, HW)

    # ---------------- fusion ----------------
    # attention1 = ca1 + sp1 + 1 and attention2 = (1-ca1) + (1-sp1) + 1,
    # so attention1 + attention2 == 4 and
    #   fuse = a1 * t1 + (4 - a1) * t2 = a1 * (t1 - t2) + 4 * t2.
    a1 = ca1 + sp1 + 1.0                                           # (C, HW)
    out_ref[...] = a1 * (t1 - t2) + 4.0 * t2


def tfam_pallas(t1, t2, params):
    cw1, cb1, cw2, cb2, sw1, sb1, sw2, sb2 = params
    B, C, H, W = t1.shape
    ck = cw1.shape[-1]
    HW = H * W
    P = ck // 2

    # Lane-aligned spatial staging buffer geometry.
    start = _round_up(3 * W + 3, 128)
    pad_w = start + _round_up(HW + 3 * W + 3, 128)

    # Pre-subtract the two conv parameter sets: 2-way softmax -> sigmoid(diff).
    cwd = jnp.transpose((cw1 - cw2)[0]).astype(jnp.float32)        # (ck, 4)
    cbd = (cb1 - cb2).reshape(-1).astype(jnp.float32)              # (1,)
    swd = (sw1 - sw2).reshape(4, 49).astype(jnp.float32)           # (4, 49)
    sbd = (sb1 - sb2).reshape(-1).astype(jnp.float32)              # (1,)

    # Lane-dense layout: collapse H, W so the last dim is H*W.
    t1f = t1.reshape(B, C, HW).astype(jnp.float32)
    t2f = t2.reshape(B, C, HW).astype(jnp.float32)

    block = pl.BlockSpec((None, C, HW), lambda b: (b, 0, 0))
    smem = pl.BlockSpec(memory_space=pltpu.MemorySpace.SMEM)

    kernel = functools.partial(_tfam_kernel, C=C, H=H, W=W, ck=ck,
                               start=start, pad_w=pad_w)
    outf = pl.pallas_call(
        kernel,
        out_shape=jax.ShapeDtypeStruct((B, C, HW), jnp.float32),
        grid=(B,),
        in_specs=[block, block,
                  pl.BlockSpec((ck, 4), lambda b: (0, 0)),   # channel conv diff weights (VMEM)
                  smem,                                      # channel conv diff bias
                  pl.BlockSpec((4, 49), lambda b: (0, 0)),   # spatial conv diff weights (VMEM)
                  smem],                                     # spatial conv diff bias
        out_specs=block,
        scratch_shapes=[
            pltpu.VMEM((C + 2 * P, 4), jnp.float32),   # padded channel pool
            pltpu.VMEM((4, pad_w), jnp.float32),       # padded flat spatial pool
        ],
        compiler_params=pltpu.CompilerParams(
            # batch axis is independent -> shard across TensorCores on v7x.
            dimension_semantics=("parallel",)),
    )(t1f, t2f, cwd, cbd, swd, sbd)
    return outf.reshape(B, C, H, W)


def tfam_reference(t1, t2, params):
    """Pure-JAX reference mirroring the PyTorch module semantics."""
    cw1, cb1, cw2, cb2, sw1, sb1, sw2, sb2 = params
    ck = cw1.shape[-1]

    t1a = jnp.mean(t1, axis=(2, 3), keepdims=True)
    t1m = jnp.max(t1, axis=(2, 3), keepdims=True)
    t2a = jnp.mean(t2, axis=(2, 3), keepdims=True)
    t2m = jnp.max(t2, axis=(2, 3), keepdims=True)
    cp = jnp.concatenate([t1a, t1m, t2a, t2m], axis=2)[..., 0]   # (B, C, 4)
    cp = jnp.transpose(cp, (0, 2, 1))                            # (B, 4, C)

    def conv1d(x, w, b):
        y = lax.conv_general_dilated(x, w, (1,), [(ck // 2, ck // 2)],
                                     dimension_numbers=('NCH', 'OIH', 'NCH'))
        return y + b[None, :, None]

    c1 = conv1d(cp, cw1, cb1)
    c2 = conv1d(cp, cw2, cb2)
    cs = jax.nn.softmax(jnp.stack([c1, c2], axis=0), axis=0)     # (2, B, 1, C)
    cs = jnp.swapaxes(cs, -1, -2)[..., None]                     # (2, B, C, 1, 1)

    s1a = jnp.mean(t1, axis=1, keepdims=True)
    s1m = jnp.max(t1, axis=1, keepdims=True)
    s2a = jnp.mean(t2, axis=1, keepdims=True)
    s2m = jnp.max(t2, axis=1, keepdims=True)
    sp = jnp.concatenate([s1a, s1m, s2a, s2m], axis=1)           # (B, 4, H, W)

    def conv2d(x, w, b):
        y = lax.conv_general_dilated(x, w, (1, 1), [(3, 3), (3, 3)],
                                     dimension_numbers=('NCHW', 'OIHW', 'NCHW'))
        return y + b[None, :, None, None]

    sconv1 = conv2d(sp, sw1, sb1)
    sconv2 = conv2d(sp, sw2, sb2)
    ss = jax.nn.softmax(jnp.stack([sconv1, sconv2], axis=0), axis=0)

    sa = cs + ss + 1.0                                           # (2, B, C, H, W)
    return sa[0] * t1 + sa[1] * t2


if __name__ == "__main__":
    B, C, H, W = 2, 16, 16, 16
    ck = kernel_size(C)   # = 3 for C = 16

    key = jax.random.PRNGKey(0)
    keys = jax.random.split(key, 10)
    t1 = jax.random.normal(keys[0], (B, C, H, W), jnp.float32)
    t2 = jax.random.normal(keys[1], (B, C, H, W), jnp.float32)

    # Deterministic synthetic parameters (PyTorch conv layouts).
    cw1 = 0.3 * jax.random.normal(keys[2], (1, 4, ck), jnp.float32)    # Conv1d(4,1,k)
    cb1 = 0.1 * jax.random.normal(keys[3], (1,), jnp.float32)
    cw2 = 0.3 * jax.random.normal(keys[4], (1, 4, ck), jnp.float32)
    cb2 = 0.1 * jax.random.normal(keys[5], (1,), jnp.float32)
    sw1 = 0.1 * jax.random.normal(keys[6], (1, 4, 7, 7), jnp.float32)  # Conv2d(4,1,7)
    sb1 = 0.1 * jax.random.normal(keys[7], (1,), jnp.float32)
    sw2 = 0.1 * jax.random.normal(keys[8], (1, 4, 7, 7), jnp.float32)
    sb2 = 0.1 * jax.random.normal(keys[9], (1,), jnp.float32)
    params = (cw1, cb1, cw2, cb2, sw1, sb1, sw2, sb2)

    out = jax.block_until_ready(tfam_pallas(t1, t2, params))
    ref = jax.block_until_ready(tfam_reference(t1, t2, params))

    np.testing.assert_allclose(np.asarray(out), np.asarray(ref),
                               rtol=1e-4, atol=1e-4)
    print("KERNEL_OK")
</pallas_src>

<mosaic_0001>
module attributes {stable_mosaic.version = 11 : i64} {
  func.func @_tfam_kernel(%arg0: i32, %arg1: memref<1x16x256xf32, #tpu.memory_space<vmem>>, %arg2: memref<1x16x256xf32, #tpu.memory_space<vmem>>, %arg3: memref<3x4xf32, #tpu.memory_space<vmem>>, %arg4: memref<1xf32, #tpu.memory_space<smem>>, %arg5: memref<4x49xf32, #tpu.memory_space<vmem>>, %arg6: memref<1xf32, #tpu.memory_space<smem>>, %arg7: memref<1x16x256xf32, #tpu.memory_space<vmem>>, %arg8: memref<18x4xf32, #tpu.memory_space<vmem>>, %arg9: memref<4x512xf32, #tpu.memory_space<vmem>>) attributes {dimension_semantics = [#tpu.dimension_semantics<parallel>], iteration_bounds = array<i64: 2>, scalar_prefetch = 0 : i64, scratch_operands = 2 : i64, tpu.core_type = #tpu.core_type<tc>, window_params = [{transform_indices = @transform_0, window_bounds = array<i64: 1, 16, 256>}, {transform_indices = @transform_1, window_bounds = array<i64: 1, 16, 256>}, {pipeline_mode = #tpu.pipeline_mode<synchronous>, transform_indices = @transform_2, window_bounds = array<i64: 3, 4>}, {transform_indices = @transform_3, window_bounds = array<i64: 1>}, {pipeline_mode = #tpu.pipeline_mode<synchronous>, transform_indices = @transform_4, window_bounds = array<i64: 4, 49>}, {transform_indices = @transform_5, window_bounds = array<i64: 1>}, {transform_indices = @transform_6, window_bounds = array<i64: 1, 16, 256>}]} {
    %c0 = arith.constant 0 : index
    %c0_0 = arith.constant 0 : index
    %c0_1 = arith.constant 0 : index
    %0 = vector.load %arg1[%c0, %c0_0, %c0_1] : memref<1x16x256xf32, #tpu.memory_space<vmem>>, vector<1x16x256xf32>
    %1 = vector.shape_cast %0 : vector<1x16x256xf32> to vector<16x256xf32>
    %c0_2 = arith.constant 0 : index
    %c0_3 = arith.constant 0 : index
    %c0_4 = arith.constant 0 : index
    %2 = vector.load %arg2[%c0_2, %c0_3, %c0_4] : memref<1x16x256xf32, #tpu.memory_space<vmem>>, vector<1x16x256xf32>
    %3 = vector.shape_cast %2 : vector<1x16x256xf32> to vector<16x256xf32>
    %cst = arith.constant dense<0.000000e+00> : vector<16xf32>
    %4 = vector.multi_reduction <add>, %1, %cst [1] : vector<16x256xf32> to vector<16xf32>
    %5 = vector.shape_cast %4 : vector<16xf32> to vector<16x1xf32>
    %cst_5 = arith.constant 2.560000e+02 : f32
    %6 = vector.broadcast %cst_5 : f32 to vector<16x1xf32>
    %7 = arith.divf %5, %6 : vector<16x1xf32>
    %cst_6 = arith.constant dense<0xFF800000> : vector<16xf32>
    %8 = vector.multi_reduction <maximumf>, %1, %cst_6 [1] : vector<16x256xf32> to vector<16xf32>
    %9 = vector.shape_cast %8 : vector<16xf32> to vector<16x1xf32>
    %cst_7 = arith.constant dense<0.000000e+00> : vector<16xf32>
    %10 = vector.multi_reduction <add>, %3, %cst_7 [1] : vector<16x256xf32> to vector<16xf32>
    %11 = vector.shape_cast %10 : vector<16xf32> to vector<16x1xf32>
    %cst_8 = arith.constant 2.560000e+02 : f32
    %12 = vector.broadcast %cst_8 : f32 to vector<16x1xf32>
    %13 = arith.divf %11, %12 : vector<16x1xf32>
    %cst_9 = arith.constant dense<0xFF800000> : vector<16xf32>
    %14 = vector.multi_reduction <maximumf>, %3, %cst_9 [1] : vector<16x256xf32> to vector<16xf32>
    %15 = vector.shape_cast %14 : vector<16xf32> to vector<16x1xf32>
    %16 = tpu.concatenate %7, %9, %13, %15 in 1 : vector<16x1xf32>, vector<16x1xf32>, vector<16x1xf32>, vector<16x1xf32> -> vector<16x4xf32>
    %cst_10 = arith.constant 0.000000e+00 : f32
    %17 = vector.broadcast %cst_10 : f32 to vector<1x4xf32>
    %c0_11 = arith.constant 0 : index
    %c0_12 = arith.constant 0 : index
    %18 = vector.load %arg8[%c0_11, %c0_12] : memref<18x4xf32, #tpu.memory_space<vmem>>, vector<1x4xf32>
    tpu.vector_store %arg8[%c0_11, %c0_12], %17 {strides = array<i32>} : memref<18x4xf32, #tpu.memory_space<vmem>>, vector<1x4xf32>,
    %cst_13 = arith.constant 0.000000e+00 : f32
    %19 = vector.broadcast %cst_13 : f32 to vector<1x4xf32>
    %c17 = arith.constant 17 : index
    %c0_14 = arith.constant 0 : index
    %20 = vector.load %arg8[%c17, %c0_14] : memref<18x4xf32, #tpu.memory_space<vmem>>, vector<1x4xf32>
    tpu.vector_store %arg8[%c17, %c0_14], %19 {strides = array<i32>} : memref<18x4xf32, #tpu.memory_space<vmem>>, vector<1x4xf32>,
    %c1 = arith.constant 1 : index
    %c0_15 = arith.constant 0 : index
    %21 = vector.load %arg8[%c1, %c0_15] : memref<18x4xf32, #tpu.memory_space<vmem>>, vector<16x4xf32>
    tpu.vector_store %arg8[%c1, %c0_15], %16 {strides = array<i32>} : memref<18x4xf32, #tpu.memory_space<vmem>>, vector<16x4xf32>,
    %cst_16 = arith.constant 0.000000e+00 : f32
    %22 = vector.broadcast %cst_16 : f32 to vector<16x1xf32>
    %c0_17 = arith.constant 0 : index
    %c0_18 = arith.constant 0 : index
    %23 = vector.load %arg3[%c0_17, %c0_18] : memref<3x4xf32, #tpu.memory_space<vmem>>, vector<1x4xf32>
    %c0_19 = arith.constant 0 : index
    %c0_20 = arith.constant 0 : index
    %24 = vector.load %arg8[%c0_19, %c0_20] : memref<18x4xf32, #tpu.memory_space<vmem>>, vector<16x4xf32>
    %25 = vector.broadcast %23 : vector<1x4xf32> to vector<16x4xf32>
    %26 = arith.mulf %24, %25 : vector<16x4xf32>
    %cst_21 = arith.constant dense<0.000000e+00> : vector<16xf32>
    %27 = vector.multi_reduction <add>, %26, %cst_21 [1] : vector<16x4xf32> to vector<16xf32>
    %28 = vector.shape_cast %27 : vector<16xf32> to vector<16x1xf32>
    %29 = arith.addf %22, %28 : vector<16x1xf32>
    %c1_22 = arith.constant 1 : index
    %c0_23 = arith.constant 0 : index
    %30 = vector.load %arg3[%c1_22, %c0_23] : memref<3x4xf32, #tpu.memory_space<vmem>>, vector<1x4xf32>
    %c1_24 = arith.constant 1 : index
    %c0_25 = arith.constant 0 : index
    %31 = vector.load %arg8[%c1_24, %c0_25] : memref<18x4xf32, #tpu.memory_space<vmem>>, vector<16x4xf32>
    %32 = vector.broadcast %30 : vector<1x4xf32> to vector<16x4xf32>
    %33 = arith.mulf %31, %32 : vector<16x4xf32>
    %cst_26 = arith.constant dense<0.000000e+00> : vector<16xf32>
    %34 = vector.multi_reduction <add>, %33, %cst_26 [1] : vector<16x4xf32> to vector<16xf32>
    %35 = vector.shape_cast %34 : vector<16xf32> to vector<16x1xf32>
    %36 = arith.addf %29, %35 : vector<16x1xf32>
    %c2 = arith.constant 2 : index
    %c0_27 = arith.constant 0 : index
    %37 = vector.load %arg3[%c2, %c0_27] : memref<3x4xf32, #tpu.memory_space<vmem>>, vector<1x4xf32>
    %c2_28 = arith.constant 2 : index
    %c0_29 = arith.constant 0 : index
    %38 = vector.load %arg8[%c2_28, %c0_29] : memref<18x4xf32, #tpu.memory_space<vmem>>, vector<16x4xf32>
    %39 = vector.broadcast %37 : vector<1x4xf32> to vector<16x4xf32>
    %40 = arith.mulf %38, %39 : vector<16x4xf32>
    %cst_30 = arith.constant dense<0.000000e+00> : vector<16xf32>
    %41 = vector.multi_reduction <add>, %40, %cst_30 [1] : vector<16x4xf32> to vector<16xf32>
    %42 = vector.shape_cast %41 : vector<16xf32> to vector<16x1xf32>
    %43 = arith.addf %36, %42 : vector<16x1xf32>
    %c0_31 = arith.constant 0 : index
    %44 = memref.load %arg4[%c0_31] : memref<1xf32, #tpu.memory_space<smem>>
    %45 = vector.broadcast %44 : f32 to vector<16x1xf32>
    %46 = arith.addf %43, %45 : vector<16x1xf32>
    %47 = arith.negf %46 : vector<16x1xf32>
    %48 = math.exp %47 : vector<16x1xf32>
    %cst_32 = arith.constant 1.000000e+00 : f32
    %49 = vector.broadcast %cst_32 : f32 to vector<16x1xf32>
    %50 = arith.addf %49, %48 : vector<16x1xf32>
    %51 = arith.divf %49, %50 : vector<16x1xf32>
    %cst_33 = arith.constant dense<0.000000e+00> : vector<256xf32>
    %52 = vector.multi_reduction <add>, %1, %cst_33 [0] : vector<16x256xf32> to vector<256xf32>
    %53 = vector.shape_cast %52 : vector<256xf32> to vector<1x256xf32>
    %cst_34 = arith.constant 1.600000e+01 : f32
    %54 = vector.broadcast %cst_34 : f32 to vector<1x256xf32>
    %55 = arith.divf %53, %54 : vector<1x256xf32>
    %cst_35 = arith.constant dense<0xFF800000> : vector<256xf32>
    %56 = vector.multi_reduction <maximumf>, %1, %cst_35 [0] : vector<16x256xf32> to vector<256xf32>
    %57 = vector.shape_cast %56 : vector<256xf32> to vector<1x256xf32>
    %cst_36 = arith.constant dense<0.000000e+00> : vector<256xf32>
    %58 = vector.multi_reduction <add>, %3, %cst_36 [0] : vector<16x256xf32> to vector<256xf32>
    %59 = vector.shape_cast %58 : vector<256xf32> to vector<1x256xf32>
    %cst_37 = arith.constant 1.600000e+01 : f32
    %60 = vector.broadcast %cst_37 : f32 to vector<1x256xf32>
    %61 = arith.divf %59, %60 : vector<1x256xf32>
    %cst_38 = arith.constant dense<0xFF800000> : vector<256xf32>
    %62 = vector.multi_reduction <maximumf>, %3, %cst_38 [0] : vector<16x256xf32> to vector<256xf32>
    %63 = vector.shape_cast %62 : vector<256xf32> to vector<1x256xf32>
    %64 = tpu.concatenate %55, %57, %61, %63 in 0 : vector<1x256xf32>, vector<1x256xf32>, vector<1x256xf32>, vector<1x256xf32> -> vector<4x256xf32>
    %cst_39 = arith.constant 0.000000e+00 : f32
    %65 = vector.broadcast %cst_39 : f32 to vector<4x128xf32>
    %c0_40 = arith.constant 0 : index
    %c0_41 = arith.constant 0 : index
    %66 = vector.load %arg9[%c0_40, %c0_41] : memref<4x512xf32, #tpu.memory_space<vmem>>, vector<4x128xf32>
    tpu.vector_store %arg9[%c0_40, %c0_41], %65 {strides = array<i32>} : memref<4x512xf32, #tpu.memory_space<vmem>>, vector<4x128xf32>,
    %c0_42 = arith.constant 0 : index
    %c128 = arith.constant 128 : index
    %67 = vector.load %arg9[%c0_42, %c128] : memref<4x512xf32, #tpu.memory_space<vmem>>, vector<4x256xf32>
    tpu.vector_store %arg9[%c0_42, %c128], %64 {strides = array<i32>} : memref<4x512xf32, #tpu.memory_space<vmem>>, vector<4x256xf32>,
    %cst_43 = arith.constant 0.000000e+00 : f32
    %68 = vector.broadcast %cst_43 : f32 to vector<4x128xf32>
    %c0_44 = arith.constant 0 : index
    %c384 = arith.constant 384 : index
    %69 = vector.load %arg9[%c0_44, %c384] : memref<4x512xf32, #tpu.memory_space<vmem>>, vector<4x128xf32>
    tpu.vector_store %arg9[%c0_44, %c384], %68 {strides = array<i32>} : memref<4x512xf32, #tpu.memory_space<vmem>>, vector<4x128xf32>,
    %70 = tpu.iota {dimensions = array<i32: 1>} : vector<1x256xi32>
    %c15_i32 = arith.constant 15 : i32
    %71 = vector.broadcast %c15_i32 : i32 to vector<1x256xi32>
    %72 = arith.andi %70, %71 : vector<1x256xi32>
    %c4_i32 = arith.constant 4 : i32
    %73 = vector.broadcast %c4_i32 : i32 to vector<1x256xi32>
    %74 = arith.shrsi %70, %73 : vector<1x256xi32>
    %c3_i32 = arith.constant 3 : i32
    %75 = vector.broadcast %c3_i32 : i32 to vector<1x256xi32>
    %76 = arith.cmpi sge, %72, %75 : vector<1x256xi32>
    %c18_i32 = arith.constant 18 : i32
    %77 = vector.broadcast %c18_i32 : i32 to vector<1x256xi32>
    %78 = arith.cmpi sle, %72, %77 : vector<1x256xi32>
    %79 = arith.andi %76, %78 : vector<1x256xi1>
    %c2_i32 = arith.constant 2 : i32
    %80 = vector.broadcast %c2_i32 : i32 to vector<1x256xi32>
    %81 = arith.cmpi sge, %72, %80 : vector<1x256xi32>
    %c17_i32 = arith.constant 17 : i32
    %82 = vector.broadcast %c17_i32 : i32 to vector<1x256xi32>
    %83 = arith.cmpi sle, %72, %82 : vector<1x256xi32>
    %84 = arith.andi %81, %83 : vector<1x256xi1>
    %c1_i32 = arith.constant 1 : i32
    %85 = vector.broadcast %c1_i32 : i32 to vector<1x256xi32>
    %86 = arith.cmpi sge, %72, %85 : vector<1x256xi32>
    %c16_i32 = arith.constant 16 : i32
    %87 = vector.broadcast %c16_i32 : i32 to vector<1x256xi32>
    %88 = arith.cmpi sle, %72, %87 : vector<1x256xi32>
    %89 = arith.andi %86, %88 : vector<1x256xi1>
    %c0_i32 = arith.constant 0 : i32
    %90 = vector.broadcast %c0_i32 : i32 to vector<1x256xi32>
    %91 = arith.cmpi sge, %72, %90 : vector<1x256xi32>
    %c15_i32_45 = arith.constant 15 : i32
    %92 = vector.broadcast %c15_i32_45 : i32 to vector<1x256xi32>
    %93 = arith.cmpi sle, %72, %92 : vector<1x256xi32>
    %94 = arith.andi %91, %93 : vector<1x256xi1>
    %c-1_i32 = arith.constant -1 : i32
    %95 = vector.broadcast %c-1_i32 : i32 to vector<1x256xi32>
    %96 = arith.cmpi sge, %72, %95 : vector<1x256xi32>
    %c14_i32 = arith.constant 14 : i32
    %97 = vector.broadcast %c14_i32 : i32 to vector<1x256xi32>
    %98 = arith.cmpi sle, %72, %97 : vector<1x256xi32>
    %99 = arith.andi %96, %98 : vector<1x256xi1>
    %c-2_i32 = arith.constant -2 : i32
    %100 = vector.broadcast %c-2_i32 : i32 to vector<1x256xi32>
    %101 = arith.cmpi sge, %72, %100 : vector<1x256xi32>
    %c13_i32 = arith.constant 13 : i32
    %102 = vector.broadcast %c13_i32 : i32 to vector<1x256xi32>
    %103 = arith.cmpi sle, %72, %102 : vector<1x256xi32>
    %104 = arith.andi %101, %103 : vector<1x256xi1>
    %c-3_i32 = arith.constant -3 : i32
    %105 = vector.broadcast %c-3_i32 : i32 to vector<1x256xi32>
    %106 = arith.cmpi sge, %72, %105 : vector<1x256xi32>
    %c12_i32 = arith.constant 12 : i32
    %107 = vector.broadcast %c12_i32 : i32 to vector<1x256xi32>
    %108 = arith.cmpi sle, %72, %107 : vector<1x256xi32>
    %109 = arith.andi %106, %108 : vector<1x256xi1>
    %cst_46 = arith.constant 0.000000e+00 : f32
    %110 = vector.broadcast %cst_46 : f32 to vector<4x256xf32>
    %cst_47 = arith.constant 0.000000e+00 : f32
    %111 = vector.broadcast %cst_47 : f32 to vector<4x256xf32>
    %c3_i32_48 = arith.constant 3 : i32
    %112 = vector.broadcast %c3_i32_48 : i32 to vector<1x256xi32>
    %113 = arith.cmpi sge, %74, %112 : vector<1x256xi32>
    %c18_i32_49 = arith.constant 18 : i32
    %114 = vector.broadcast %c18_i32_49 : i32 to vector<1x256xi32>
    %115 = arith.cmpi sle, %74, %114 : vector<1x256xi32>
    %116 = arith.andi %113, %115 : vector<1x256xi1>
    %117 = arith.andi %116, %79 : vector<1x256xi1>
    %c0_50 = arith.constant 0 : index
    %c77 = arith.constant 77 : index
    %118 = vector.load %arg9[%c0_50, %c77] : memref<4x512xf32, #tpu.memory_space<vmem>>, vector<4x256xf32>
    %c0_51 = arith.constant 0 : index
    %c0_52 = arith.constant 0 : index
    %119 = vector.load %arg5[%c0_51, %c0_52] : memref<4x49xf32, #tpu.memory_space<vmem>>, vector<4x1xf32>
    %cst_53 = arith.constant 0.000000e+00 : f32
    %120 = vector.shape_cast %117 : vector<1x256xi1> to vector<1x256xi1>
    %121 = vector.broadcast %120 : vector<1x256xi1> to vector<4x256xi1>
    %122 = vector.broadcast %cst_53 : f32 to vector<4x256xf32>
    %123 = arith.select %121, %118, %122 : vector<4x256xi1>, vector<4x256xf32>
    %124 = vector.broadcast %119 : vector<4x1xf32> to vector<4x256xf32>
    %125 = arith.mulf %123, %124 : vector<4x256xf32>
    %126 = arith.addf %110, %125 : vector<4x256xf32>
    %127 = arith.andi %116, %84 : vector<1x256xi1>
    %c0_54 = arith.constant 0 : index
    %c78 = arith.constant 78 : index
    %128 = vector.load %arg9[%c0_54, %c78] : memref<4x512xf32, #tpu.memory_space<vmem>>, vector<4x256xf32>
    %c0_55 = arith.constant 0 : index
    %c1_56 = arith.constant 1 : index
    %129 = vector.load %arg5[%c0_55, %c1_56] : memref<4x49xf32, #tpu.memory_space<vmem>>, vector<4x1xf32>
    %cst_57 = arith.constant 0.000000e+00 : f32
    %130 = vector.shape_cast %127 : vector<1x256xi1> to vector<1x256xi1>
    %131 = vector.broadcast %130 : vector<1x256xi1> to vector<4x256xi1>
    %132 = vector.broadcast %cst_57 : f32 to vector<4x256xf32>
    %133 = arith.select %131, %128, %132 : vector<4x256xi1>, vector<4x256xf32>
    %134 = vector.broadcast %129 : vector<4x1xf32> to vector<4x256xf32>
    %135 = arith.mulf %133, %134 : vector<4x256xf32>
    %136 = arith.addf %111, %135 : vector<4x256xf32>
    %137 = arith.andi %116, %89 : vector<1x256xi1>
    %c0_58 = arith.constant 0 : index
    %c79 = arith.constant 79 : index
    %138 = vector.load %arg9[%c0_58, %c79] : memref<4x512xf32, #tpu.memory_space<vmem>>, vector<4x256xf32>
    %c0_59 = arith.constant 0 : index
    %c2_60 = arith.constant 2 : index
    %139 = vector.load %arg5[%c0_59, %c2_60] : memref<4x49xf32, #tpu.memory_space<vmem>>, vector<4x1xf32>
    %cst_61 = arith.constant 0.000000e+00 : f32
    %140 = vector.shape_cast %137 : vector<1x256xi1> to vector<1x256xi1>
    %141 = vector.broadcast %140 : vector<1x256xi1> to vector<4x256xi1>
    %142 = vector.broadcast %cst_61 : f32 to vector<4x256xf32>
    %143 = arith.select %141, %138, %142 : vector<4x256xi1>, vector<4x256xf32>
    %144 = vector.broadcast %139 : vector<4x1xf32> to vector<4x256xf32>
    %145 = arith.mulf %143, %144 : vector<4x256xf32>
    %146 = arith.addf %126, %145 : vector<4x256xf32>
    %147 = arith.andi %116, %94 : vector<1x256xi1>
    %c0_62 = arith.constant 0 : index
    %c80 = arith.constant 80 : index
    %148 = vector.load %arg9[%c0_62, %c80] : memref<4x512xf32, #tpu.memory_space<vmem>>, vector<4x256xf32>
    %c0_63 = arith.constant 0 : index
    %c3 = arith.constant 3 : index
    %149 = vector.load %arg5[%c0_63, %c3] : memref<4x49xf32, #tpu.memory_space<vmem>>, vector<4x1xf32>
    %cst_64 = arith.constant 0.000000e+00 : f32
    %150 = vector.shape_cast %147 : vector<1x256xi1> to vector<1x256xi1>
    %151 = vector.broadcast %150 : vector<1x256xi1> to vector<4x256xi1>
    %152 = vector.broadcast %cst_64 : f32 to vector<4x256xf32>
    %153 = arith.select %151, %148, %152 : vector<4x256xi1>, vector<4x256xf32>
    %154 = vector.broadcast %149 : vector<4x1xf32> to vector<4x256xf32>
    %155 = arith.mulf %153, %154 : vector<4x256xf32>
    %156 = arith.addf %136, %155 : vector<4x256xf32>
    %157 = arith.andi %116, %99 : vector<1x256xi1>
    %c0_65 = arith.constant 0 : index
    %c81 = arith.constant 81 : index
    %158 = vector.load %arg9[%c0_65, %c81] : memref<4x512xf32, #tpu.memory_space<vmem>>, vector<4x256xf32>
    %c0_66 = arith.constant 0 : index
    %c4 = arith.constant 4 : index
    %159 = vector.load %arg5[%c0_66, %c4] : memref<4x49xf32, #tpu.memory_space<vmem>>, vector<4x1xf32>
    %cst_67 = arith.constant 0.000000e+00 : f32
    %160 = vector.shape_cast %157 : vector<1x256xi1> to vector<1x256xi1>
    %161 = vector.broadcast %160 : vector<1x256xi1> to vector<4x256xi1>
    %162 = vector.broadcast %cst_67 : f32 to vector<4x256xf32>
    %163 = arith.select %161, %158, %162 : vector<4x256xi1>, vector<4x256xf32>
    %164 = vector.broadcast %159 : vector<4x1xf32> to vector<4x256xf32>
    %165 = arith.mulf %163, %164 : vector<4x256xf32>
    %166 = arith.addf %146, %165 : vector<4x256xf32>
    %167 = arith.andi %116, %104 : vector<1x256xi1>
    %c0_68 = arith.constant 0 : index
    %c82 = arith.constant 82 : index
    %168 = vector.load %arg9[%c0_68, %c82] : memref<4x512xf32, #tpu.memory_space<vmem>>, vector<4x256xf32>
    %c0_69 = arith.constant 0 : index
    %c5 = arith.constant 5 : index
    %169 = vector.load %arg5[%c0_69, %c5] : memref<4x49xf32, #tpu.memory_space<vmem>>, vector<4x1xf32>
    %cst_70 = arith.constant 0.000000e+00 : f32
    %170 = vector.shape_cast %167 : vector<1x256xi1> to vector<1x256xi1>
    %171 = vector.broadcast %170 : vector<1x256xi1> to vector<4x256xi1>
    %172 = vector.broadcast %cst_70 : f32 to vector<4x256xf32>
    %173 = arith.select %171, %168, %172 : vector<4x256xi1>, vector<4x256xf32>
    %174 = vector.broadcast %169 : vector<4x1xf32> to vector<4x256xf32>
    %175 = arith.mulf %173, %174 : vector<4x256xf32>
    %176 = arith.addf %156, %175 : vector<4x256xf32>
    %177 = arith.andi %116, %109 : vector<1x256xi1>
    %c0_71 = arith.constant 0 : index
    %c83 = arith.constant 83 : index
    %178 = vector.load %arg9[%c0_71, %c83] : memref<4x512xf32, #tpu.memory_space<vmem>>, vector<4x256xf32>
    %c0_72 = arith.constant 0 : index
    %c6 = arith.constant 6 : index
    %179 = vector.load %arg5[%c0_72, %c6] : memref<4x49xf32, #tpu.memory_space<vmem>>, vector<4x1xf32>
    %cst_73 = arith.constant 0.000000e+00 : f32
    %180 = vector.shape_cast %177 : vector<1x256xi1> to vector<1x256xi1>
    %181 = vector.broadcast %180 : vector<1x256xi1> to vector<4x256xi1>
    %182 = vector.broadcast %cst_73 : f32 to vector<4x256xf32>
    %183 = arith.select %181, %178, %182 : vector<4x256xi1>, vector<4x256xf32>
    %184 = vector.broadcast %179 : vector<4x1xf32> to vector<4x256xf32>
    %185 = arith.mulf %183, %184 : vector<4x256xf32>
    %186 = arith.addf %166, %185 : vector<4x256xf32>
    %c2_i32_74 = arith.constant 2 : i32
    %187 = vector.broadcast %c2_i32_74 : i32 to vector<1x256xi32>
    %188 = arith.cmpi sge, %74, %187 : vector<1x256xi32>
    %c17_i32_75 = arith.constant 17 : i32
    %189 = vector.broadcast %c17_i32_75 : i32 to vector<1x256xi32>
    %190 = arith.cmpi sle, %74, %189 : vector<1x256xi32>
    %191 = arith.andi %188, %190 : vector<1x256xi1>
    %192 = arith.andi %191, %79 : vector<1x256xi1>
    %c0_76 = arith.constant 0 : index
    %c93 = arith.constant 93 : index
    %193 = vector.load %arg9[%c0_76, %c93] : memref<4x512xf32, #tpu.memory_space<vmem>>, vector<4x256xf32>
    %c0_77 = arith.constant 0 : index
    %c7 = arith.constant 7 : index
    %194 = vector.load %arg5[%c0_77, %c7] : memref<4x49xf32, #tpu.memory_space<vmem>>, vector<4x1xf32>
    %cst_78 = arith.constant 0.000000e+00 : f32
    %195 = vector.shape_cast %192 : vector<1x256xi1> to vector<1x256xi1>
    %196 = vector.broadcast %195 : vector<1x256xi1> to vector<4x256xi1>
    %197 = vector.broadcast %cst_78 : f32 to vector<4x256xf32>
    %198 = arith.select %196, %193, %197 : vector<4x256xi1>, vector<4x256xf32>
    %199 = vector.broadcast %194 : vector<4x1xf32> to vector<4x256xf32>
    %200 = arith.mulf %198, %199 : vector<4x256xf32>
    %201 = arith.addf %176, %200 : vector<4x256xf32>
    %202 = arith.andi %191, %84 : vector<1x256xi1>
    %c0_79 = arith.constant 0 : index
    %c94 = arith.constant 94 : index
    %203 = vector.load %arg9[%c0_79, %c94] : memref<4x512xf32, #tpu.memory_space<vmem>>, vector<4x256xf32>
    %c0_80 = arith.constant 0 : index
    %c8 = arith.constant 8 : index
    %204 = vector.load %arg5[%c0_80, %c8] : memref<4x49xf32, #tpu.memory_space<vmem>>, vector<4x1xf32>
    %cst_81 = arith.constant 0.000000e+00 : f32
    %205 = vector.shape_cast %202 : vector<1x256xi1> to vector<1x256xi1>
    %206 = vector.broadcast %205 : vector<1x256xi1> to vector<4x256xi1>
    %207 = vector.broadcast %cst_81 : f32 to vector<4x256xf32>
    %208 = arith.select %206, %203, %207 : vector<4x256xi1>, vector<4x256xf32>
    %209 = vector.broadcast %204 : vector<4x1xf32> to vector<4x256xf32>
    %210 = arith.mulf %208, %209 : vector<4x256xf32>
    %211 = arith.addf %186, %210 : vector<4x256xf32>
    %212 = arith.andi %191, %89 : vector<1x256xi1>
    %c0_82 = arith.constant 0 : index
    %c95 = arith.constant 95 : index
    %213 = vector.load %arg9[%c0_82, %c95] : memref<4x512xf32, #tpu.memory_space<vmem>>, vector<4x256xf32>
    %c0_83 = arith.constant 0 : index
    %c9 = arith.constant 9 : index
    %214 = vector.load %arg5[%c0_83, %c9] : memref<4x49xf32, #tpu.memory_space<vmem>>, vector<4x1xf32>
    %cst_84 = arith.constant 0.000000e+00 : f32
    %215 = vector.shape_cast %212 : vector<1x256xi1> to vector<1x256xi1>
    %216 = vector.broadcast %215 : vector<1x256xi1> to vector<4x256xi1>
    %217 = vector.broadcast %cst_84 : f32 to vector<4x256xf32>
    %218 = arith.select %216, %213, %217 : vector<4x256xi1>, vector<4x256xf32>
    %219 = vector.broadcast %214 : vector<4x1xf32> to vector<4x256xf32>
    %220 = arith.mulf %218, %219 : vector<4x256xf32>
    %221 = arith.addf %201, %220 : vector<4x256xf32>
    %222 = arith.andi %191, %94 : vector<1x256xi1>
    %c0_85 = arith.constant 0 : index
    %c96 = arith.constant 96 : index
    %223 = vector.load %arg9[%c0_85, %c96] : memref<4x512xf32, #tpu.memory_space<vmem>>, vector<4x256xf32>
    %c0_86 = arith.constant 0 : index
    %c10 = arith.constant 10 : index
    %224 = vector.load %arg5[%c0_86, %c10] : memref<4x49xf32, #tpu.memory_space<vmem>>, vector<4x1xf32>
    %cst_87 = arith.constant 0.000000e+00 : f32
    %225 = vector.shape_cast %222 : vector<1x256xi1> to vector<1x256xi1>
    %226 = vector.broadcast %225 : vector<1x256xi1> to vector<4x256xi1>
    %227 = vector.broadcast %cst_87 : f32 to vector<4x256xf32>
    %228 = arith.select %226, %223, %227 : vector<4x256xi1>, vector<4x256xf32>
    %229 = vector.broadcast %224 : vector<4x1xf32> to vector<4x256xf32>
    %230 = arith.mulf %228, %229 : vector<4x256xf32>
    %231 = arith.addf %211, %230 : vector<4x256xf32>
    %232 = arith.andi %191, %99 : vector<1x256xi1>
    %c0_88 = arith.constant 0 : index
    %c97 = arith.constant 97 : index
    %233 = vector.load %arg9[%c0_88, %c97] : memref<4x512xf32, #tpu.memory_space<vmem>>, vector<4x256xf32>
    %c0_89 = arith.constant 0 : index
    %c11 = arith.constant 11 : index
    %234 = vector.load %arg5[%c0_89, %c11] : memref<4x49xf32, #tpu.memory_space<vmem>>, vector<4x1xf32>
    %cst_90 = arith.constant 0.000000e+00 : f32
    %235 = vector.shape_cast %232 : vector<1x256xi1> to vector<1x256xi1>
    %236 = vector.broadcast %235 : vector<1x256xi1> to vector<4x256xi1>
    %237 = vector.broadcast %cst_90 : f32 to vector<4x256xf32>
    %238 = arith.select %236, %233, %237 : vector<4x256xi1>, vector<4x256xf32>
    %239 = vector.broadcast %234 : vector<4x1xf32> to vector<4x256xf32>
    %240 = arith.mulf %238, %239 : vector<4x256xf32>
    %241 = arith.addf %221, %240 : vector<4x256xf32>
    %242 = arith.andi %191, %104 : vector<1x256xi1>
    %c0_91 = arith.constant 0 : index
    %c98 = arith.constant 98 : index
    %243 = vector.load %arg9[%c0_91, %c98] : memref<4x512xf32, #tpu.memory_space<vmem>>, vector<4x256xf32>
    %c0_92 = arith.constant 0 : index
    %c12 = arith.constant 12 : index
    %244 = vector.load %arg5[%c0_92, %c12] : memref<4x49xf32, #tpu.memory_space<vmem>>, vector<4x1xf32>
    %cst_93 = arith.constant 0.000000e+00 : f32
    %245 = vector.shape_cast %242 : vector<1x256xi1> to vector<1x256xi1>
    %246 = vector.broadcast %245 : vector<1x256xi1> to vector<4x256xi1>
    %247 = vector.broadcast %cst_93 : f32 to vector<4x256xf32>
    %248 = arith.select %246, %243, %247 : vector<4x256xi1>, vector<4x256xf32>
    %249 = vector.broadcast %244 : vector<4x1xf32> to vector<4x256xf32>
    %250 = arith.mulf %248, %249 : vector<4x256xf32>
    %251 = arith.addf %231, %250 : vector<4x256xf32>
    %252 = arith.andi %191, %109 : vector<1x256xi1>
    %c0_94 = arith.constant 0 : index
    %c99 = arith.constant 99 : index
    %253 = vector.load %arg9[%c0_94, %c99] : memref<4x512xf32, #tpu.memory_space<vmem>>, vector<4x256xf32>
    %c0_95 = arith.constant 0 : index
    %c13 = arith.constant 13 : index
    %254 = vector.load %arg5[%c0_95, %c13] : memref<4x49xf32, #tpu.memory_space<vmem>>, vector<4x1xf32>
    %cst_96 = arith.constant 0.000000e+00 : f32
    %255 = vector.shape_cast %252 : vector<1x256xi1> to vector<1x256xi1>
    %256 = vector.broadcast %255 : vector<1x256xi1> to vector<4x256xi1>
    %257 = vector.broadcast %cst_96 : f32 to vector<4x256xf32>
    %258 = arith.select %256, %253, %257 : vector<4x256xi1>, vector<4x256xf32>
    %259 = vector.broadcast %254 : vector<4x1xf32> to vector<4x256xf32>
    %260 = arith.mulf %258, %259 : vector<4x256xf32>
    %261 = arith.addf %241, %260 : vector<4x256xf32>
    %c1_i32_97 = arith.constant 1 : i32
    %262 = vector.broadcast %c1_i32_97 : i32 to vector<1x256xi32>
    %263 = arith.cmpi sge, %74, %262 : vector<1x256xi32>
    %c16_i32_98 = arith.constant 16 : i32
    %264 = vector.broadcast %c16_i32_98 : i32 to vector<1x256xi32>
    %265 = arith.cmpi sle, %74, %264 : vector<1x256xi32>
    %266 = arith.andi %263, %265 : vector<1x256xi1>
    %267 = arith.andi %266, %79 : vector<1x256xi1>
    %c0_99 = arith.constant 0 : index
    %c109 = arith.constant 109 : index
    %268 = vector.load %arg9[%c0_99, %c109] : memref<4x512xf32, #tpu.memory_space<vmem>>, vector<4x256xf32>
    %c0_100 = arith.constant 0 : index
    %c14 = arith.constant 14 : index
    %269 = vector.load %arg5[%c0_100, %c14] : memref<4x49xf32, #tpu.memory_space<vmem>>, vector<4x1xf32>
    %cst_101 = arith.constant 0.000000e+00 : f32
    %270 = vector.shape_cast %267 : vector<1x256xi1> to vector<1x256xi1>
    %271 = vector.broadcast %270 : vector<1x256xi1> to vector<4x256xi1>
    %272 = vector.broadcast %cst_101 : f32 to vector<4x256xf32>
    %273 = arith.select %271, %268, %272 : vector<4x256xi1>, vector<4x256xf32>
    %274 = vector.broadcast %269 : vector<4x1xf32> to vector<4x256xf32>
    %275 = arith.mulf %273, %274 : vector<4x256xf32>
    %276 = arith.addf %251, %275 : vector<4x256xf32>
    %277 = arith.andi %266, %84 : vector<1x256xi1>
    %c0_102 = arith.constant 0 : index
    %c110 = arith.constant 110 : index
    %278 = vector.load %arg9[%c0_102, %c110] : memref<4x512xf32, #tpu.memory_space<vmem>>, vector<4x256xf32>
    %c0_103 = arith.constant 0 : index
    %c15 = arith.constant 15 : index
    %279 = vector.load %arg5[%c0_103, %c15] : memref<4x49xf32, #tpu.memory_space<vmem>>, vector<4x1xf32>
    %cst_104 = arith.constant 0.000000e+00 : f32
    %280 = vector.shape_cast %277 : vector<1x256xi1> to vector<1x256xi1>
    %281 = vector.broadcast %280 : vector<1x256xi1> to vector<4x256xi1>
    %282 = vector.broadcast %cst_104 : f32 to vector<4x256xf32>
    %283 = arith.select %281, %278, %282 : vector<4x256xi1>, vector<4x256xf32>
    %284 = vector.broadcast %279 : vector<4x1xf32> to vector<4x256xf32>
    %285 = arith.mulf %283, %284 : vector<4x256xf32>
    %286 = arith.addf %261, %285 : vector<4x256xf32>
    %287 = arith.andi %266, %89 : vector<1x256xi1>
    %c0_105 = arith.constant 0 : index
    %c111 = arith.constant 111 : index
    %288 = vector.load %arg9[%c0_105, %c111] : memref<4x512xf32, #tpu.memory_space<vmem>>, vector<4x256xf32>
    %c0_106 = arith.constant 0 : index
    %c16 = arith.constant 16 : index
    %289 = vector.load %arg5[%c0_106, %c16] : memref<4x49xf32, #tpu.memory_space<vmem>>, vector<4x1xf32>
    %cst_107 = arith.constant 0.000000e+00 : f32
    %290 = vector.shape_cast %287 : vector<1x256xi1> to vector<1x256xi1>
    %291 = vector.broadcast %290 : vector<1x256xi1> to vector<4x256xi1>
    %292 = vector.broadcast %cst_107 : f32 to vector<4x256xf32>
    %293 = arith.select %291, %288, %292 : vector<4x256xi1>, vector<4x256xf32>
    %294 = vector.broadcast %289 : vector<4x1xf32> to vector<4x256xf32>
    %295 = arith.mulf %293, %294 : vector<4x256xf32>
    %296 = arith.addf %276, %295 : vector<4x256xf32>
    %297 = arith.andi %266, %94 : vector<1x256xi1>
    %c0_108 = arith.constant 0 : index
    %c112 = arith.constant 112 : index
    %298 = vector.load %arg9[%c0_108, %c112] : memref<4x512xf32, #tpu.memory_space<vmem>>, vector<4x256xf32>
    %c0_109 = arith.constant 0 : index
    %c17_110 = arith.constant 17 : index
    %299 = vector.load %arg5[%c0_109, %c17_110] : memref<4x49xf32, #tpu.memory_space<vmem>>, vector<4x1xf32>
    %cst_111 = arith.constant 0.000000e+00 : f32
    %300 = vector.shape_cast %297 : vector<1x256xi1> to vector<1x256xi1>
    %301 = vector.broadcast %300 : vector<1x256xi1> to vector<4x256xi1>
    %302 = vector.broadcast %cst_111 : f32 to vector<4x256xf32>
    %303 = arith.select %301, %298, %302 : vector<4x256xi1>, vector<4x256xf32>
    %304 = vector.broadcast %299 : vector<4x1xf32> to vector<4x256xf32>
    %305 = arith.mulf %303, %304 : vector<4x256xf32>
    %306 = arith.addf %286, %305 : vector<4x256xf32>
    %307 = arith.andi %266, %99 : vector<1x256xi1>
    %c0_112 = arith.constant 0 : index
    %c113 = arith.constant 113 : index
    %308 = vector.load %arg9[%c0_112, %c113] : memref<4x512xf32, #tpu.memory_space<vmem>>, vector<4x256xf32>
    %c0_113 = arith.constant 0 : index
    %c18 = arith.constant 18 : index
    %309 = vector.load %arg5[%c0_113, %c18] : memref<4x49xf32, #tpu.memory_space<vmem>>, vector<4x1xf32>
    %cst_114 = arith.constant 0.000000e+00 : f32
    %310 = vector.shape_cast %307 : vector<1x256xi1> to vector<1x256xi1>
    %311 = vector.broadcast %310 : vector<1x256xi1> to vector<4x256xi1>
    %312 = vector.broadcast %cst_114 : f32 to vector<4x256xf32>
    %313 = arith.select %311, %308, %312 : vector<4x256xi1>, vector<4x256xf32>
    %314 = vector.broadcast %309 : vector<4x1xf32> to vector<4x256xf32>
    %315 = arith.mulf %313, %314 : vector<4x256xf32>
    %316 = arith.addf %296, %315 : vector<4x256xf32>
    %317 = arith.andi %266, %104 : vector<1x256xi1>
    %c0_115 = arith.constant 0 : index
    %c114 = arith.constant 114 : index
    %318 = vector.load %arg9[%c0_115, %c114] : memref<4x512xf32, #tpu.memory_space<vmem>>, vector<4x256xf32>
    %c0_116 = arith.constant 0 : index
    %c19 = arith.constant 19 : index
    %319 = vector.load %arg5[%c0_116, %c19] : memref<4x49xf32, #tpu.memory_space<vmem>>, vector<4x1xf32>
    %cst_117 = arith.constant 0.000000e+00 : f32
    %320 = vector.shape_cast %317 : vector<1x256xi1> to vector<1x256xi1>
    %321 = vector.broadcast %320 : vector<1x256xi1> to vector<4x256xi1>
    %322 = vector.broadcast %cst_117 : f32 to vector<4x256xf32>
    %323 = arith.select %321, %318, %322 : vector<4x256xi1>, vector<4x256xf32>
    %324 = vector.broadcast %319 : vector<4x1xf32> to vector<4x256xf32>
    %325 = arith.mulf %323, %324 : vector<4x256xf32>
    %326 = arith.addf %306, %325 : vector<4x256xf32>
    %327 = arith.andi %266, %109 : vector<1x256xi1>
    %c0_118 = arith.constant 0 : index
    %c115 = arith.constant 115 : index
    %328 = vector.load %arg9[%c0_118, %c115] : memref<4x512xf32, #tpu.memory_space<vmem>>, vector<4x256xf32>
    %c0_119 = arith.constant 0 : index
    %c20 = arith.constant 20 : index
    %329 = vector.load %arg5[%c0_119, %c20] : memref<4x49xf32, #tpu.memory_space<vmem>>, vector<4x1xf32>
    %cst_120 = arith.constant 0.000000e+00 : f32
    %330 = vector.shape_cast %327 : vector<1x256xi1> to vector<1x256xi1>
    %331 = vector.broadcast %330 : vector<1x256xi1> to vector<4x256xi1>
    %332 = vector.broadcast %cst_120 : f32 to vector<4x256xf32>
    %333 = arith.select %331, %328, %332 : vector<4x256xi1>, vector<4x256xf32>
    %334 = vector.broadcast %329 : vector<4x1xf32> to vector<4x256xf32>
    %335 = arith.mulf %333, %334 : vector<4x256xf32>
    %336 = arith.addf %316, %335 : vector<4x256xf32>
    %c0_i32_121 = arith.constant 0 : i32
    %337 = vector.broadcast %c0_i32_121 : i32 to vector<1x256xi32>
    %338 = arith.cmpi sge, %74, %337 : vector<1x256xi32>
    %c15_i32_122 = arith.constant 15 : i32
    %339 = vector.broadcast %c15_i32_122 : i32 to vector<1x256xi32>
    %340 = arith.cmpi sle, %74, %339 : vector<1x256xi32>
    %341 = arith.andi %338, %340 : vector<1x256xi1>
    %342 = arith.andi %341, %79 : vector<1x256xi1>
    %c0_123 = arith.constant 0 : index
    %c125 = arith.constant 125 : index
    %343 = vector.load %arg9[%c0_123, %c125] : memref<4x512xf32, #tpu.memory_space<vmem>>, vector<4x256xf32>
    %c0_124 = arith.constant 0 : index
    %c21 = arith.constant 21 : index
    %344 = vector.load %arg5[%c0_124, %c21] : memref<4x49xf32, #tpu.memory_space<vmem>>, vector<4x1xf32>
    %cst_125 = arith.constant 0.000000e+00 : f32
    %345 = vector.shape_cast %342 : vector<1x256xi1> to vector<1x256xi1>
    %346 = vector.broadcast %345 : vector<1x256xi1> to vector<4x256xi1>
    %347 = vector.broadcast %cst_125 : f32 to vector<4x256xf32>
    %348 = arith.select %346, %343, %347 : vector<4x256xi1>, vector<4x256xf32>
    %349 = vector.broadcast %344 : vector<4x1xf32> to vector<4x256xf32>
    %350 = arith.mulf %348, %349 : vector<4x256xf32>
    %351 = arith.addf %326, %350 : vector<4x256xf32>
    %352 = arith.andi %341, %84 : vector<1x256xi1>
    %c0_126 = arith.constant 0 : index
    %c126 = arith.constant 126 : index
    %353 = vector.load %arg9[%c0_126, %c126] : memref<4x512xf32, #tpu.memory_space<vmem>>, vector<4x256xf32>
    %c0_127 = arith.constant 0 : index
    %c22 = arith.constant 22 : index
    %354 = vector.load %arg5[%c0_127, %c22] : memref<4x49xf32, #tpu.memory_space<vmem>>, vector<4x1xf32>
    %cst_128 = arith.constant 0.000000e+00 : f32
    %355 = vector.shape_cast %352 : vector<1x256xi1> to vector<1x256xi1>
    %356 = vector.broadcast %355 : vector<1x256xi1> to vector<4x256xi1>
    %357 = vector.broadcast %cst_128 : f32 to vector<4x256xf32>
    %358 = arith.select %356, %353, %357 : vector<4x256xi1>, vector<4x256xf32>
    %359 = vector.broadcast %354 : vector<4x1xf32> to vector<4x256xf32>
    %360 = arith.mulf %358, %359 : vector<4x256xf32>
    %361 = arith.addf %336, %360 : vector<4x256xf32>
    %362 = arith.andi %341, %89 : vector<1x256xi1>
    %c0_129 = arith.constant 0 : index
    %c127 = arith.constant 127 : index
    %363 = vector.load %arg9[%c0_129, %c127] : memref<4x512xf32, #tpu.memory_space<vmem>>, vector<4x256xf32>
    %c0_130 = arith.constant 0 : index
    %c23 = arith.constant 23 : index
    %364 = vector.load %arg5[%c0_130, %c23] : memref<4x49xf32, #tpu.memory_space<vmem>>, vector<4x1xf32>
    %cst_131 = arith.constant 0.000000e+00 : f32
    %365 = vector.shape_cast %362 : vector<1x256xi1> to vector<1x256xi1>
    %366 = vector.broadcast %365 : vector<1x256xi1> to vector<4x256xi1>
    %367 = vector.broadcast %cst_131 : f32 to vector<4x256xf32>
    %368 = arith.select %366, %363, %367 : vector<4x256xi1>, vector<4x256xf32>
    %369 = vector.broadcast %364 : vector<4x1xf32> to vector<4x256xf32>
    %370 = arith.mulf %368, %369 : vector<4x256xf32>
    %371 = arith.addf %351, %370 : vector<4x256xf32>
    %372 = arith.andi %341, %94 : vector<1x256xi1>
    %c0_132 = arith.constant 0 : index
    %c128_133 = arith.constant 128 : index
    %373 = vector.load %arg9[%c0_132, %c128_133] : memref<4x512xf32, #tpu.memory_space<vmem>>, vector<4x256xf32>
    %c0_134 = arith.constant 0 : index
    %c24 = arith.constant 24 : index
    %374 = vector.load %arg5[%c0_134, %c24] : memref<4x49xf32, #tpu.memory_space<vmem>>, vector<4x1xf32>
    %cst_135 = arith.constant 0.000000e+00 : f32
    %375 = vector.shape_cast %372 : vector<1x256xi1> to vector<1x256xi1>
    %376 = vector.broadcast %375 : vector<1x256xi1> to vector<4x256xi1>
    %377 = vector.broadcast %cst_135 : f32 to vector<4x256xf32>
    %378 = arith.select %376, %373, %377 : vector<4x256xi1>, vector<4x256xf32>
    %379 = vector.broadcast %374 : vector<4x1xf32> to vector<4x256xf32>
    %380 = arith.mulf %378, %379 : vector<4x256xf32>
    %381 = arith.addf %361, %380 : vector<4x256xf32>
    %382 = arith.andi %341, %99 : vector<1x256xi1>
    %c0_136 = arith.constant 0 : index
    %c129 = arith.constant 129 : index
    %383 = vector.load %arg9[%c0_136, %c129] : memref<4x512xf32, #tpu.memory_space<vmem>>, vector<4x256xf32>
    %c0_137 = arith.constant 0 : index
    %c25 = arith.constant 25 : index
    %384 = vector.load %arg5[%c0_137, %c25] : memref<4x49xf32, #tpu.memory_space<vmem>>, vector<4x1xf32>
    %cst_138 = arith.constant 0.000000e+00 : f32
    %385 = vector.shape_cast %382 : vector<1x256xi1> to vector<1x256xi1>
    %386 = vector.broadcast %385 : vector<1x256xi1> to vector<4x256xi1>
    %387 = vector.broadcast %cst_138 : f32 to vector<4x256xf32>
    %388 = arith.select %386, %383, %387 : vector<4x256xi1>, vector<4x256xf32>
    %389 = vector.broadcast %384 : vector<4x1xf32> to vector<4x256xf32>
    %390 = arith.mulf %388, %389 : vector<4x256xf32>
    %391 = arith.addf %371, %390 : vector<4x256xf32>
    %392 = arith.andi %341, %104 : vector<1x256xi1>
    %c0_139 = arith.constant 0 : index
    %c130 = arith.constant 130 : index
    %393 = vector.load %arg9[%c0_139, %c130] : memref<4x512xf32, #tpu.memory_space<vmem>>, vector<4x256xf32>
    %c0_140 = arith.constant 0 : index
    %c26 = arith.constant 26 : index
    %394 = vector.load %arg5[%c0_140, %c26] : memref<4x49xf32, #tpu.memory_space<vmem>>, vector<4x1xf32>
    %cst_141 = arith.constant 0.000000e+00 : f32
    %395 = vector.shape_cast %392 : vector<1x256xi1> to vector<1x256xi1>
    %396 = vector.broadcast %395 : vector<1x256xi1> to vector<4x256xi1>
    %397 = vector.broadcast %cst_141 : f32 to vector<4x256xf32>
    %398 = arith.select %396, %393, %397 : vector<4x256xi1>, vector<4x256xf32>
    %399 = vector.broadcast %394 : vector<4x1xf32> to vector<4x256xf32>
    %400 = arith.mulf %398, %399 : vector<4x256xf32>
    %401 = arith.addf %381, %400 : vector<4x256xf32>
    %402 = arith.andi %341, %109 : vector<1x256xi1>
    %c0_142 = arith.constant 0 : index
    %c131 = arith.constant 131 : index
    %403 = vector.load %arg9[%c0_142, %c131] : memref<4x512xf32, #tpu.memory_space<vmem>>, vector<4x256xf32>
    %c0_143 = arith.constant 0 : index
    %c27 = arith.constant 27 : index
    %404 = vector.load %arg5[%c0_143, %c27] : memref<4x49xf32, #tpu.memory_space<vmem>>, vector<4x1xf32>
    %cst_144 = arith.constant 0.000000e+00 : f32
    %405 = vector.shape_cast %402 : vector<1x256xi1> to vector<1x256xi1>
    %406 = vector.broadcast %405 : vector<1x256xi1> to vector<4x256xi1>
    %407 = vector.broadcast %cst_144 : f32 to vector<4x256xf32>
    %408 = arith.select %406, %403, %407 : vector<4x256xi1>, vector<4x256xf32>
    %409 = vector.broadcast %404 : vector<4x1xf32> to vector<4x256xf32>
    %410 = arith.mulf %408, %409 : vector<4x256xf32>
    %411 = arith.addf %391, %410 : vector<4x256xf32>
    %c-1_i32_145 = arith.constant -1 : i32
    %412 = vector.broadcast %c-1_i32_145 : i32 to vector<1x256xi32>
    %413 = arith.cmpi sge, %74, %412 : vector<1x256xi32>
    %c14_i32_146 = arith.constant 14 : i32
    %414 = vector.broadcast %c14_i32_146 : i32 to vector<1x256xi32>
    %415 = arith.cmpi sle, %74, %414 : vector<1x256xi32>
    %416 = arith.andi %413, %415 : vector<1x256xi1>
    %417 = arith.andi %416, %79 : vector<1x256xi1>
    %c0_147 = arith.constant 0 : index
    %c141 = arith.constant 141 : index
    %418 = vector.load %arg9[%c0_147, %c141] : memref<4x512xf32, #tpu.memory_space<vmem>>, vector<4x256xf32>
    %c0_148 = arith.constant 0 : index
    %c28 = arith.constant 28 : index
    %419 = vector.load %arg5[%c0_148, %c28] : memref<4x49xf32, #tpu.memory_space<vmem>>, vector<4x1xf32>
    %cst_149 = arith.constant 0.000000e+00 : f32
    %420 = vector.shape_cast %417 : vector<1x256xi1> to vector<1x256xi1>
    %421 = vector.broadcast %420 : vector<1x256xi1> to vector<4x256xi1>
    %422 = vector.broadcast %cst_149 : f32 to vector<4x256xf32>
    %423 = arith.select %421, %418, %422 : vector<4x256xi1>, vector<4x256xf32>
    %424 = vector.broadcast %419 : vector<4x1xf32> to vector<4x256xf32>
    %425 = arith.mulf %423, %424 : vector<4x256xf32>
    %426 = arith.addf %401, %425 : vector<4x256xf32>
    %427 = arith.andi %416, %84 : vector<1x256xi1>
    %c0_150 = arith.constant 0 : index
    %c142 = arith.constant 142 : index
    %428 = vector.load %arg9[%c0_150, %c142] : memref<4x512xf32, #tpu.memory_space<vmem>>, vector<4x256xf32>
    %c0_151 = arith.constant 0 : index
    %c29 = arith.constant 29 : index
    %429 = vector.load %arg5[%c0_151, %c29] : memref<4x49xf32, #tpu.memory_space<vmem>>, vector<4x1xf32>
    %cst_152 = arith.constant 0.000000e+00 : f32
    %430 = vector.shape_cast %427 : vector<1x256xi1> to vector<1x256xi1>
    %431 = vector.broadcast %430 : vector<1x256xi1> to vector<4x256xi1>
    %432 = vector.broadcast %cst_152 : f32 to vector<4x256xf32>
    %433 = arith.select %431, %428, %432 : vector<4x256xi1>, vector<4x256xf32>
    %434 = vector.broadcast %429 : vector<4x1xf32> to vector<4x256xf32>
    %435 = arith.mulf %433, %434 : vector<4x256xf32>
    %436 = arith.addf %411, %435 : vector<4x256xf32>
    %437 = arith.andi %416, %89 : vector<1x256xi1>
    %c0_153 = arith.constant 0 : index
    %c143 = arith.constant 143 : index
    %438 = vector.load %arg9[%c0_153, %c143] : memref<4x512xf32, #tpu.memory_space<vmem>>, vector<4x256xf32>
    %c0_154 = arith.constant 0 : index
    %c30 = arith.constant 30 : index
    %439 = vector.load %arg5[%c0_154, %c30] : memref<4x49xf32, #tpu.memory_space<vmem>>, vector<4x1xf32>
    %cst_155 = arith.constant 0.000000e+00 : f32
    %440 = vector.shape_cast %437 : vector<1x256xi1> to vector<1x256xi1>
    %441 = vector.broadcast %440 : vector<1x256xi1> to vector<4x256xi1>
    %442 = vector.broadcast %cst_155 : f32 to vector<4x256xf32>
    %443 = arith.select %441, %438, %442 : vector<4x256xi1>, vector<4x256xf32>
    %444 = vector.broadcast %439 : vector<4x1xf32> to vector<4x256xf32>
    %445 = arith.mulf %443, %444 : vector<4x256xf32>
    %446 = arith.addf %426, %445 : vector<4x256xf32>
    %447 = arith.andi %416, %94 : vector<1x256xi1>
    %c0_156 = arith.constant 0 : index
    %c144 = arith.constant 144 : index
    %448 = vector.load %arg9[%c0_156, %c144] : memref<4x512xf32, #tpu.memory_space<vmem>>, vector<4x256xf32>
    %c0_157 = arith.constant 0 : index
    %c31 = arith.constant 31 : index
    %449 = vector.load %arg5[%c0_157, %c31] : memref<4x49xf32, #tpu.memory_space<vmem>>, vector<4x1xf32>
    %cst_158 = arith.constant 0.000000e+00 : f32
    %450 = vector.shape_cast %447 : vector<1x256xi1> to vector<1x256xi1>
    %451 = vector.broadcast %450 : vector<1x256xi1> to vector<4x256xi1>
    %452 = vector.broadcast %cst_158 : f32 to vector<4x256xf32>
    %453 = arith.select %451, %448, %452 : vector<4x256xi1>, vector<4x256xf32>
    %454 = vector.broadcast %449 : vector<4x1xf32> to vector<4x256xf32>
    %455 = arith.mulf %453, %454 : vector<4x256xf32>
    %456 = arith.addf %436, %455 : vector<4x256xf32>
    %457 = arith.andi %416, %99 : vector<1x256xi1>
    %c0_159 = arith.constant 0 : index
    %c145 = arith.constant 145 : index
    %458 = vector.load %arg9[%c0_159, %c145] : memref<4x512xf32, #tpu.memory_space<vmem>>, vector<4x256xf32>
    %c0_160 = arith.constant 0 : index
    %c32 = arith.constant 32 : index
    %459 = vector.load %arg5[%c0_160, %c32] : memref<4x49xf32, #tpu.memory_space<vmem>>, vector<4x1xf32>
    %cst_161 = arith.constant 0.000000e+00 : f32
    %460 = vector.shape_cast %457 : vector<1x256xi1> to vector<1x256xi1>
    %461 = vector.broadcast %460 : vector<1x256xi1> to vector<4x256xi1>
    %462 = vector.broadcast %cst_161 : f32 to vector<4x256xf32>
    %463 = arith.select %461, %458, %462 : vector<4x256xi1>, vector<4x256xf32>
    %464 = vector.broadcast %459 : vector<4x1xf32> to vector<4x256xf32>
    %465 = arith.mulf %463, %464 : vector<4x256xf32>
    %466 = arith.addf %446, %465 : vector<4x256xf32>
    %467 = arith.andi %416, %104 : vector<1x256xi1>
    %c0_162 = arith.constant 0 : index
    %c146 = arith.constant 146 : index
    %468 = vector.load %arg9[%c0_162, %c146] : memref<4x512xf32, #tpu.memory_space<vmem>>, vector<4x256xf32>
    %c0_163 = arith.constant 0 : index
    %c33 = arith.constant 33 : index
    %469 = vector.load %arg5[%c0_163, %c33] : memref<4x49xf32, #tpu.memory_space<vmem>>, vector<4x1xf32>
    %cst_164 = arith.constant 0.000000e+00 : f32
    %470 = vector.shape_cast %467 : vector<1x256xi1> to vector<1x256xi1>
    %471 = vector.broadcast %470 : vector<1x256xi1> to vector<4x256xi1>
    %472 = vector.broadcast %cst_164 : f32 to vector<4x256xf32>
    %473 = arith.select %471, %468, %472 : vector<4x256xi1>, vector<4x256xf32>
    %474 = vector.broadcast %469 : vector<4x1xf32> to vector<4x256xf32>
    %475 = arith.mulf %473, %474 : vector<4x256xf32>
    %476 = arith.addf %456, %475 : vector<4x256xf32>
    %477 = arith.andi %416, %109 : vector<1x256xi1>
    %c0_165 = arith.constant 0 : index
    %c147 = arith.constant 147 : index
    %478 = vector.load %arg9[%c0_165, %c147] : memref<4x512xf32, #tpu.memory_space<vmem>>, vector<4x256xf32>
    %c0_166 = arith.constant 0 : index
    %c34 = arith.constant 34 : index
    %479 = vector.load %arg5[%c0_166, %c34] : memref<4x49xf32, #tpu.memory_space<vmem>>, vector<4x1xf32>
    %cst_167 = arith.constant 0.000000e+00 : f32
    %480 = vector.shape_cast %477 : vector<1x256xi1> to vector<1x256xi1>
    %481 = vector.broadcast %480 : vector<1x256xi1> to vector<4x256xi1>
    %482 = vector.broadcast %cst_167 : f32 to vector<4x256xf32>
    %483 = arith.select %481, %478, %482 : vector<4x256xi1>, vector<4x256xf32>
    %484 = vector.broadcast %479 : vector<4x1xf32> to vector<4x256xf32>
    %485 = arith.mulf %483, %484 : vector<4x256xf32>
    %486 = arith.addf %466, %485 : vector<4x256xf32>
    %c-2_i32_168 = arith.constant -2 : i32
    %487 = vector.broadcast %c-2_i32_168 : i32 to vector<1x256xi32>
    %488 = arith.cmpi sge, %74, %487 : vector<1x256xi32>
    %c13_i32_169 = arith.constant 13 : i32
    %489 = vector.broadcast %c13_i32_169 : i32 to vector<1x256xi32>
    %490 = arith.cmpi sle, %74, %489 : vector<1x256xi32>
    %491 = arith.andi %488, %490 : vector<1x256xi1>
    %492 = arith.andi %491, %79 : vector<1x256xi1>
    %c0_170 = arith.constant 0 : index
    %c157 = arith.constant 157 : index
    %493 = vector.load %arg9[%c0_170, %c157] : memref<4x512xf32, #tpu.memory_space<vmem>>, vector<4x256xf32>
    %c0_171 = arith.constant 0 : index
    %c35 = arith.constant 35 : index
    %494 = vector.load %arg5[%c0_171, %c35] : memref<4x49xf32, #tpu.memory_space<vmem>>, vector<4x1xf32>
    %cst_172 = arith.constant 0.000000e+00 : f32
    %495 = vector.shape_cast %492 : vector<1x256xi1> to vector<1x256xi1>
    %496 = vector.broadcast %495 : vector<1x256xi1> to vector<4x256xi1>
    %497 = vector.broadcast %cst_172 : f32 to vector<4x256xf32>
    %498 = arith.select %496, %493, %497 : vector<4x256xi1>, vector<4x256xf32>
    %499 = vector.broadcast %494 : vector<4x1xf32> to vector<4x256xf32>
    %500 = arith.mulf %498, %499 : vector<4x256xf32>
    %501 = arith.addf %476, %500 : vector<4x256xf32>
    %502 = arith.andi %491, %84 : vector<1x256xi1>
    %c0_173 = arith.constant 0 : index
    %c158 = arith.constant 158 : index
    %503 = vector.load %arg9[%c0_173, %c158] : memref<4x512xf32, #tpu.memory_space<vmem>>, vector<4x256xf32>
    %c0_174 = arith.constant 0 : index
    %c36 = arith.constant 36 : index
    %504 = vector.load %arg5[%c0_174, %c36] : memref<4x49xf32, #tpu.memory_space<vmem>>, vector<4x1xf32>
    %cst_175 = arith.constant 0.000000e+00 : f32
    %505 = vector.shape_cast %502 : vector<1x256xi1> to vector<1x256xi1>
    %506 = vector.broadcast %505 : vector<1x256xi1> to vector<4x256xi1>
    %507 = vector.broadcast %cst_175 : f32 to vector<4x256xf32>
    %508 = arith.select %506, %503, %507 : vector<4x256xi1>, vector<4x256xf32>
    %509 = vector.broadcast %504 : vector<4x1xf32> to vector<4x256xf32>
    %510 = arith.mulf %508, %509 : vector<4x256xf32>
    %511 = arith.addf %486, %510 : vector<4x256xf32>
    %512 = arith.andi %491, %89 : vector<1x256xi1>
    %c0_176 = arith.constant 0 : index
    %c159 = arith.constant 159 : index
    %513 = vector.load %arg9[%c0_176, %c159] : memref<4x512xf32, #tpu.memory_space<vmem>>, vector<4x256xf32>
    %c0_177 = arith.constant 0 : index
    %c37 = arith.constant 37 : index
    %514 = vector.load %arg5[%c0_177, %c37] : memref<4x49xf32, #tpu.memory_space<vmem>>, vector<4x1xf32>
    %cst_178 = arith.constant 0.000000e+00 : f32
    %515 = vector.shape_cast %512 : vector<1x256xi1> to vector<1x256xi1>
    %516 = vector.broadcast %515 : vector<1x256xi1> to vector<4x256xi1>
    %517 = vector.broadcast %cst_178 : f32 to vector<4x256xf32>
    %518 = arith.select %516, %513, %517 : vector<4x256xi1>, vector<4x256xf32>
    %519 = vector.broadcast %514 : vector<4x1xf32> to vector<4x256xf32>
    %520 = arith.mulf %518, %519 : vector<4x256xf32>
    %521 = arith.addf %501, %520 : vector<4x256xf32>
    %522 = arith.andi %491, %94 : vector<1x256xi1>
    %c0_179 = arith.constant 0 : index
    %c160 = arith.constant 160 : index
    %523 = vector.load %arg9[%c0_179, %c160] : memref<4x512xf32, #tpu.memory_space<vmem>>, vector<4x256xf32>
    %c0_180 = arith.constant 0 : index
    %c38 = arith.constant 38 : index
    %524 = vector.load %arg5[%c0_180, %c38] : memref<4x49xf32, #tpu.memory_space<vmem>>, vector<4x1xf32>
    %cst_181 = arith.constant 0.000000e+00 : f32
    %525 = vector.shape_cast %522 : vector<1x256xi1> to vector<1x256xi1>
    %526 = vector.broadcast %525 : vector<1x256xi1> to vector<4x256xi1>
    %527 = vector.broadcast %cst_181 : f32 to vector<4x256xf32>
    %528 = arith.select %526, %523, %527 : vector<4x256xi1>, vector<4x256xf32>
    %529 = vector.broadcast %524 : vector<4x1xf32> to vector<4x256xf32>
    %530 = arith.mulf %528, %529 : vector<4x256xf32>
    %531 = arith.addf %511, %530 : vector<4x256xf32>
    %532 = arith.andi %491, %99 : vector<1x256xi1>
    %c0_182 = arith.constant 0 : index
    %c161 = arith.constant 161 : index
    %533 = vector.load %arg9[%c0_182, %c161] : memref<4x512xf32, #tpu.memory_space<vmem>>, vector<4x256xf32>
    %c0_183 = arith.constant 0 : index
    %c39 = arith.constant 39 : index
    %534 = vector.load %arg5[%c0_183, %c39] : memref<4x49xf32, #tpu.memory_space<vmem>>, vector<4x1xf32>
    %cst_184 = arith.constant 0.000000e+00 : f32
    %535 = vector.shape_cast %532 : vector<1x256xi1> to vector<1x256xi1>
    %536 = vector.broadcast %535 : vector<1x256xi1> to vector<4x256xi1>
    %537 = vector.broadcast %cst_184 : f32 to vector<4x256xf32>
    %538 = arith.select %536, %533, %537 : vector<4x256xi1>, vector<4x256xf32>
    %539 = vector.broadcast %534 : vector<4x1xf32> to vector<4x256xf32>
    %540 = arith.mulf %538, %539 : vector<4x256xf32>
    %541 = arith.addf %521, %540 : vector<4x256xf32>
    %542 = arith.andi %491, %104 : vector<1x256xi1>
    %c0_185 = arith.constant 0 : index
    %c162 = arith.constant 162 : index
    %543 = vector.load %arg9[%c0_185, %c162] : memref<4x512xf32, #tpu.memory_space<vmem>>, vector<4x256xf32>
    %c0_186 = arith.constant 0 : index
    %c40 = arith.constant 40 : index
    %544 = vector.load %arg5[%c0_186, %c40] : memref<4x49xf32, #tpu.memory_space<vmem>>, vector<4x1xf32>
    %cst_187 = arith.constant 0.000000e+00 : f32
    %545 = vector.shape_cast %542 : vector<1x256xi1> to vector<1x256xi1>
    %546 = vector.broadcast %545 : vector<1x256xi1> to vector<4x256xi1>
    %547 = vector.broadcast %cst_187 : f32 to vector<4x256xf32>
    %548 = arith.select %546, %543, %547 : vector<4x256xi1>, vector<4x256xf32>
    %549 = vector.broadcast %544 : vector<4x1xf32> to vector<4x256xf32>
    %550 = arith.mulf %548, %549 : vector<4x256xf32>
    %551 = arith.addf %531, %550 : vector<4x256xf32>
    %552 = arith.andi %491, %109 : vector<1x256xi1>
    %c0_188 = arith.constant 0 : index
    %c163 = arith.constant 163 : index
    %553 = vector.load %arg9[%c0_188, %c163] : memref<4x512xf32, #tpu.memory_space<vmem>>, vector<4x256xf32>
    %c0_189 = arith.constant 0 : index
    %c41 = arith.constant 41 : index
    %554 = vector.load %arg5[%c0_189, %c41] : memref<4x49xf32, #tpu.memory_space<vmem>>, vector<4x1xf32>
    %cst_190 = arith.constant 0.000000e+00 : f32
    %555 = vector.shape_cast %552 : vector<1x256xi1> to vector<1x256xi1>
    %556 = vector.broadcast %555 : vector<1x256xi1> to vector<4x256xi1>
    %557 = vector.broadcast %cst_190 : f32 to vector<4x256xf32>
    %558 = arith.select %556, %553, %557 : vector<4x256xi1>, vector<4x256xf32>
    %559 = vector.broadcast %554 : vector<4x1xf32> to vector<4x256xf32>
    %560 = arith.mulf %558, %559 : vector<4x256xf32>
    %561 = arith.addf %541, %560 : vector<4x256xf32>
    %c-3_i32_191 = arith.constant -3 : i32
    %562 = vector.broadcast %c-3_i32_191 : i32 to vector<1x256xi32>
    %563 = arith.cmpi sge, %74, %562 : vector<1x256xi32>
    %c12_i32_192 = arith.constant 12 : i32
    %564 = vector.broadcast %c12_i32_192 : i32 to vector<1x256xi32>
    %565 = arith.cmpi sle, %74, %564 : vector<1x256xi32>
    %566 = arith.andi %563, %565 : vector<1x256xi1>
    %567 = arith.andi %566, %79 : vector<1x256xi1>
    %c0_193 = arith.constant 0 : index
    %c173 = arith.constant 173 : index
    %568 = vector.load %arg9[%c0_193, %c173] : memref<4x512xf32, #tpu.memory_space<vmem>>, vector<4x256xf32>
    %c0_194 = arith.constant 0 : index
    %c42 = arith.constant 42 : index
    %569 = vector.load %arg5[%c0_194, %c42] : memref<4x49xf32, #tpu.memory_space<vmem>>, vector<4x1xf32>
    %cst_195 = arith.constant 0.000000e+00 : f32
    %570 = vector.shape_cast %567 : vector<1x256xi1> to vector<1x256xi1>
    %571 = vector.broadcast %570 : vector<1x256xi1> to vector<4x256xi1>
    %572 = vector.broadcast %cst_195 : f32 to vector<4x256xf32>
    %573 = arith.select %571, %568, %572 : vector<4x256xi1>, vector<4x256xf32>
    %574 = vector.broadcast %569 : vector<4x1xf32> to vector<4x256xf32>
    %575 = arith.mulf %573, %574 : vector<4x256xf32>
    %576 = arith.addf %551, %575 : vector<4x256xf32>
    %577 = arith.andi %566, %84 : vector<1x256xi1>
    %c0_196 = arith.constant 0 : index
    %c174 = arith.constant 174 : index
    %578 = vector.load %arg9[%c0_196, %c174] : memref<4x512xf32, #tpu.memory_space<vmem>>, vector<4x256xf32>
    %c0_197 = arith.constant 0 : index
    %c43 = arith.constant 43 : index
    %579 = vector.load %arg5[%c0_197, %c43] : memref<4x49xf32, #tpu.memory_space<vmem>>, vector<4x1xf32>
    %cst_198 = arith.constant 0.000000e+00 : f32
    %580 = vector.shape_cast %577 : vector<1x256xi1> to vector<1x256xi1>
    %581 = vector.broadcast %580 : vector<1x256xi1> to vector<4x256xi1>
    %582 = vector.broadcast %cst_198 : f32 to vector<4x256xf32>
    %583 = arith.select %581, %578, %582 : vector<4x256xi1>, vector<4x256xf32>
    %584 = vector.broadcast %579 : vector<4x1xf32> to vector<4x256xf32>
    %585 = arith.mulf %583, %584 : vector<4x256xf32>
    %586 = arith.addf %561, %585 : vector<4x256xf32>
    %587 = arith.andi %566, %89 : vector<1x256xi1>
    %c0_199 = arith.constant 0 : index
    %c175 = arith.constant 175 : index
    %588 = vector.load %arg9[%c0_199, %c175] : memref<4x512xf32, #tpu.memory_space<vmem>>, vector<4x256xf32>
    %c0_200 = arith.constant 0 : index
    %c44 = arith.constant 44 : index
    %589 = vector.load %arg5[%c0_200, %c44] : memref<4x49xf32, #tpu.memory_space<vmem>>, vector<4x1xf32>
    %cst_201 = arith.constant 0.000000e+00 : f32
    %590 = vector.shape_cast %587 : vector<1x256xi1> to vector<1x256xi1>
    %591 = vector.broadcast %590 : vector<1x256xi1> to vector<4x256xi1>
    %592 = vector.broadcast %cst_201 : f32 to vector<4x256xf32>
    %593 = arith.select %591, %588, %592 : vector<4x256xi1>, vector<4x256xf32>
    %594 = vector.broadcast %589 : vector<4x1xf32> to vector<4x256xf32>
    %595 = arith.mulf %593, %594 : vector<4x256xf32>
    %596 = arith.addf %576, %595 : vector<4x256xf32>
    %597 = arith.andi %566, %94 : vector<1x256xi1>
    %c0_202 = arith.constant 0 : index
    %c176 = arith.constant 176 : index
    %598 = vector.load %arg9[%c0_202, %c176] : memref<4x512xf32, #tpu.memory_space<vmem>>, vector<4x256xf32>
    %c0_203 = arith.constant 0 : index
    %c45 = arith.constant 45 : index
    %599 = vector.load %arg5[%c0_203, %c45] : memref<4x49xf32, #tpu.memory_space<vmem>>, vector<4x1xf32>
    %cst_204 = arith.constant 0.000000e+00 : f32
    %600 = vector.shape_cast %597 : vector<1x256xi1> to vector<1x256xi1>
    %601 = vector.broadcast %600 : vector<1x256xi1> to vector<4x256xi1>
    %602 = vector.broadcast %cst_204 : f32 to vector<4x256xf32>
    %603 = arith.select %601, %598, %602 : vector<4x256xi1>, vector<4x256xf32>
    %604 = vector.broadcast %599 : vector<4x1xf32> to vector<4x256xf32>
    %605 = arith.mulf %603, %604 : vector<4x256xf32>
    %606 = arith.addf %586, %605 : vector<4x256xf32>
    %607 = arith.andi %566, %99 : vector<1x256xi1>
    %c0_205 = arith.constant 0 : index
    %c177 = arith.constant 177 : index
    %608 = vector.load %arg9[%c0_205, %c177] : memref<4x512xf32, #tpu.memory_space<vmem>>, vector<4x256xf32>
    %c0_206 = arith.constant 0 : index
    %c46 = arith.constant 46 : index
    %609 = vector.load %arg5[%c0_206, %c46] : memref<4x49xf32, #tpu.memory_space<vmem>>, vector<4x1xf32>
    %cst_207 = arith.constant 0.000000e+00 : f32
    %610 = vector.shape_cast %607 : vector<1x256xi1> to vector<1x256xi1>
    %611 = vector.broadcast %610 : vector<1x256xi1> to vector<4x256xi1>
    %612 = vector.broadcast %cst_207 : f32 to vector<4x256xf32>
    %613 = arith.select %611, %608, %612 : vector<4x256xi1>, vector<4x256xf32>
    %614 = vector.broadcast %609 : vector<4x1xf32> to vector<4x256xf32>
    %615 = arith.mulf %613, %614 : vector<4x256xf32>
    %616 = arith.addf %596, %615 : vector<4x256xf32>
    %617 = arith.andi %566, %104 : vector<1x256xi1>
    %c0_208 = arith.constant 0 : index
    %c178 = arith.constant 178 : index
    %618 = vector.load %arg9[%c0_208, %c178] : memref<4x512xf32, #tpu.memory_space<vmem>>, vector<4x256xf32>
    %c0_209 = arith.constant 0 : index
    %c47 = arith.constant 47 : index
    %619 = vector.load %arg5[%c0_209, %c47] : memref<4x49xf32, #tpu.memory_space<vmem>>, vector<4x1xf32>
    %cst_210 = arith.constant 0.000000e+00 : f32
    %620 = vector.shape_cast %617 : vector<1x256xi1> to vector<1x256xi1>
    %621 = vector.broadcast %620 : vector<1x256xi1> to vector<4x256xi1>
    %622 = vector.broadcast %cst_210 : f32 to vector<4x256xf32>
    %623 = arith.select %621, %618, %622 : vector<4x256xi1>, vector<4x256xf32>
    %624 = vector.broadcast %619 : vector<4x1xf32> to vector<4x256xf32>
    %625 = arith.mulf %623, %624 : vector<4x256xf32>
    %626 = arith.addf %606, %625 : vector<4x256xf32>
    %627 = arith.andi %566, %109 : vector<1x256xi1>
    %c0_211 = arith.constant 0 : index
    %c179 = arith.constant 179 : index
    %628 = vector.load %arg9[%c0_211, %c179] : memref<4x512xf32, #tpu.memory_space<vmem>>, vector<4x256xf32>
    %c0_212 = arith.constant 0 : index
    %c48 = arith.constant 48 : index
    %629 = vector.load %arg5[%c0_212, %c48] : memref<4x49xf32, #tpu.memory_space<vmem>>, vector<4x1xf32>
    %cst_213 = arith.constant 0.000000e+00 : f32
    %630 = vector.shape_cast %627 : vector<1x256xi1> to vector<1x256xi1>
    %631 = vector.broadcast %630 : vector<1x256xi1> to vector<4x256xi1>
    %632 = vector.broadcast %cst_213 : f32 to vector<4x256xf32>
    %633 = arith.select %631, %628, %632 : vector<4x256xi1>, vector<4x256xf32>
    %634 = vector.broadcast %629 : vector<4x1xf32> to vector<4x256xf32>
    %635 = arith.mulf %633, %634 : vector<4x256xf32>
    %636 = arith.addf %616, %635 : vector<4x256xf32>
    %637 = arith.addf %636, %626 : vector<4x256xf32>
    %cst_214 = arith.constant dense<0.000000e+00> : vector<256xf32>
    %638 = vector.multi_reduction <add>, %637, %cst_214 [0] : vector<4x256xf32> to vector<256xf32>
    %639 = vector.shape_cast %638 : vector<256xf32> to vector<1x256xf32>
    %c0_215 = arith.constant 0 : index
    %640 = memref.load %arg6[%c0_215] : memref<1xf32, #tpu.memory_space<smem>>
    %641 = vector.broadcast %640 : f32 to vector<1x256xf32>
    %642 = arith.addf %639, %641 : vector<1x256xf32>
    %643 = arith.negf %642 : vector<1x256xf32>
    %644 = math.exp %643 : vector<1x256xf32>
    %cst_216 = arith.constant 1.000000e+00 : f32
    %645 = vector.broadcast %cst_216 : f32 to vector<1x256xf32>
    %646 = arith.addf %645, %644 : vector<1x256xf32>
    %647 = arith.divf %645, %646 : vector<1x256xf32>
    %648 = vector.broadcast %51 : vector<16x1xf32> to vector<16x256xf32>
    %649 = vector.broadcast %647 : vector<1x256xf32> to vector<16x256xf32>
    %650 = arith.addf %648, %649 : vector<16x256xf32>
    %cst_217 = arith.constant 1.000000e+00 : f32
    %651 = vector.broadcast %cst_217 : f32 to vector<16x256xf32>
    %652 = arith.addf %650, %651 : vector<16x256xf32>
    %653 = arith.subf %1, %3 : vector<16x256xf32>
    %654 = arith.mulf %652, %653 : vector<16x256xf32>
    %cst_218 = arith.constant 4.000000e+00 : f32
    %655 = vector.broadcast %cst_218 : f32 to vector<16x256xf32>
    %656 = arith.mulf %655, %3 : vector<16x256xf32>
    %657 = arith.addf %654, %656 : vector<16x256xf32>
    %c0_219 = arith.constant 0 : index
    %c0_220 = arith.constant 0 : index
    %c0_221 = arith.constant 0 : index
    %658 = vector.load %arg7[%c0_219, %c0_220, %c0_221] : memref<1x16x256xf32, #tpu.memory_space<vmem>>, vector<1x16x256xf32>
    %659 = vector.shape_cast %658 : vector<1x16x256xf32> to vector<16x256xf32>
    %660 = vector.shape_cast %657 : vector<16x256xf32> to vector<1x16x256xf32>
    tpu.vector_store %arg7[%c0_219, %c0_220, %c0_221], %660 {strides = array<i32>} : memref<1x16x256xf32, #tpu.memory_space<vmem>>, vector<1x16x256xf32>,
    return
  }
  func.func @transform_0(%arg0: i32) -> (i32, i32, i32) {
    %c0_i32 = arith.constant 0 : i32
    %c0_i32_0 = arith.constant 0 : i32
    %c0_i32_1 = arith.constant 0 : i32
    return %arg0, %c0_i32, %c0_i32_0 : i32, i32, i32
  }
  func.func @transform_1(%arg0: i32) -> (i32, i32, i32) {
    %c0_i32 = arith.constant 0 : i32
    %c0_i32_0 = arith.constant 0 : i32
    %c0_i32_1 = arith.constant 0 : i32
    return %arg0, %c0_i32, %c0_i32_0 : i32, i32, i32
  }
  func.func @transform_2(%arg0: i32) -> (i32, i32) {
    %c0_i32 = arith.constant 0 : i32
    %c0_i32_0 = arith.constant 0 : i32
    %c0_i32_1 = arith.constant 0 : i32
    return %c0_i32, %c0_i32_0 : i32, i32
  }
  func.func @transform_3(%arg0: i32) -> i32 {
    %c0_i32 = arith.constant 0 : i32
    %c0_i32_0 = arith.constant 0 : i32
    return %c0_i32 : i32
  }
  func.func @transform_4(%arg0: i32) -> (i32, i32) {
    %c0_i32 = arith.constant 0 : i32
    %c0_i32_0 = arith.constant 0 : i32
    %c0_i32_1 = arith.constant 0 : i32
    return %c0_i32, %c0_i32_0 : i32, i32
  }
  func.func @transform_5(%arg0: i32) -> i32 {
    %c0_i32 = arith.constant 0 : i32
    %c0_i32_0 = arith.constant 0 : i32
    return %c0_i32 : i32
  }
  func.func @transform_6(%arg0: i32) -> (i32, i32, i32) {
    %c0_i32 = arith.constant 0 : i32
    %c0_i32_0 = arith.constant 0 : i32
    %c0_i32_1 = arith.constant 0 : i32
    return %arg0, %c0_i32, %c0_i32_0 : i32, i32, i32
  }
}

</mosaic_0001>

<llo_original>
// kernel: tpu_custom_call.1
$region0: #{tpu_custom_call.1}
  #allocation0 [shape = 'u32[]', space=smem, size = 0x4, offset = 0x4, fixed_abs, tag = 'smem constant byte address 0x4 - core index']
  #allocation1 [shape = 'u32[144,128]{1,0:T(1,128)}', space=vmem, size = 0x12000, scoped, tag = 'internal scratch']
  #allocation2 [shape = 'f32[18,4]{1,0:T(8,128)}', space=vmem, size = 0x3000, scoped, tag = 'scratch operand']
  #allocation3 [shape = 'f32[4,512]{1,0:T(4,128)}', space=vmem, size = 0x2000, scoped, tag = 'scratch operand']
  #allocation4 [shape = 'f32[1]{0:T(128)S(6)}', space=smem, size = 0x200, scoped, tag = 'scoped memory for tpu_custom_call.1']
  #allocation5 [shape = 'f32[1]{0:T(128)S(6)}', space=smem, size = 0x200, scoped, tag = 'scoped memory for tpu_custom_call.1']
  %s0 = inlined_call_operand.hbm [shape: f32[2,16,256], index: 0, kind: input, shape index: {}]
  %s1 = inlined_call_operand.hbm [shape: f32[2,16,256], index: 1, kind: input, shape index: {}]
  %s2 = inlined_call_operand.vmem [shape: f32[3,4], index: 2, kind: input, shape index: {}]
  %s3 = inlined_call_operand.<no memory space> [shape: f32[1], index: 3, kind: input, shape index: {}]
  %s4 = inlined_call_operand.vmem [shape: f32[4,49], index: 4, kind: input, shape index: {}]
  %s5 = inlined_call_operand.<no memory space> [shape: f32[1], index: 5, kind: input, shape index: {}]
  %s6 = inlined_call_operand.hbm [shape: f32[2,16,256], index: 6, kind: output, shape index: {}]
  %s7 = sld [smem:[#allocation0]]
  $region65: #{tpu_custom_call.1} parent=0
    _
  %s9 = ssub.s32 1, %s7
  %s10 = scalar_select 0, %s9, %s7
  %11 = sst [smem:[#allocation4]] %s3
  %12 = sst [smem:[#allocation5]] %s5
  $region1: #{tpu_custom_call.1} parent=0
    #allocation6 [shape = 'u8[32768]{0}', space=vmem, size = 0x8000, scoped, tag = 'input window, operand 0']
    #allocation7 [shape = 's32[2]{0}', space=sflag, size = 0x8, scoped, tag = 'scoped memory for tpu_custom_call.1']
    #allocation8 [shape = 's32[2]{0}', space=sflag, size = 0x8, scoped, tag = 'scoped memory for tpu_custom_call.1']
    #allocation9 [shape = 'u8[32768]{0}', space=vmem, size = 0x8000, scoped, tag = 'input window, operand 1']
    #allocation10 [shape = 's32[2]{0}', space=sflag, size = 0x8, scoped, tag = 'scoped memory for tpu_custom_call.1']
    #allocation11 [shape = 'u8[32768]{0}', space=vmem, size = 0x8000, scoped, tag = 'output window, operand 0']
    %13 = vsyncpa [#allocation7], 0
    %s14 = scalar_lea.sflag [#allocation7], 1
    %15 = vsyncpa %s14, 0
    %16 = vsyncpa [#allocation10], 0
    %s17 = scalar_lea.sflag [#allocation10], 1
    %18 = vsyncpa %s17, 0
    %19 = vsyncpa [#allocation8], 0
    %s20 = scalar_lea.sflag [#allocation8], 1
    %21 = vsyncpa %s20, 0
    loop: start=0, step=1, limit=4
    $region2: #{tpu_custom_call.1} parent=1 // loop_pre_header
      _
    $region3: #{tpu_custom_call.1} parent=1 // loop_header
      %s23 = sphi 0, %s27
      %p24 = scmp.ge.s32.totalorder %s23, 4
      %s33 = sphi 0, %s35
      %s36 = sphi 0, %s33
      %s37 = sphi 0, %s36
      %s53 = sphi 0, %s37
      %s59 = sphi 0, %s61
      %s62 = sphi 0, %s59
      %s63 = sphi 0, %s62
      %s79 = sphi 0, %s63
      %s83 = sphi 0, %s83
      %s85 = sphi 0, %s83
      %s86 = sphi 0, %s85
      %s100 = sphi 0, %s86
      %s104 = sphi 0, %s104
      %s106 = sphi 0, %s104
      %s107 = sphi 0, %s106
      %s121 = sphi 0, %s107
      %s125 = sphi 0, %s125
      %s127 = sphi 0, %s125
      %s128 = sphi 0, %s127
      %s142 = sphi 0, %s128
      %s146 = sphi 0, %s146
      %s148 = sphi 0, %s146
      %s149 = sphi 0, %s148
      %s163 = sphi 0, %s149
      %s169 = sphi 0, %s171
      %s172 = sphi 0, %s169
      %s173 = sphi 0, %s172
      %s189 = sphi 0, %s173
    $region4: #{tpu_custom_call.1} parent=1 // loop_header_branch
      %26 = sbr.rel (%p24) target = $region8
    $region5: #{tpu_custom_call.1} parent=1 // loop_body
      %s28 = ssub.s32 %s23, 1
      %s29 = ssub.s32 %s23, 2
      %s30 = sadd.s32 %s23, 1
      %s31 = ssub.s32 %s23, %s30
      %p32 = scmp.eq.s32.totalorder %s31, 0
      %s34 = sadd.s32 %s33, 1
      %s35 = scalar_select %p32, %s33, %s34
      %p38 = pneg %p32
      %p39 = scmp.eq.s32.totalorder %s23, 1
      %p40 = por %p38, %p39
      %p41 = scmp.ne.s32.totalorder %s33, %s36
      %p42 = scmp.eq.s32.totalorder %s23, 0
      %p43 = por %p41, %p42
      %p44 = scmp.ne.s32.totalorder %s33, %s36
      %p45 = scmp.eq.s32.totalorder %s28, 1
      %p46 = por %p44, %p45
      %p47 = scmp.ne.s32.totalorder %s36, %s37
      %p48 = scmp.eq.s32.totalorder %s28, 0
      %p49 = por %p47, %p48
      %p50 = scmp.ne.s32.totalorder %s36, %s37
      %p51 = scmp.eq.s32.totalorder %s29, 1
      %p52 = por %p50, %p51
      %p54 = scmp.ne.s32.totalorder %s37, %s53
      %p55 = scmp.eq.s32.totalorder %s29, 0
      %p56 = por %p54, %p55
      %s57 = ssub.s32 %s23, %s30
      %p58 = scmp.eq.s32.totalorder %s57, 0
      %s60 = sadd.s32 %s59, 1
      %s61 = scalar_select %p58, %s59, %s60
      %p64 = pneg %p58
      %p65 = scmp.eq.s32.totalorder %s23, 1
      %p66 = por %p64, %p65
      %p67 = scmp.ne.s32.totalorder %s59, %s62
      %p68 = scmp.eq.s32.totalorder %s23, 0
      %p69 = por %p67, %p68
      %p70 = scmp.ne.s32.totalorder %s59, %s62
      %p71 = scmp.eq.s32.totalorder %s28, 1
      %p72 = por %p70, %p71
      %p73 = scmp.ne.s32.totalorder %s62, %s63
      %p74 = scmp.eq.s32.totalorder %s28, 0
      %p75 = por %p73, %p74
      %p76 = scmp.ne.s32.totalorder %s62, %s63
      %p77 = scmp.eq.s32.totalorder %s29, 1
      %p78 = por %p76, %p77
      %p80 = scmp.ne.s32.totalorder %s63, %s79
      %p81 = scmp.eq.s32.totalorder %s29, 0
      %p82 = por %p80, %p81
      %s84 = sadd.s32 %s83, 1
      %p87 = scmp.eq.s32.totalorder %s23, 1
      %p88 = scmp.ne.s32.totalorder %s83, %s85
      %p89 = scmp.eq.s32.totalorder %s23, 0
      %p90 = por %p88, %p89
      %p91 = scmp.ne.s32.totalorder %s83, %s85
      %p92 = scmp.eq.s32.totalorder %s28, 1
      %p93 = por %p91, %p92
      %p94 = scmp.ne.s32.totalorder %s85, %s86
      %p95 = scmp.eq.s32.totalorder %s28, 0
      %p96 = por %p94, %p95
      %p97 = scmp.ne.s32.totalorder %s85, %s86
      %p98 = scmp.eq.s32.totalorder %s29, 1
      %p99 = por %p97, %p98
      %p101 = scmp.ne.s32.totalorder %s86, %s100
      %p102 = scmp.eq.s32.totalorder %s29, 0
      %p103 = por %p101, %p102
      %s105 = sadd.s32 %s104, 1
      %p108 = scmp.eq.s32.totalorder %s23, 1
      %p109 = scmp.ne.s32.totalorder %s104, %s106
      %p110 = scmp.eq.s32.totalorder %s23, 0
      %p111 = por %p109, %p110
      %p112 = scmp.ne.s32.totalorder %s104, %s106
      %p113 = scmp.eq.s32.totalorder %s28, 1
      %p114 = por %p112, %p113
      %p115 = scmp.ne.s32.totalorder %s106, %s107
      %p116 = scmp.eq.s32.totalorder %s28, 0
      %p117 = por %p115, %p116
      %p118 = scmp.ne.s32.totalorder %s106, %s107
      %p119 = scmp.eq.s32.totalorder %s29, 1
      %p120 = por %p118, %p119
      %p122 = scmp.ne.s32.totalorder %s107, %s121
      %p123 = scmp.eq.s32.totalorder %s29, 0
      %p124 = por %p122, %p123
      %s126 = sadd.s32 %s125, 1
      %p129 = scmp.eq.s32.totalorder %s23, 1
      %p130 = scmp.ne.s32.totalorder %s125, %s127
      %p131 = scmp.eq.s32.totalorder %s23, 0
      %p132 = por %p130, %p131
      %p133 = scmp.ne.s32.totalorder %s125, %s127
      %p134 = scmp.eq.s32.totalorder %s28, 1
      %p135 = por %p133, %p134
      %p136 = scmp.ne.s32.totalorder %s127, %s128
      %p137 = scmp.eq.s32.totalorder %s28, 0
      %p138 = por %p136, %p137
      %p139 = scmp.ne.s32.totalorder %s127, %s128
      %p140 = scmp.eq.s32.totalorder %s29, 1
      %p141 = por %p139, %p140
      %p143 = scmp.ne.s32.totalorder %s128, %s142
      %p144 = scmp.eq.s32.totalorder %s29, 0
      %p145 = por %p143, %p144
      %s147 = sadd.s32 %s146, 1
      %p150 = scmp.eq.s32.totalorder %s23, 1
      %p151 = scmp.ne.s32.totalorder %s146, %s148
      %p152 = scmp.eq.s32.totalorder %s23, 0
      %p153 = por %p151, %p152
      %p154 = scmp.ne.s32.totalorder %s146, %s148
      %p155 = scmp.eq.s32.totalorder %s28, 1
      %p156 = por %p154, %p155
      %p157 = scmp.ne.s32.totalorder %s148, %s149
      %p158 = scmp.eq.s32.totalorder %s28, 0
      %p159 = por %p157, %p158
      %p160 = scmp.ne.s32.totalorder %s148, %s149
      %p161 = scmp.eq.s32.totalorder %s29, 1
      %p162 = por %p160, %p161
      %p164 = scmp.ne.s32.totalorder %s149, %s163
      %p165 = scmp.eq.s32.totalorder %s29, 0
      %p166 = por %p164, %p165
      %s167 = ssub.s32 %s23, %s30
      %p168 = scmp.eq.s32.totalorder %s167, 0
      %s170 = sadd.s32 %s169, 1
      %s171 = scalar_select %p168, %s169, %s170
      %p174 = pneg %p168
      %p175 = scmp.eq.s32.totalorder %s23, 1
      %p176 = por %p174, %p175
      %p177 = scmp.ne.s32.totalorder %s169, %s172
      %p178 = scmp.eq.s32.totalorder %s23, 0
      %p179 = por %p177, %p178
      %p180 = scmp.ne.s32.totalorder %s169, %s172
      %p181 = scmp.eq.s32.totalorder %s28, 1
      %p182 = por %p180, %p181
      %p183 = scmp.ne.s32.totalorder %s172, %s173
      %p184 = scmp.eq.s32.totalorder %s28, 0
      %p185 = por %p183, %p184
      %p186 = scmp.ne.s32.totalorder %s172, %s173
      %p187 = scmp.eq.s32.totalorder %s29, 1
      %p188 = por %p186, %p187
      %p190 = scmp.ne.s32.totalorder %s173, %s189
      %p191 = scmp.eq.s32.totalorder %s29, 0
      %p192 = por %p190, %p191
      %p193 = scmp.le.s32.totalorder 1, %s23
      %p194 = scmp.lt.s32.totalorder %s23, 3
      %p195 = pnand %p193, %p194
      %p196 = pneg %p195
      // Predicated region
      $region9: #{tpu_custom_call.1} parent=5 // pred_check
        _
      $region10: #{tpu_custom_call.1} parent=5 // pred_check_branch
        %198 = sbr.rel (%p195) target = $region12
      $region11: #{tpu_custom_call.1} parent=5 // pred_region
        %s199 = ssub.s32 %s23, 1
        // Predicated region
        $region13: #{tpu_custom_call.1} parent=11 // pred_check
          %p200 = pneg %p96
        $region14: #{tpu_custom_call.1} parent=11 // pred_check_branch
          %202 = sbr.rel (%p200) target = $region16
        $region15: #{tpu_custom_call.1} parent=11 // pred_region
          _
        $region16: #{tpu_custom_call.1} parent=11 // pred_fallthru
          _
        // Predicated region
        $region17: #{tpu_custom_call.1} parent=11 // pred_check
          %p203 = pneg %p117
        $region18: #{tpu_custom_call.1} parent=11 // pred_check_branch
          %205 = sbr.rel (%p203) target = $region20
        $region19: #{tpu_custom_call.1} parent=11 // pred_region
          _
        $region20: #{tpu_custom_call.1} parent=11 // pred_fallthru
          _
        // Predicated region
        $region21: #{tpu_custom_call.1} parent=11 // pred_check
          %p206 = pneg %p138
        $region22: #{tpu_custom_call.1} parent=11 // pred_check_branch
          %208 = sbr.rel (%p206) target = $region24
        $region23: #{tpu_custom_call.1} parent=11 // pred_region
          _
        $region24: #{tpu_custom_call.1} parent=11 // pred_fallthru
          _
        // Predicated region
        $region25: #{tpu_custom_call.1} parent=11 // pred_check
          %p209 = pneg %p159
        $region26: #{tpu_custom_call.1} parent=11 // pred_check_branch
          %211 = sbr.rel (%p209) target = $region28
        $region27: #{tpu_custom_call.1} parent=11 // pred_region
          _
        $region28: #{tpu_custom_call.1} parent=11 // pred_fallthru
          _
      $region12: #{tpu_custom_call.1} parent=5 // pred_fallthru
        _
      %p212 = scmp.lt.s32.totalorder %s23, 2
      // Predicated region
      $region29: #{tpu_custom_call.1} parent=5 // pred_check
        %p213 = pneg %p212
      $region30: #{tpu_custom_call.1} parent=5 // pred_check_branch
        %215 = sbr.rel (%p213) target = $region32
      $region31: #{tpu_custom_call.1} parent=5 // pred_region
        // Predicated region
        $region33: #{tpu_custom_call.1} parent=31 // pred_check
          %p216 = pneg %p43
        $region34: #{tpu_custom_call.1} parent=31 // pred_check_branch
          %218 = sbr.rel (%p216) target = $region36
        $region35: #{tpu_custom_call.1} parent=31 // pred_region
          %s219 = sand.u32 %s33, 1
          %s220 = scalar_lea.sflag [#allocation7], %s219
          %s221 = sand.u32 %s33, 1
          %s222 = smul.addr %s221, 32
          %s223 = scalar_lea.vmem [#allocation6], %s222
          %s225 = ssub.s32 512, 512
          %226 = vsyncadd %s220, %s225
          %s227 = smul.addr %s23, 4
          %s228 = smul.addr %s227, 128
          %s229 = scalar_lea.hbm %s0, %s228
          %s230 = sshll.u32 %s223, 4
          %s231 = int_to_ptr.vmem [resolvable:$true] %s230
          %236 = dma.hbm_to_vmem [thread:$0]  %s229, 512, %s231, %s220, 256, 256, 16
        $region36: #{tpu_custom_call.1} parent=31 // pred_fallthru
          _
        // Predicated region
        $region37: #{tpu_custom_call.1} parent=31 // pred_check
          %p237 = pneg %p69
        $region38: #{tpu_custom_call.1} parent=31 // pred_check_branch
          %239 = sbr.rel (%p237) target = $region40
        $region39: #{tpu_custom_call.1} parent=31 // pred_region
          %s240 = sand.u32 %s59, 1
          %s241 = scalar_lea.sflag [#allocation10], %s240
          %s242 = sand.u32 %s59, 1
          %s243 = smul.addr %s242, 32
          %s244 = scalar_lea.vmem [#allocation9], %s243
          %s246 = ssub.s32 512, 512
          %247 = vsyncadd %s241, %s246
          %s248 = smul.addr %s23, 4
          %s249 = smul.addr %s248, 128
          %s250 = scalar_lea.hbm %s1, %s249
          %s251 = sshll.u32 %s244, 4
          %s252 = int_to_ptr.vmem [resolvable:$true] %s251
          %257 = dma.hbm_to_vmem [thread:$0]  %s250, 512, %s252, %s241, 256, 256, 16
        $region40: #{tpu_custom_call.1} parent=31 // pred_fallthru
          _
      $region32: #{tpu_custom_call.1} parent=5 // pred_fallthru
        _
      %p258 = scmp.le.s32.totalorder 1, %s23
      %p259 = scmp.lt.s32.totalorder %s23, 3
      %p260 = pnand %p258, %p259
      %p261 = pneg %p260
      // Predicated region
      $region41: #{tpu_custom_call.1} parent=5 // pred_check
        _
      $region42: #{tpu_custom_call.1} parent=5 // pred_check_branch
        %263 = sbr.rel (%p260) target = $region44
      $region43: #{tpu_custom_call.1} parent=5 // pred_region
        %s264 = ssub.s32 %s23, 1
        %s265 = sand.u32 %s36, 1
        %s266 = scalar_lea.sflag [#allocation7], %s265
        %s267 = sand.u32 %s36, 1
        %s268 = smul.addr %s267, 32
        %s269 = scalar_lea.vmem [#allocation6], %s268
        // Predicated region
        $region45: #{tpu_custom_call.1} parent=43 // pred_check
          %p270 = pneg %p49
        $region46: #{tpu_custom_call.1} parent=43 // pred_check_branch
          %272 = sbr.rel (%p270) target = $region48
        $region47: #{tpu_custom_call.1} parent=43 // pred_region
          %273 = dma.done %s266, 512
        $region48: #{tpu_custom_call.1} parent=43 // pred_fallthru
          _
        %s274 = sand.u32 %s62, 1
        %s275 = scalar_lea.sflag [#allocation10], %s274
        %s276 = sand.u32 %s62, 1
        %s277 = smul.addr %s276, 32
        %s278 = scalar_lea.vmem [#allocation9], %s277
        // Predicated region
        $region49: #{tpu_custom_call.1} parent=43 // pred_check
          %p279 = pneg %p75
        $region50: #{tpu_custom_call.1} parent=43 // pred_check_branch
          %281 = sbr.rel (%p279) target = $region52
        $region51: #{tpu_custom_call.1} parent=43 // pred_region
          %282 = dma.done %s275, 512
        $region52: #{tpu_custom_call.1} parent=43 // pred_fallthru
          _
        %s283 = sand.u32 %s36, 1
        %s284 = scalar_lea.sflag [#allocation7], %s283
        %s285 = sand.u32 %s36, 1
        %s286 = smul.addr %s285, 32
        %s287 = scalar_lea.vmem [#allocation6], %s286
        %p288 = pneg %p49
        %p289 = pneg %p46
        %s290 = sand.u32 %s62, 1
        %s291 = scalar_lea.sflag [#allocation10], %s290
        %s292 = sand.u32 %s62, 1
        %s293 = smul.addr %s292, 32
        %s294 = scalar_lea.vmem [#allocation9], %s293
        %p295 = pneg %p75
        %p296 = pneg %p72
        %p297 = pneg %p96
        %p298 = pneg %p93
        %p299 = pneg %p117
        %p300 = pneg %p114
        %p301 = pneg %p138
        %p302 = pneg %p135
        %p303 = pneg %p159
        %p304 = pneg %p156
        %p305 = pneg %p185
        %p306 = pneg %p182
        %s307 = sand.u32 %s172, 1
        %s308 = scalar_lea.sflag [#allocation8], %s307
        %s309 = sand.u32 %s172, 1
        %s310 = smul.addr %s309, 32
        %s311 = scalar_lea.vmem [#allocation11], %s310
        %v312 = vld [vmem:[%s269] sm:$0xff]
        %v313 = vld [vmem:[%s269 + $0x8] sm:$0xff]
        %v314 = vld [vmem:[%s269 + $0x10] sm:$0xff]
        %v315 = vld [vmem:[%s269 + $0x18] sm:$0xff]
        %v316 = vld [vmem:[%s278] sm:$0xff]
        %v317 = vld [vmem:[%s278 + $0x8] sm:$0xff]
        %v318 = vld [vmem:[%s278 + $0x10] sm:$0xff]
        %v319 = vld [vmem:[%s278 + $0x18] sm:$0xff]
        %v320 = vadd.f32 %v312, %v313
        %321 = vadd.xlane.f32.xlu0 %v320
        %v322 = vpop.xlane.xlu0 %321
        %v323 = vadd.f32 %v314, %v315
        %324 = vadd.xlane.f32.xlu0 %v323
        %v325 = vpop.xlane.xlu0 %324
        %v326 = vrcp.pop 256.0
        %v327 = vmul.f32 %v322, %v326
        %v328 = vmul.f32 %v325, %v326
        %v329 = vmax.f32 %v312, %v313
        %330 = vmax.xlane.f32.xlu0 %v329
        %v331 = vpop.xlane.xlu0 %330
        %v332 = vmax.f32 %v314, %v315
        %333 = vmax.xlane.f32.xlu0 %v332
        %v334 = vpop.xlane.xlu0 %333
        %v335 = vadd.f32 %v316, %v317
        %336 = vadd.xlane.f32.xlu0 %v335
        %v337 = vpop.xlane.xlu0 %336
        %v338 = vadd.f32 %v318, %v319
        %339 = vadd.xlane.f32.xlu0 %v338
        %v340 = vpop.xlane.xlu0 %339
        %v341 = vmul.f32 %v337, %v326
        %v342 = vmul.f32 %v340, %v326
        %v343 = vmax.f32 %v316, %v317
        %344 = vmax.xlane.f32.xlu0 %v343
        %v345 = vpop.xlane.xlu0 %344
        %v346 = vmax.f32 %v318, %v319
        %347 = vmax.xlane.f32.xlu0 %v346
        %v348 = vpop.xlane.xlu0 %347
        %vm349 = vcmask 7168
        %v350 = vsel %vm349, %v327, %v331
        %v351 = vsel %vm349, %v328, %v334
        %vm352 = vcmask 15360
        %v353 = vsel %vm352, %v350, %v341
        %v354 = vsel %vm352, %v351, %v342
        %vm355 = vcmask 23552
        %v356 = vsel %vm355, %v353, %v345
        %v357 = vsel %vm355, %v354, %v348
        %vm358 = vcmask 24576
        %359 = vst.msk [vmem:[#allocation2] sm:$0x1] %vm358, 0.0
        %360 = vst.msk [vmem:[#allocation2 + $0x11] sm:$0x1] %vm358, 0.0
        %vm361 = vcmask 31744
        %362 = vst.msk [vmem:[#allocation2 + $0x1] sm:$0xff] %vm361, %v356
        %363 = vst.msk [vmem:[#allocation2 + $0x9] sm:$0xff] %vm361, %v357
        %v364 = vld [vmem:[%s2] sm:$0x1]
        %v365 = vld [vmem:[#allocation2] sm:$0xff]
        %v366 = vld [vmem:[#allocation2 + $0x8] sm:$0xff]
        %v367 = vlaneseq
        %v368 = vshrl.u32 %v367, 7
        %v369 = vsub.s32 0, %v368
        %v370 = vrot.slane %v364, %v369
        %v371 = vmul.f32 %v365, %v370
        %v372 = vmul.f32 %v366, %v370
        %v373 = vsel %vm361, %v371, 0.0
        %374 = vadd.xlane.f32.xlu0 %v373
        %v375 = vpop.xlane.xlu0 %374
        %v376 = vsel %vm361, %v372, 0.0
        %377 = vadd.xlane.f32.xlu0 %v376
        %v378 = vpop.xlane.xlu0 %377
        %v379 = vadd.f32 %v375, 0.0
        %v380 = vadd.f32 %v378, 0.0
        %v381 = vld [vmem:[%s2 + $0x1] sm:$0x1]
        %v382 = vld [vmem:[#allocation2 + $0x1] sm:$0xff]
        %v383 = vld [vmem:[#allocation2 + $0x9] sm:$0xff]
        %v384 = vlaneseq
        %v385 = vshrl.u32 %v384, 7
        %v386 = vsub.s32 0, %v385
        %v387 = vrot.slane %v381, %v386
        %v388 = vmul.f32 %v382, %v387
        %v389 = vmul.f32 %v383, %v387
        %v390 = vsel %vm361, %v388, 0.0
        %391 = vadd.xlane.f32.xlu0 %v390
        %v392 = vpop.xlane.xlu0 %391
        %v393 = vsel %vm361, %v389, 0.0
        %394 = vadd.xlane.f32.xlu0 %v393
        %v395 = vpop.xlane.xlu0 %394
        %v396 = vadd.f32 %v379, %v392
        %v397 = vadd.f32 %v380, %v395
        %v398 = vld [vmem:[%s2 + $0x2] sm:$0x1]
        %v399 = vld [vmem:[#allocation2 + $0x2] sm:$0xff]
        %v400 = vld [vmem:[#allocation2 + $0xa] sm:$0xff]
        %v401 = vlaneseq
        %v402 = vshrl.u32 %v401, 7
        %v403 = vsub.s32 0, %v402
        %v404 = vrot.slane %v398, %v403
        %v405 = vmul.f32 %v399, %v404
        %v406 = vmul.f32 %v400, %v404
        %v407 = vsel %vm361, %v405, 0.0
        %408 = vadd.xlane.f32.xlu0 %v407
        %v409 = vpop.xlane.xlu0 %408
        %v410 = vsel %vm361, %v406, 0.0
        %411 = vadd.xlane.f32.xlu0 %v410
        %v412 = vpop.xlane.xlu0 %411
        %v413 = vadd.f32 %v396, %v409
        %v414 = vadd.f32 %v397, %v412
        %s415 = sld [smem:[#allocation4]]
        %v416 = vstv %s415
        %v417 = vadd.f32 %v413, %v416
        %v418 = vadd.f32 %v414, %v416
        %v419 = vxor.u32 %v417, 2147483648
        %v420 = vxor.u32 %v418, 2147483648
        %v421 = vmul.f32 %v419, 1.442695
        %v422 = vpow.pop %v421
        %v423 = vmul.f32 %v420, 1.442695
        %v424 = vpow.pop %v423
        %v425 = vadd.f32 %v422, 1.0
        %v426 = vadd.f32 %v424, 1.0
        %v427 = vrcp.pop %v425
        %v428 = vmul.f32 1.0, %v427
        %v429 = vrcp.pop %v426
        %v430 = vmul.f32 1.0, %v429
        %v431 = vadd.f32 %v312, %v314
        %v432 = vrot.slane %v431, 4
        %v433 = vadd.f32 %v431, %v432
        %v434 = vrot.slane %v433, 2
        %v435 = vadd.f32 %v433, %v434
        %v436 = vrot.slane %v435, 1
        %v437 = vadd.f32 %v435, %v436
        %v438 = vadd.f32 %v313, %v315
        %v439 = vrot.slane %v438, 4
        %v440 = vadd.f32 %v438, %v439
        %v441 = vrot.slane %v440, 2
        %v442 = vadd.f32 %v440, %v441
        %v443 = vrot.slane %v442, 1
        %v444 = vadd.f32 %v442, %v443
        %v445 = vrcp.pop 16.0
        %v446 = vmul.f32 %v437, %v445
        %v447 = vmul.f32 %v444, %v445
        %v448 = vmax.f32 %v312, %v314
        %v449 = vrot.slane %v448, 4
        %v450 = vmax.f32 %v448, %v449
        %v451 = vrot.slane %v450, 2
        %v452 = vmax.f32 %v450, %v451
        %v453 = vrot.slane %v452, 1
        %v454 = vmax.f32 %v452, %v453
        %v455 = vmax.f32 %v313, %v315
        %v456 = vrot.slane %v455, 4
        %v457 = vmax.f32 %v455, %v456
        %v458 = vrot.slane %v457, 2
        %v459 = vmax.f32 %v457, %v458
        %v460 = vrot.slane %v459, 1
        %v461 = vmax.f32 %v459, %v460
        %v462 = vadd.f32 %v316, %v318
        %v463 = vrot.slane %v462, 4
        %v464 = vadd.f32 %v462, %v463
        %v465 = vrot.slane %v464, 2
        %v466 = vadd.f32 %v464, %v465
        %v467 = vrot.slane %v466, 1
        %v468 = vadd.f32 %v466, %v467
        %v469 = vadd.f32 %v317, %v319
        %v470 = vrot.slane %v469, 4
        %v471 = vadd.f32 %v469, %v470
        %v472 = vrot.slane %v471, 2
        %v473 = vadd.f32 %v471, %v472
        %v474 = vrot.slane %v473, 1
        %v475 = vadd.f32 %v473, %v474
        %v476 = vmul.f32 %v468, %v445
        %v477 = vmul.f32 %v475, %v445
        %v478 = vmax.f32 %v316, %v318
        %v479 = vrot.slane %v478, 4
        %v480 = vmax.f32 %v478, %v479
        %v481 = vrot.slane %v480, 2
        %v482 = vmax.f32 %v480, %v481
        %v483 = vrot.slane %v482, 1
        %v484 = vmax.f32 %v482, %v483
        %v485 = vmax.f32 %v317, %v319
        %v486 = vrot.slane %v485, 4
        %v487 = vmax.f32 %v485, %v486
        %v488 = vrot.slane %v487, 2
        %v489 = vmax.f32 %v487, %v488
        %v490 = vrot.slane %v489, 1
        %v491 = vmax.f32 %v489, %v490
        %vm492 = vcmask 1040384
        %v493 = vsel %vm492, %v446, %v454
        %v494 = vsel %vm492, %v447, %v461
        %vm495 = vcmask 1041408
        %v496 = vsel %vm495, %v493, %v476
        %v497 = vsel %vm495, %v494, %v477
        %vm498 = vcmask 1042432
        %v499 = vsel %vm498, %v496, %v484
        %v500 = vsel %vm498, %v497, %v491
        %501 = vst [vmem:[#allocation3] sm:$0xf] 0.0
        %v504 = vcombine.low %v499, %v500
        %506 = vst [vmem:[#allocation3 + $0x4] sm:$0xff] %v504
        %507 = vst [vmem:[#allocation3 + $0xc] sm:$0xf] 0.0
        %v508 = vlaneseq
        %v509 = vand.u32 %v508, 127
        %v510 = vadd.s32 %v509, 128
        %v511 = vand.u32 %v509, 15
        %v512 = vand.u32 %v510, 15
        %v513 = vshra.s32 %v509, 4
        %v514 = vshra.s32 %v510, 4
        %vm515 = vcmp.ge.s32.totalorder %v511, 3
        %vm516 = vcmp.ge.s32.totalorder %v512, 3
        %vm517 = vcmp.le.s32.totalorder %v511, 18
        %vm518 = vcmp.le.s32.totalorder %v512, 18
        %vm519 = vmand %vm515, %vm517
        %vm520 = vmand %vm516, %vm518
        %vm521 = vcmp.ge.s32.totalorder %v511, 2
        %vm522 = vcmp.ge.s32.totalorder %v512, 2
        %vm523 = vcmp.le.s32.totalorder %v511, 17
        %vm524 = vcmp.le.s32.totalorder %v512, 17
        %vm525 = vmand %vm521, %vm523
        %vm526 = vmand %vm522, %vm524
        %vm527 = vcmp.ge.s32.totalorder %v511, 1
        %vm528 = vcmp.ge.s32.totalorder %v512, 1
        %vm529 = vcmp.le.s32.totalorder %v511, 16
        %vm530 = vcmp.le.s32.totalorder %v512, 16
        %vm531 = vmand %vm527, %vm529
        %vm532 = vmand %vm528, %vm530
        %vm533 = vcmp.ge.s32.totalorder %v511, 0
        %vm534 = vcmp.ge.s32.totalorder %v512, 0
        %vm535 = vcmp.le.s32.totalorder %v511, 15
        %vm536 = vcmp.le.s32.totalorder %v512, 15
        %vm537 = vmand %vm533, %vm535
        %vm538 = vmand %vm534, %vm536
        %vm539 = vcmp.ge.s32.totalorder %v511, 4294967295
        %vm540 = vcmp.ge.s32.totalorder %v512, 4294967295
        %vm541 = vcmp.le.s32.totalorder %v511, 14
        %vm542 = vcmp.le.s32.totalorder %v512, 14
        %vm543 = vmand %vm539, %vm541
        %vm544 = vmand %vm540, %vm542
        %vm545 = vcmp.ge.s32.totalorder %v511, 4294967294
        %vm546 = vcmp.ge.s32.totalorder %v512, 4294967294
        %vm547 = vcmp.le.s32.totalorder %v511, 13
        %vm548 = vcmp.le.s32.totalorder %v512, 13
        %vm549 = vmand %vm545, %vm547
        %vm550 = vmand %vm546, %vm548
        %vm551 = vcmp.ge.s32.totalorder %v511, 4294967293
        %vm552 = vcmp.ge.s32.totalorder %v512, 4294967293
        %vm553 = vcmp.le.s32.totalorder %v511, 12
        %vm554 = vcmp.le.s32.totalorder %v512, 12
        %vm555 = vmand %vm551, %vm553
        %vm556 = vmand %vm552, %vm554
        %vm557 = vcmp.ge.s32.totalorder %v513, 3
        %vm558 = vcmp.ge.s32.totalorder %v514, 3
        %vm559 = vcmp.le.s32.totalorder %v513, 18
        %vm560 = vcmp.le.s32.totalorder %v514, 18
        %vm561 = vmand %vm557, %vm559
        %vm562 = vmand %vm558, %vm560
        %vm563 = vmand %vm561, %vm519
        %vm564 = vmand %vm562, %vm520
        %v565 = vld [vmem:[#allocation3] sm:$0xff]
        %v566 = vld [vmem:[#allocation3 + $0x8] sm:$0xf]
        %v567 = vld [vmem:[%s4] sm:$0xf]
        %v568 = vsel %vm563, 1, 0
        %v569 = vsel %vm564, 1, 0
        %vm570 = vcmp.eq.s32.totalorder %v568, 1
        %vm571 = vcmp.eq.s32.totalorder %v569, 1
        %v574 = vcombine.high %v565, %v565
        %575 = vrot.lane.b32.xlu0 %v565, 51
        %v576 = vpop.permute.xlu0 %575
        %577 = vrot.lane.b32.xlu0 %v574, 51
        %v578 = vpop.permute.xlu0 %577
        %579 = vrot.lane.b32.xlu0 %v566, 51
        %v580 = vpop.permute.xlu0 %579
        %vm581 = vcmask 416768
        %v582 = vsel %vm581, %v576, %v578
        %v583 = vsel %vm581, %v578, %v580
        %v586 = vsel %vm570, %v582, 0.0
        %v587 = vsel %vm571, %v583, 0.0
        %589 = vset.pattern.permute.xlu0 0
        %590 = vperm.xlu0 %589, %v567
        %v591 = vpop.permute.xlu0 %590
        %v593 = vmul.f32 %v586, %v591
        %v594 = vmul.f32 %v587, %v591
        %v595 = vadd.f32 %v593, 0.0
        %v596 = vadd.f32 %v594, 0.0
        %vm597 = vmand %vm561, %vm525
        %vm598 = vmand %vm562, %vm526
        %v599 = vld [vmem:[#allocation3] sm:$0xff]
        %v600 = vld [vmem:[#allocation3 + $0x8] sm:$0xf]
        %v601 = vld [vmem:[%s4] sm:$0xf]
        %v602 = vsel %vm597, 1, 0
        %v603 = vsel %vm598, 1, 0
        %vm604 = vcmp.eq.s32.totalorder %v602, 1
        %vm605 = vcmp.eq.s32.totalorder %v603, 1
        %v608 = vcombine.high %v599, %v599
        %609 = vrot.lane.b32.xlu0 %v599, 50
        %v610 = vpop.permute.xlu0 %609
        %611 = vrot.lane.b32.xlu0 %v608, 50
        %v612 = vpop.permute.xlu0 %611
        %613 = vrot.lane.b32.xlu0 %v600, 50
        %v614 = vpop.permute.xlu0 %613
        %vm615 = vcmask 408576
        %v616 = vsel %vm615, %v610, %v612
        %v617 = vsel %vm615, %v612, %v614
        %v620 = vsel %vm604, %v616, 0.0
        %v621 = vsel %vm605, %v617, 0.0
        %623 = vset.pattern.permute.xlu0 1
        %624 = vperm.xlu0 %623, %v601
        %v625 = vpop.permute.xlu0 %624
        %v627 = vmul.f32 %v620, %v625
        %v628 = vmul.f32 %v621, %v625
        %v629 = vadd.f32 %v627, 0.0
        %v630 = vadd.f32 %v628, 0.0
        %vm631 = vmand %vm561, %vm531
        %vm632 = vmand %vm562, %vm532
        %v633 = vld [vmem:[#allocation3] sm:$0xff]
        %v634 = vld [vmem:[#allocation3 + $0x8] sm:$0xf]
        %v635 = vld [vmem:[%s4] sm:$0xf]
        %v636 = vsel %vm631, 1, 0
        %v637 = vsel %vm632, 1, 0
        %vm638 = vcmp.eq.s32.totalorder %v636, 1
        %vm639 = vcmp.eq.s32.totalorder %v637, 1
        %v642 = vcombine.high %v633, %v633
        %643 = vrot.lane.b32.xlu0 %v633, 49
        %v644 = vpop.permute.xlu0 %643
        %645 = vrot.lane.b32.xlu0 %v642, 49
        %v646 = vpop.permute.xlu0 %645
        %647 = vrot.lane.b32.xlu0 %v634, 49
        %v648 = vpop.permute.xlu0 %647
        %vm649 = vcmask 400384
        %v650 = vsel %vm649, %v644, %v646
        %v651 = vsel %vm649, %v646, %v648
        %v654 = vsel %vm638, %v650, 0.0
        %v655 = vsel %vm639, %v651, 0.0
        %657 = vset.pattern.permute.xlu0 2
        %658 = vperm.xlu0 %657, %v635
        %v659 = vpop.permute.xlu0 %658
        %v661 = vmul.f32 %v654, %v659
        %v662 = vmul.f32 %v655, %v659
        %v663 = vadd.f32 %v595, %v661
        %v664 = vadd.f32 %v596, %v662
        %vm665 = vmand %vm561, %vm537
        %vm666 = vmand %vm562, %vm538
        %v667 = vld [vmem:[#allocation3] sm:$0xff]
        %v668 = vld [vmem:[#allocation3 + $0x8] sm:$0xf]
        %v669 = vld [vmem:[%s4] sm:$0xf]
        %v670 = vsel %vm665, 1, 0
        %v671 = vsel %vm666, 1, 0
        %vm672 = vcmp.eq.s32.totalorder %v670, 1
        %vm673 = vcmp.eq.s32.totalorder %v671, 1
        %v676 = vcombine.high %v667, %v667
        %677 = vrot.lane.b32.xlu0 %v667, 48
        %v678 = vpop.permute.xlu0 %677
        %679 = vrot.lane.b32.xlu0 %v676, 48
        %v680 = vpop.permute.xlu0 %679
        %681 = vrot.lane.b32.xlu0 %v668, 48
        %v682 = vpop.permute.xlu0 %681
        %vm683 = vcmask 392192
        %v684 = vsel %vm683, %v678, %v680
        %v685 = vsel %vm683, %v680, %v682
        %v688 = vsel %vm672, %v684, 0.0
        %v689 = vsel %vm673, %v685, 0.0
        %691 = vset.pattern.permute.xlu0 3
        %692 = vperm.xlu0 %691, %v669
        %v693 = vpop.permute.xlu0 %692
        %v695 = vmul.f32 %v688, %v693
        %v696 = vmul.f32 %v689, %v693
        %v697 = vadd.f32 %v629, %v695
        %v698 = vadd.f32 %v630, %v696
        %vm699 = vmand %vm561, %vm543
        %vm700 = vmand %vm562, %vm544
        %v701 = vld [vmem:[#allocation3] sm:$0xff]
        %v702 = vld [vmem:[#allocation3 + $0x8] sm:$0xf]
        %v703 = vld [vmem:[%s4] sm:$0xf]
        %v704 = vsel %vm699, 1, 0
        %v705 = vsel %vm700, 1, 0
        %vm706 = vcmp.eq.s32.totalorder %v704, 1
        %vm707 = vcmp.eq.s32.totalorder %v705, 1
        %v710 = vcombine.high %v701, %v701
        %711 = vrot.lane.b32.xlu0 %v701, 47
        %v712 = vpop.permute.xlu0 %711
        %713 = vrot.lane.b32.xlu0 %v710, 47
        %v714 = vpop.permute.xlu0 %713
        %715 = vrot.lane.b32.xlu0 %v702, 47
        %v716 = vpop.permute.xlu0 %715
        %vm717 = vcmask 384000
        %v718 = vsel %vm717, %v712, %v714
        %v719 = vsel %vm717, %v714, %v716
        %v722 = vsel %vm706, %v718, 0.0
        %v723 = vsel %vm707, %v719, 0.0
        %725 = vset.pattern.permute.xlu0 4
        %726 = vperm.xlu0 %725, %v703
        %v727 = vpop.permute.xlu0 %726
        %v729 = vmul.f32 %v722, %v727
        %v730 = vmul.f32 %v723, %v727
        %v731 = vadd.f32 %v663, %v729
        %v732 = vadd.f32 %v664, %v730
        %vm733 = vmand %vm561, %vm549
        %vm734 = vmand %vm562, %vm550
        %v735 = vld [vmem:[#allocation3] sm:$0xff]
        %v736 = vld [vmem:[#allocation3 + $0x8] sm:$0xf]
        %v737 = vld [vmem:[%s4] sm:$0xf]
        %v738 = vsel %vm733, 1, 0
        %v739 = vsel %vm734, 1, 0
        %vm740 = vcmp.eq.s32.totalorder %v738, 1
        %vm741 = vcmp.eq.s32.totalorder %v739, 1
        %v744 = vcombine.high %v735, %v735
        %745 = vrot.lane.b32.xlu0 %v735, 46
        %v746 = vpop.permute.xlu0 %745
        %747 = vrot.lane.b32.xlu0 %v744, 46
        %v748 = vpop.permute.xlu0 %747
        %749 = vrot.lane.b32.xlu0 %v736, 46
        %v750 = vpop.permute.xlu0 %749
        %vm751 = vcmask 375808
        %v752 = vsel %vm751, %v746, %v748
        %v753 = vsel %vm751, %v748, %v750
        %v756 = vsel %vm740, %v752, 0.0
        %v757 = vsel %vm741, %v753, 0.0
        %759 = vset.pattern.permute.xlu0 5
        %760 = vperm.xlu0 %759, %v737
        %v761 = vpop.permute.xlu0 %760
        %v763 = vmul.f32 %v756, %v761
        %v764 = vmul.f32 %v757, %v761
        %v765 = vadd.f32 %v697, %v763
        %v766 = vadd.f32 %v698, %v764
        %vm767 = vmand %vm561, %vm555
        %vm768 = vmand %vm562, %vm556
        %v769 = vld [vmem:[#allocation3] sm:$0xff]
        %v770 = vld [vmem:[#allocation3 + $0x8] sm:$0xf]
        %v771 = vld [vmem:[%s4] sm:$0xf]
        %v772 = vsel %vm767, 1, 0
        %v773 = vsel %vm768, 1, 0
        %vm774 = vcmp.eq.s32.totalorder %v772, 1
        %vm775 = vcmp.eq.s32.totalorder %v773, 1
        %v778 = vcombine.high %v769, %v769
        %779 = vrot.lane.b32.xlu0 %v769, 45
        %v780 = vpop.permute.xlu0 %779
        %781 = vrot.lane.b32.xlu0 %v778, 45
        %v782 = vpop.permute.xlu0 %781
        %783 = vrot.lane.b32.xlu0 %v770, 45
        %v784 = vpop.permute.xlu0 %783
        %vm785 = vcmask 367616
        %v786 = vsel %vm785, %v780, %v782
        %v787 = vsel %vm785, %v782, %v784
        %v790 = vsel %vm774, %v786, 0.0
        %v791 = vsel %vm775, %v787, 0.0
        %793 = vset.pattern.permute.xlu0 6
        %794 = vperm.xlu0 %793, %v771
        %v795 = vpop.permute.xlu0 %794
        %v797 = vmul.f32 %v790, %v795
        %v798 = vmul.f32 %v791, %v795
        %v799 = vadd.f32 %v731, %v797
        %v800 = vadd.f32 %v732, %v798
        %vm801 = vcmp.ge.s32.totalorder %v513, 2
        %vm802 = vcmp.ge.s32.totalorder %v514, 2
        %vm803 = vcmp.le.s32.totalorder %v513, 17
        %vm804 = vcmp.le.s32.totalorder %v514, 17
        %vm805 = vmand %vm801, %vm803
        %vm806 = vmand %vm802, %vm804
        %vm807 = vmand %vm805, %vm519
        %vm808 = vmand %vm806, %vm520
        %v809 = vld [vmem:[#allocation3] sm:$0xff]
        %v810 = vld [vmem:[#allocation3 + $0x8] sm:$0xf]
        %v811 = vld [vmem:[%s4] sm:$0xf]
        %v812 = vsel %vm807, 1, 0
        %v813 = vsel %vm808, 1, 0
        %vm814 = vcmp.eq.s32.totalorder %v812, 1
        %vm815 = vcmp.eq.s32.totalorder %v813, 1
        %v818 = vcombine.high %v809, %v809
        %819 = vrot.lane.b32.xlu0 %v809, 35
        %v820 = vpop.permute.xlu0 %819
        %821 = vrot.lane.b32.xlu0 %v818, 35
        %v822 = vpop.permute.xlu0 %821
        %823 = vrot.lane.b32.xlu0 %v810, 35
        %v824 = vpop.permute.xlu0 %823
        %vm825 = vcmask 285696
        %v826 = vsel %vm825, %v820, %v822
        %v827 = vsel %vm825, %v822, %v824
        %v830 = vsel %vm814, %v826, 0.0
        %v831 = vsel %vm815, %v827, 0.0
        %833 = vset.pattern.permute.xlu0 7
        %834 = vperm.xlu0 %833, %v811
        %v835 = vpop.permute.xlu0 %834
        %v837 = vmul.f32 %v830, %v835
        %v838 = vmul.f32 %v831, %v835
        %v839 = vadd.f32 %v765, %v837
        %v840 = vadd.f32 %v766, %v838
        %vm841 = vmand %vm805, %vm525
        %vm842 = vmand %vm806, %vm526
        %v843 = vld [vmem:[#allocation3] sm:$0xff]
        %v844 = vld [vmem:[#allocation3 + $0x8] sm:$0xf]
        %v845 = vld [vmem:[%s4] sm:$0xf]
        %v846 = vsel %vm841, 1, 0
        %v847 = vsel %vm842, 1, 0
        %vm848 = vcmp.eq.s32.totalorder %v846, 1
        %vm849 = vcmp.eq.s32.totalorder %v847, 1
        %v852 = vcombine.high %v843, %v843
        %853 = vrot.lane.b32.xlu0 %v843, 34
        %v854 = vpop.permute.xlu0 %853
        %855 = vrot.lane.b32.xlu0 %v852, 34
        %v856 = vpop.permute.xlu0 %855
        %857 = vrot.lane.b32.xlu0 %v844, 34
        %v858 = vpop.permute.xlu0 %857
        %vm859 = vcmask 277504
        %v860 = vsel %vm859, %v854, %v856
        %v861 = vsel %vm859, %v856, %v858
        %v864 = vsel %vm848, %v860, 0.0
        %v865 = vsel %vm849, %v861, 0.0
        %867 = vset.pattern.permute.xlu0 8
        %868 = vperm.xlu0 %867, %v845
        %v869 = vpop.permute.xlu0 %868
        %v871 = vmul.f32 %v864, %v869
        %v872 = vmul.f32 %v865, %v869
        %v873 = vadd.f32 %v799, %v871
        %v874 = vadd.f32 %v800, %v872
        %vm875 = vmand %vm805, %vm531
        %vm876 = vmand %vm806, %vm532
        %v877 = vld [vmem:[#allocation3] sm:$0xff]
        %v878 = vld [vmem:[#allocation3 + $0x8] sm:$0xf]
        %v879 = vld [vmem:[%s4] sm:$0xf]
        %v880 = vsel %vm875, 1, 0
        %v881 = vsel %vm876, 1, 0
        %vm882 = vcmp.eq.s32.totalorder %v880, 1
        %vm883 = vcmp.eq.s32.totalorder %v881, 1
        %v886 = vcombine.high %v877, %v877
        %887 = vrot.lane.b32.xlu0 %v877, 33
        %v888 = vpop.permute.xlu0 %887
        %889 = vrot.lane.b32.xlu0 %v886, 33
        %v890 = vpop.permute.xlu0 %889
        %891 = vrot.lane.b32.xlu0 %v878, 33
        %v892 = vpop.permute.xlu0 %891
        %vm893 = vcmask 269312
        %v894 = vsel %vm893, %v888, %v890
        %v895 = vsel %vm893, %v890, %v892
        %v898 = vsel %vm882, %v894, 0.0
        %v899 = vsel %vm883, %v895, 0.0
        %901 = vset.pattern.permute.xlu0 9
        %902 = vperm.xlu0 %901, %v879
        %v903 = vpop.permute.xlu0 %902
        %v905 = vmul.f32 %v898, %v903
        %v906 = vmul.f32 %v899, %v903
        %v907 = vadd.f32 %v839, %v905
        %v908 = vadd.f32 %v840, %v906
        %vm909 = vmand %vm805, %vm537
        %vm910 = vmand %vm806, %vm538
        %v911 = vld [vmem:[#allocation3] sm:$0xff]
        %v912 = vld [vmem:[#allocation3 + $0x8] sm:$0xf]
        %v913 = vld [vmem:[%s4] sm:$0xf]
        %v914 = vsel %vm909, 1, 0
        %v915 = vsel %vm910, 1, 0
        %vm916 = vcmp.eq.s32.totalorder %v914, 1
        %vm917 = vcmp.eq.s32.totalorder %v915, 1
        %v920 = vcombine.high %v911, %v911
        %921 = vrot.lane.b32.xlu0 %v911, 32
        %v922 = vpop.permute.xlu0 %921
        %923 = vrot.lane.b32.xlu0 %v920, 32
        %v924 = vpop.permute.xlu0 %923
        %925 = vrot.lane.b32.xlu0 %v912, 32
        %v926 = vpop.permute.xlu0 %925
        %vm927 = vcmask 261120
        %v928 = vsel %vm927, %v922, %v924
        %v929 = vsel %vm927, %v924, %v926
        %v932 = vsel %vm916, %v928, 0.0
        %v933 = vsel %vm917, %v929, 0.0
        %935 = vset.pattern.permute.xlu0 10
        %936 = vperm.xlu0 %935, %v913
        %v937 = vpop.permute.xlu0 %936
        %v939 = vmul.f32 %v932, %v937
        %v940 = vmul.f32 %v933, %v937
        %v941 = vadd.f32 %v873, %v939
        %v942 = vadd.f32 %v874, %v940
        %vm943 = vmand %vm805, %vm543
        %vm944 = vmand %vm806, %vm544
        %v945 = vld [vmem:[#allocation3] sm:$0xff]
        %v946 = vld [vmem:[#allocation3 + $0x8] sm:$0xf]
        %v947 = vld [vmem:[%s4] sm:$0xf]
        %v948 = vsel %vm943, 1, 0
        %v949 = vsel %vm944, 1, 0
        %vm950 = vcmp.eq.s32.totalorder %v948, 1
        %vm951 = vcmp.eq.s32.totalorder %v949, 1
        %v954 = vcombine.high %v945, %v945
        %955 = vrot.lane.b32.xlu0 %v945, 31
        %v956 = vpop.permute.xlu0 %955
        %957 = vrot.lane.b32.xlu0 %v954, 31
        %v958 = vpop.permute.xlu0 %957
        %959 = vrot.lane.b32.xlu0 %v946, 31
        %v960 = vpop.permute.xlu0 %959
        %vm961 = vcmask 252928
        %v962 = vsel %vm961, %v956, %v958
        %v963 = vsel %vm961, %v958, %v960
        %v966 = vsel %vm950, %v962, 0.0
        %v967 = vsel %vm951, %v963, 0.0
        %969 = vset.pattern.permute.xlu0 11
        %970 = vperm.xlu0 %969, %v947
        %v971 = vpop.permute.xlu0 %970
        %v973 = vmul.f32 %v966, %v971
        %v974 = vmul.f32 %v967, %v971
        %v975 = vadd.f32 %v907, %v973
        %v976 = vadd.f32 %v908, %v974
        %vm977 = vmand %vm805, %vm549
        %vm978 = vmand %vm806, %vm550
        %v979 = vld [vmem:[#allocation3] sm:$0xff]
        %v980 = vld [vmem:[#allocation3 + $0x8] sm:$0xf]
        %v981 = vld [vmem:[%s4] sm:$0xf]
        %v982 = vsel %vm977, 1, 0
        %v983 = vsel %vm978, 1, 0
        %vm984 = vcmp.eq.s32.totalorder %v982, 1
        %vm985 = vcmp.eq.s32.totalorder %v983, 1
        %v988 = vcombine.high %v979, %v979
        %989 = vrot.lane.b32.xlu0 %v979, 30
        %v990 = vpop.permute.xlu0 %989
        %991 = vrot.lane.b32.xlu0 %v988, 30
        %v992 = vpop.permute.xlu0 %991
        %993 = vrot.lane.b32.xlu0 %v980, 30
        %v994 = vpop.permute.xlu0 %993
        %vm995 = vcmask 244736
        %v996 = vsel %vm995, %v990, %v992
        %v997 = vsel %vm995, %v992, %v994
        %v1000 = vsel %vm984, %v996, 0.0
        %v1001 = vsel %vm985, %v997, 0.0
        %1003 = vset.pattern.permute.xlu0 12
        %1004 = vperm.xlu0 %1003, %v981
        %v1005 = vpop.permute.xlu0 %1004
        %v1007 = vmul.f32 %v1000, %v1005
        %v1008 = vmul.f32 %v1001, %v1005
        %v1009 = vadd.f32 %v941, %v1007
        %v1010 = vadd.f32 %v942, %v1008
        %vm1011 = vmand %vm805, %vm555
        %vm1012 = vmand %vm806, %vm556
        %v1013 = vld [vmem:[#allocation3] sm:$0xff]
        %v1014 = vld [vmem:[#allocation3 + $0x8] sm:$0xf]
        %v1015 = vld [vmem:[%s4] sm:$0xf]
        %v1016 = vsel %vm1011, 1, 0
        %v1017 = vsel %vm1012, 1, 0
        %vm1018 = vcmp.eq.s32.totalorder %v1016, 1
        %vm1019 = vcmp.eq.s32.totalorder %v1017, 1
        %v1022 = vcombine.high %v1013, %v1013
        %1023 = vrot.lane.b32.xlu0 %v1013, 29
        %v1024 = vpop.permute.xlu0 %1023
        %1025 = vrot.lane.b32.xlu0 %v1022, 29
        %v1026 = vpop.permute.xlu0 %1025
        %1027 = vrot.lane.b32.xlu0 %v1014, 29
        %v1028 = vpop.permute.xlu0 %1027
        %vm1029 = vcmask 236544
        %v1030 = vsel %vm1029, %v1024, %v1026
        %v1031 = vsel %vm1029, %v1026, %v1028
        %v1034 = vsel %vm1018, %v1030, 0.0
        %v1035 = vsel %vm1019, %v1031, 0.0
        %1037 = vset.pattern.permute.xlu0 13
        %1038 = vperm.xlu0 %1037, %v1015
        %v1039 = vpop.permute.xlu0 %1038
        %v1041 = vmul.f32 %v1034, %v1039
        %v1042 = vmul.f32 %v1035, %v1039
        %v1043 = vadd.f32 %v975, %v1041
        %v1044 = vadd.f32 %v976, %v1042
        %vm1045 = vcmp.ge.s32.totalorder %v513, 1
        %vm1046 = vcmp.ge.s32.totalorder %v514, 1
        %vm1047 = vcmp.le.s32.totalorder %v513, 16
        %vm1048 = vcmp.le.s32.totalorder %v514, 16
        %vm1049 = vmand %vm1045, %vm1047
        %vm1050 = vmand %vm1046, %vm1048
        %vm1051 = vmand %vm1049, %vm519
        %vm1052 = vmand %vm1050, %vm520
        %v1053 = vld [vmem:[#allocation3] sm:$0xff]
        %v1054 = vld [vmem:[#allocation3 + $0x8] sm:$0xf]
        %v1055 = vld [vmem:[%s4] sm:$0xf]
        %v1056 = vsel %vm1051, 1, 0
        %v1057 = vsel %vm1052, 1, 0
        %vm1058 = vcmp.eq.s32.totalorder %v1056, 1
        %vm1059 = vcmp.eq.s32.totalorder %v1057, 1
        %v1062 = vcombine.high %v1053, %v1053
        %1063 = vrot.lane.b32.xlu0 %v1053, 19
        %v1064 = vpop.permute.xlu0 %1063
        %1065 = vrot.lane.b32.xlu0 %v1062, 19
        %v1066 = vpop.permute.xlu0 %1065
        %1067 = vrot.lane.b32.xlu0 %v1054, 19
        %v1068 = vpop.permute.xlu0 %1067
        %vm1069 = vcmask 154624
        %v1070 = vsel %vm1069, %v1064, %v1066
        %v1071 = vsel %vm1069, %v1066, %v1068
        %v1074 = vsel %vm1058, %v1070, 0.0
        %v1075 = vsel %vm1059, %v1071, 0.0
        %1077 = vset.pattern.permute.xlu0 14
        %1078 = vperm.xlu0 %1077, %v1055
        %v1079 = vpop.permute.xlu0 %1078
        %v1081 = vmul.f32 %v1074, %v1079
        %v1082 = vmul.f32 %v1075, %v1079
        %v1083 = vadd.f32 %v1009, %v1081
        %v1084 = vadd.f32 %v1010, %v1082
        %vm1085 = vmand %vm1049, %vm525
        %vm1086 = vmand %vm1050, %vm526
        %v1087 = vld [vmem:[#allocation3] sm:$0xff]
        %v1088 = vld [vmem:[#allocation3 + $0x8] sm:$0xf]
        %v1089 = vld [vmem:[%s4] sm:$0xf]
        %v1090 = vsel %vm1085, 1, 0
        %v1091 = vsel %vm1086, 1, 0
        %vm1092 = vcmp.eq.s32.totalorder %v1090, 1
        %vm1093 = vcmp.eq.s32.totalorder %v1091, 1
        %v1096 = vcombine.high %v1087, %v1087
        %1097 = vrot.lane.b32.xlu0 %v1087, 18
        %v1098 = vpop.permute.xlu0 %1097
        %1099 = vrot.lane.b32.xlu0 %v1096, 18
        %v1100 = vpop.permute.xlu0 %1099
        %1101 = vrot.lane.b32.xlu0 %v1088, 18
        %v1102 = vpop.permute.xlu0 %1101
        %vm1103 = vcmask 146432
        %v1104 = vsel %vm1103, %v1098, %v1100
        %v1105 = vsel %vm1103, %v1100, %v1102
        %v1108 = vsel %vm1092, %v1104, 0.0
        %v1109 = vsel %vm1093, %v1105, 0.0
        %1111 = vset.pattern.permute.xlu0 15
        %1112 = vperm.xlu0 %1111, %v1089
        %v1113 = vpop.permute.xlu0 %1112
        %v1115 = vmul.f32 %v1108, %v1113
        %v1116 = vmul.f32 %v1109, %v1113
        %v1117 = vadd.f32 %v1043, %v1115
        %v1118 = vadd.f32 %v1044, %v1116
        %vm1119 = vmand %vm1049, %vm531
        %vm1120 = vmand %vm1050, %vm532
        %v1121 = vld [vmem:[#allocation3] sm:$0xff]
        %v1122 = vld [vmem:[#allocation3 + $0x8] sm:$0xf]
        %v1123 = vld [vmem:[%s4] sm:$0xf]
        %v1124 = vsel %vm1119, 1, 0
        %v1125 = vsel %vm1120, 1, 0
        %vm1126 = vcmp.eq.s32.totalorder %v1124, 1
        %vm1127 = vcmp.eq.s32.totalorder %v1125, 1
        %v1130 = vcombine.high %v1121, %v1121
        %1131 = vrot.lane.b32.xlu0 %v1121, 17
        %v1132 = vpop.permute.xlu0 %1131
        %1133 = vrot.lane.b32.xlu0 %v1130, 17
        %v1134 = vpop.permute.xlu0 %1133
        %1135 = vrot.lane.b32.xlu0 %v1122, 17
        %v1136 = vpop.permute.xlu0 %1135
        %vm1137 = vcmask 138240
        %v1138 = vsel %vm1137, %v1132, %v1134
        %v1139 = vsel %vm1137, %v1134, %v1136
        %v1142 = vsel %vm1126, %v1138, 0.0
        %v1143 = vsel %vm1127, %v1139, 0.0
        %1145 = vset.pattern.permute.xlu0 16
        %1146 = vperm.xlu0 %1145, %v1123
        %v1147 = vpop.permute.xlu0 %1146
        %v1149 = vmul.f32 %v1142, %v1147
        %v1150 = vmul.f32 %v1143, %v1147
        %v1151 = vadd.f32 %v1083, %v1149
        %v1152 = vadd.f32 %v1084, %v1150
        %vm1153 = vmand %vm1049, %vm537
        %vm1154 = vmand %vm1050, %vm538
        %v1155 = vld [vmem:[#allocation3] sm:$0xff]
        %v1156 = vld [vmem:[#allocation3 + $0x8] sm:$0xf]
        %v1157 = vld [vmem:[%s4] sm:$0xf]
        %v1158 = vsel %vm1153, 1, 0
        %v1159 = vsel %vm1154, 1, 0
        %vm1160 = vcmp.eq.s32.totalorder %v1158, 1
        %vm1161 = vcmp.eq.s32.totalorder %v1159, 1
        %v1164 = vcombine.high %v1155, %v1155
        %1165 = vrot.lane.b32.xlu0 %v1155, 16
        %v1166 = vpop.permute.xlu0 %1165
        %1167 = vrot.lane.b32.xlu0 %v1164, 16
        %v1168 = vpop.permute.xlu0 %1167
        %1169 = vrot.lane.b32.xlu0 %v1156, 16
        %v1170 = vpop.permute.xlu0 %1169
        %vm1171 = vcmask 130048
        %v1172 = vsel %vm1171, %v1166, %v1168
        %v1173 = vsel %vm1171, %v1168, %v1170
        %v1176 = vsel %vm1160, %v1172, 0.0
        %v1177 = vsel %vm1161, %v1173, 0.0
        %1179 = vset.pattern.permute.xlu0 17
        %1180 = vperm.xlu0 %1179, %v1157
        %v1181 = vpop.permute.xlu0 %1180
        %v1183 = vmul.f32 %v1176, %v1181
        %v1184 = vmul.f32 %v1177, %v1181
        %v1185 = vadd.f32 %v1117, %v1183
        %v1186 = vadd.f32 %v1118, %v1184
        %vm1187 = vmand %vm1049, %vm543
        %vm1188 = vmand %vm1050, %vm544
        %v1189 = vld [vmem:[#allocation3] sm:$0xff]
        %v1190 = vld [vmem:[#allocation3 + $0x8] sm:$0xf]
        %v1191 = vld [vmem:[%s4] sm:$0xf]
        %v1192 = vsel %vm1187, 1, 0
        %v1193 = vsel %vm1188, 1, 0
        %vm1194 = vcmp.eq.s32.totalorder %v1192, 1
        %vm1195 = vcmp.eq.s32.totalorder %v1193, 1
        %v1198 = vcombine.high %v1189, %v1189
        %1199 = vrot.lane.b32.xlu0 %v1189, 15
        %v1200 = vpop.permute.xlu0 %1199
        %1201 = vrot.lane.b32.xlu0 %v1198, 15
        %v1202 = vpop.permute.xlu0 %1201
        %1203 = vrot.lane.b32.xlu0 %v1190, 15
        %v1204 = vpop.permute.xlu0 %1203
        %vm1205 = vcmask 121856
        %v1206 = vsel %vm1205, %v1200, %v1202
        %v1207 = vsel %vm1205, %v1202, %v1204
        %v1210 = vsel %vm1194, %v1206, 0.0
        %v1211 = vsel %vm1195, %v1207, 0.0
        %1213 = vset.pattern.permute.xlu0 18
        %1214 = vperm.xlu0 %1213, %v1191
        %v1215 = vpop.permute.xlu0 %1214
        %v1217 = vmul.f32 %v1210, %v1215
        %v1218 = vmul.f32 %v1211, %v1215
        %v1219 = vadd.f32 %v1151, %v1217
        %v1220 = vadd.f32 %v1152, %v1218
        %vm1221 = vmand %vm1049, %vm549
        %vm1222 = vmand %vm1050, %vm550
        %v1223 = vld [vmem:[#allocation3] sm:$0xff]
        %v1224 = vld [vmem:[#allocation3 + $0x8] sm:$0xf]
        %v1225 = vld [vmem:[%s4] sm:$0xf]
        %v1226 = vsel %vm1221, 1, 0
        %v1227 = vsel %vm1222, 1, 0
        %vm1228 = vcmp.eq.s32.totalorder %v1226, 1
        %vm1229 = vcmp.eq.s32.totalorder %v1227, 1
        %v1232 = vcombine.high %v1223, %v1223
        %1233 = vrot.lane.b32.xlu0 %v1223, 14
        %v1234 = vpop.permute.xlu0 %1233
        %1235 = vrot.lane.b32.xlu0 %v1232, 14
        %v1236 = vpop.permute.xlu0 %1235
        %1237 = vrot.lane.b32.xlu0 %v1224, 14
        %v1238 = vpop.permute.xlu0 %1237
        %vm1239 = vcmask 113664
        %v1240 = vsel %vm1239, %v1234, %v1236
        %v1241 = vsel %vm1239, %v1236, %v1238
        %v1244 = vsel %vm1228, %v1240, 0.0
        %v1245 = vsel %vm1229, %v1241, 0.0
        %1247 = vset.pattern.permute.xlu0 19
        %1248 = vperm.xlu0 %1247, %v1225
        %v1249 = vpop.permute.xlu0 %1248
        %v1251 = vmul.f32 %v1244, %v1249
        %v1252 = vmul.f32 %v1245, %v1249
        %v1253 = vadd.f32 %v1185, %v1251
        %v1254 = vadd.f32 %v1186, %v1252
        %vm1255 = vmand %vm1049, %vm555
        %vm1256 = vmand %vm1050, %vm556
        %v1257 = vld [vmem:[#allocation3] sm:$0xff]
        %v1258 = vld [vmem:[#allocation3 + $0x8] sm:$0xf]
        %v1259 = vld [vmem:[%s4] sm:$0xf]
        %v1260 = vsel %vm1255, 1, 0
        %v1261 = vsel %vm1256, 1, 0
        %vm1262 = vcmp.eq.s32.totalorder %v1260, 1
        %vm1263 = vcmp.eq.s32.totalorder %v1261, 1
        %v1266 = vcombine.high %v1257, %v1257
        %1267 = vrot.lane.b32.xlu0 %v1257, 13
        %v1268 = vpop.permute.xlu0 %1267
        %1269 = vrot.lane.b32.xlu0 %v1266, 13
        %v1270 = vpop.permute.xlu0 %1269
        %1271 = vrot.lane.b32.xlu0 %v1258, 13
        %v1272 = vpop.permute.xlu0 %1271
        %vm1273 = vcmask 105472
        %v1274 = vsel %vm1273, %v1268, %v1270
        %v1275 = vsel %vm1273, %v1270, %v1272
        %v1278 = vsel %vm1262, %v1274, 0.0
        %v1279 = vsel %vm1263, %v1275, 0.0
        %1281 = vset.pattern.permute.xlu0 20
        %1282 = vperm.xlu0 %1281, %v1259
        %v1283 = vpop.permute.xlu0 %1282
        %v1285 = vmul.f32 %v1278, %v1283
        %v1286 = vmul.f32 %v1279, %v1283
        %v1287 = vadd.f32 %v1219, %v1285
        %v1288 = vadd.f32 %v1220, %v1286
        %vm1289 = vcmp.ge.s32.totalorder %v513, 0
        %vm1290 = vcmp.ge.s32.totalorder %v514, 0
        %vm1291 = vcmp.le.s32.totalorder %v513, 15
        %vm1292 = vcmp.le.s32.totalorder %v514, 15
        %vm1293 = vmand %vm1289, %vm1291
        %vm1294 = vmand %vm1290, %vm1292
        %vm1295 = vmand %vm1293, %vm519
        %vm1296 = vmand %vm1294, %vm520
        %v1297 = vld [vmem:[#allocation3] sm:$0xff]
        %v1298 = vld [vmem:[#allocation3 + $0x8] sm:$0xf]
        %v1299 = vld [vmem:[%s4] sm:$0xf]
        %v1300 = vsel %vm1295, 1, 0
        %v1301 = vsel %vm1296, 1, 0
        %vm1302 = vcmp.eq.s32.totalorder %v1300, 1
        %vm1303 = vcmp.eq.s32.totalorder %v1301, 1
        %v1306 = vcombine.high %v1297, %v1297
        %1307 = vrot.lane.b32.xlu0 %v1297, 3
        %v1308 = vpop.permute.xlu0 %1307
        %1309 = vrot.lane.b32.xlu0 %v1306, 3
        %v1310 = vpop.permute.xlu0 %1309
        %1311 = vrot.lane.b32.xlu0 %v1298, 3
        %v1312 = vpop.permute.xlu0 %1311
        %v1313 = vsel %vm355, %v1308, %v1310
        %v1314 = vsel %vm355, %v1310, %v1312
        %v1317 = vsel %vm1302, %v1313, 0.0
        %v1318 = vsel %vm1303, %v1314, 0.0
        %1320 = vset.pattern.permute.xlu0 21
        %1321 = vperm.xlu0 %1320, %v1299
        %v1322 = vpop.permute.xlu0 %1321
        %v1324 = vmul.f32 %v1317, %v1322
        %v1325 = vmul.f32 %v1318, %v1322
        %v1326 = vadd.f32 %v1253, %v1324
        %v1327 = vadd.f32 %v1254, %v1325
        %vm1328 = vmand %vm1293, %vm525
        %vm1329 = vmand %vm1294, %vm526
        %v1330 = vld [vmem:[#allocation3] sm:$0xff]
        %v1331 = vld [vmem:[#allocation3 + $0x8] sm:$0xf]
        %v1332 = vld [vmem:[%s4] sm:$0xf]
        %v1333 = vsel %vm1328, 1, 0
        %v1334 = vsel %vm1329, 1, 0
        %vm1335 = vcmp.eq.s32.totalorder %v1333, 1
        %vm1336 = vcmp.eq.s32.totalorder %v1334, 1
        %v1339 = vcombine.high %v1330, %v1330
        %1340 = vrot.lane.b32.xlu0 %v1330, 2
        %v1341 = vpop.permute.xlu0 %1340
        %1342 = vrot.lane.b32.xlu0 %v1339, 2
        %v1343 = vpop.permute.xlu0 %1342
        %1344 = vrot.lane.b32.xlu0 %v1331, 2
        %v1345 = vpop.permute.xlu0 %1344
        %v1346 = vsel %vm352, %v1341, %v1343
        %v1347 = vsel %vm352, %v1343, %v1345
        %v1350 = vsel %vm1335, %v1346, 0.0
        %v1351 = vsel %vm1336, %v1347, 0.0
        %1353 = vset.pattern.permute.xlu0 22
        %1354 = vperm.xlu0 %1353, %v1332
        %v1355 = vpop.permute.xlu0 %1354
        %v1357 = vmul.f32 %v1350, %v1355
        %v1358 = vmul.f32 %v1351, %v1355
        %v1359 = vadd.f32 %v1287, %v1357
        %v1360 = vadd.f32 %v1288, %v1358
        %vm1361 = vmand %vm1293, %vm531
        %vm1362 = vmand %vm1294, %vm532
        %v1363 = vld [vmem:[#allocation3] sm:$0xff]
        %v1364 = vld [vmem:[#allocation3 + $0x8] sm:$0xf]
        %v1365 = vld [vmem:[%s4] sm:$0xf]
        %v1366 = vsel %vm1361, 1, 0
        %v1367 = vsel %vm1362, 1, 0
        %vm1368 = vcmp.eq.s32.totalorder %v1366, 1
        %vm1369 = vcmp.eq.s32.totalorder %v1367, 1
        %v1372 = vcombine.high %v1363, %v1363
        %1373 = vrot.lane.b32.xlu0 %v1363, 1
        %v1374 = vpop.permute.xlu0 %1373
        %1375 = vrot.lane.b32.xlu0 %v1372, 1
        %v1376 = vpop.permute.xlu0 %1375
        %1377 = vrot.lane.b32.xlu0 %v1364, 1
        %v1378 = vpop.permute.xlu0 %1377
        %v1379 = vsel %vm349, %v1374, %v1376
        %v1380 = vsel %vm349, %v1376, %v1378
        %v1383 = vsel %vm1368, %v1379, 0.0
        %v1384 = vsel %vm1369, %v1380, 0.0
        %1386 = vset.pattern.permute.xlu0 23
        %1387 = vperm.xlu0 %1386, %v1365
        %v1388 = vpop.permute.xlu0 %1387
        %v1390 = vmul.f32 %v1383, %v1388
        %v1391 = vmul.f32 %v1384, %v1388
        %v1392 = vadd.f32 %v1326, %v1390
        %v1393 = vadd.f32 %v1327, %v1391
        %vm1394 = vmand %vm1293, %vm537
        %vm1395 = vmand %vm1294, %vm538
        %v1396 = vld [vmem:[#allocation3 + $0x4] sm:$0xff]
        %v1397 = vld [vmem:[%s4] sm:$0xf]
        %v1398 = vsel %vm1394, 1, 0
        %v1399 = vsel %vm1395, 1, 0
        %vm1400 = vcmp.eq.s32.totalorder %v1398, 1
        %vm1401 = vcmp.eq.s32.totalorder %v1399, 1
        %v1403 = vcombine.high %v1396, %v1396
        %v1405 = vsel %vm1400, %v1396, 0.0
        %v1406 = vsel %vm1401, %v1403, 0.0
        %1408 = vset.pattern.permute.xlu0 24
        %1409 = vperm.xlu0 %1408, %v1397
        %v1410 = vpop.permute.xlu0 %1409
        %v1412 = vmul.f32 %v1405, %v1410
        %v1413 = vmul.f32 %v1406, %v1410
        %v1414 = vadd.f32 %v1359, %v1412
        %v1415 = vadd.f32 %v1360, %v1413
        %vm1416 = vmand %vm1293, %vm543
        %vm1417 = vmand %vm1294, %vm544
        %v1418 = vld [vmem:[#allocation3 + $0x4] sm:$0xff]
        %v1419 = vld [vmem:[#allocation3 + $0xc] sm:$0xf]
        %v1420 = vld [vmem:[%s4] sm:$0xf]
        %v1421 = vsel %vm1416, 1, 0
        %v1422 = vsel %vm1417, 1, 0
        %vm1423 = vcmp.eq.s32.totalorder %v1421, 1
        %vm1424 = vcmp.eq.s32.totalorder %v1422, 1
        %v1427 = vcombine.high %v1418, %v1418
        %1428 = vrot.lane.b32.xlu0 %v1418, 127
        %v1429 = vpop.permute.xlu0 %1428
        %1430 = vrot.lane.b32.xlu0 %v1427, 127
        %v1431 = vpop.permute.xlu0 %1430
        %1432 = vrot.lane.b32.xlu0 %v1419, 127
        %v1433 = vpop.permute.xlu0 %1432
        %vm1434 = vcmask 1039360
        %v1435 = vsel %vm1434, %v1429, %v1431
        %v1436 = vsel %vm1434, %v1431, %v1433
        %v1439 = vsel %vm1423, %v1435, 0.0
        %v1440 = vsel %vm1424, %v1436, 0.0
        %1442 = vset.pattern.permute.xlu0 25
        %1443 = vperm.xlu0 %1442, %v1420
        %v1444 = vpop.permute.xlu0 %1443
        %v1446 = vmul.f32 %v1439, %v1444
        %v1447 = vmul.f32 %v1440, %v1444
        %v1448 = vadd.f32 %v1392, %v1446
        %v1449 = vadd.f32 %v1393, %v1447
        %vm1450 = vmand %vm1293, %vm549
        %vm1451 = vmand %vm1294, %vm550
        %v1452 = vld [vmem:[#allocation3 + $0x4] sm:$0xff]
        %v1453 = vld [vmem:[#allocation3 + $0xc] sm:$0xf]
        %v1454 = vld [vmem:[%s4] sm:$0xf]
        %v1455 = vsel %vm1450, 1, 0
        %v1456 = vsel %vm1451, 1, 0
        %vm1457 = vcmp.eq.s32.totalorder %v1455, 1
        %vm1458 = vcmp.eq.s32.totalorder %v1456, 1
        %v1461 = vcombine.high %v1452, %v1452
        %1462 = vrot.lane.b32.xlu0 %v1452, 126
        %v1463 = vpop.permute.xlu0 %1462
        %1464 = vrot.lane.b32.xlu0 %v1461, 126
        %v1465 = vpop.permute.xlu0 %1464
        %1466 = vrot.lane.b32.xlu0 %v1453, 126
        %v1467 = vpop.permute.xlu0 %1466
        %vm1468 = vcmask 1031168
        %v1469 = vsel %vm1468, %v1463, %v1465
        %v1470 = vsel %vm1468, %v1465, %v1467
        %v1473 = vsel %vm1457, %v1469, 0.0
        %v1474 = vsel %vm1458, %v1470, 0.0
        %1476 = vset.pattern.permute.xlu0 26
        %1477 = vperm.xlu0 %1476, %v1454
        %v1478 = vpop.permute.xlu0 %1477
        %v1480 = vmul.f32 %v1473, %v1478
        %v1481 = vmul.f32 %v1474, %v1478
        %v1482 = vadd.f32 %v1414, %v1480
        %v1483 = vadd.f32 %v1415, %v1481
        %vm1484 = vmand %vm1293, %vm555
        %vm1485 = vmand %vm1294, %vm556
        %v1486 = vld [vmem:[#allocation3 + $0x4] sm:$0xff]
        %v1487 = vld [vmem:[#allocation3 + $0xc] sm:$0xf]
        %v1488 = vld [vmem:[%s4] sm:$0xf]
        %v1489 = vsel %vm1484, 1, 0
        %v1490 = vsel %vm1485, 1, 0
        %vm1491 = vcmp.eq.s32.totalorder %v1489, 1
        %vm1492 = vcmp.eq.s32.totalorder %v1490, 1
        %v1495 = vcombine.high %v1486, %v1486
        %1496 = vrot.lane.b32.xlu0 %v1486, 125
        %v1497 = vpop.permute.xlu0 %1496
        %1498 = vrot.lane.b32.xlu0 %v1495, 125
        %v1499 = vpop.permute.xlu0 %1498
        %1500 = vrot.lane.b32.xlu0 %v1487, 125
        %v1501 = vpop.permute.xlu0 %1500
        %vm1502 = vcmask 1022976
        %v1503 = vsel %vm1502, %v1497, %v1499
        %v1504 = vsel %vm1502, %v1499, %v1501
        %v1507 = vsel %vm1491, %v1503, 0.0
        %v1508 = vsel %vm1492, %v1504, 0.0
        %1510 = vset.pattern.permute.xlu0 27
        %1511 = vperm.xlu0 %1510, %v1488
        %v1512 = vpop.permute.xlu0 %1511
        %v1514 = vmul.f32 %v1507, %v1512
        %v1515 = vmul.f32 %v1508, %v1512
        %v1516 = vadd.f32 %v1448, %v1514
        %v1517 = vadd.f32 %v1449, %v1515
        %vm1518 = vcmp.ge.s32.totalorder %v513, 4294967295
        %vm1519 = vcmp.ge.s32.totalorder %v514, 4294967295
        %vm1520 = vcmp.le.s32.totalorder %v513, 14
        %vm1521 = vcmp.le.s32.totalorder %v514, 14
        %vm1522 = vmand %vm1518, %vm1520
        %vm1523 = vmand %vm1519, %vm1521
        %vm1524 = vmand %vm1522, %vm519
        %vm1525 = vmand %vm1523, %vm520
        %v1526 = vld [vmem:[#allocation3 + $0x4] sm:$0xff]
        %v1527 = vld [vmem:[#allocation3 + $0xc] sm:$0xf]
        %v1528 = vld [vmem:[%s4] sm:$0xf]
        %v1529 = vsel %vm1524, 1, 0
        %v1530 = vsel %vm1525, 1, 0
        %vm1531 = vcmp.eq.s32.totalorder %v1529, 1
        %vm1532 = vcmp.eq.s32.totalorder %v1530, 1
        %v1535 = vcombine.high %v1526, %v1526
        %1536 = vrot.lane.b32.xlu0 %v1526, 115
        %v1537 = vpop.permute.xlu0 %1536
        %1538 = vrot.lane.b32.xlu0 %v1535, 115
        %v1539 = vpop.permute.xlu0 %1538
        %1540 = vrot.lane.b32.xlu0 %v1527, 115
        %v1541 = vpop.permute.xlu0 %1540
        %vm1542 = vcmask 941056
        %v1543 = vsel %vm1542, %v1537, %v1539
        %v1544 = vsel %vm1542, %v1539, %v1541
        %v1547 = vsel %vm1531, %v1543, 0.0
        %v1548 = vsel %vm1532, %v1544, 0.0
        %1550 = vset.pattern.permute.xlu0 28
        %1551 = vperm.xlu0 %1550, %v1528
        %v1552 = vpop.permute.xlu0 %1551
        %v1554 = vmul.f32 %v1547, %v1552
        %v1555 = vmul.f32 %v1548, %v1552
        %v1556 = vadd.f32 %v1482, %v1554
        %v1557 = vadd.f32 %v1483, %v1555
        %vm1558 = vmand %vm1522, %vm525
        %vm1559 = vmand %vm1523, %vm526
        %v1560 = vld [vmem:[#allocation3 + $0x4] sm:$0xff]
        %v1561 = vld [vmem:[#allocation3 + $0xc] sm:$0xf]
        %v1562 = vld [vmem:[%s4] sm:$0xf]
        %v1563 = vsel %vm1558, 1, 0
        %v1564 = vsel %vm1559, 1, 0
        %vm1565 = vcmp.eq.s32.totalorder %v1563, 1
        %vm1566 = vcmp.eq.s32.totalorder %v1564, 1
        %v1569 = vcombine.high %v1560, %v1560
        %1570 = vrot.lane.b32.xlu0 %v1560, 114
        %v1571 = vpop.permute.xlu0 %1570
        %1572 = vrot.lane.b32.xlu0 %v1569, 114
        %v1573 = vpop.permute.xlu0 %1572
        %1574 = vrot.lane.b32.xlu0 %v1561, 114
        %v1575 = vpop.permute.xlu0 %1574
        %vm1576 = vcmask 932864
        %v1577 = vsel %vm1576, %v1571, %v1573
        %v1578 = vsel %vm1576, %v1573, %v1575
        %v1581 = vsel %vm1565, %v1577, 0.0
        %v1582 = vsel %vm1566, %v1578, 0.0
        %1584 = vset.pattern.permute.xlu0 29
        %1585 = vperm.xlu0 %1584, %v1562
        %v1586 = vpop.permute.xlu0 %1585
        %v1588 = vmul.f32 %v1581, %v1586
        %v1589 = vmul.f32 %v1582, %v1586
        %v1590 = vadd.f32 %v1516, %v1588
        %v1591 = vadd.f32 %v1517, %v1589
        %vm1592 = vmand %vm1522, %vm531
        %vm1593 = vmand %vm1523, %vm532
        %v1594 = vld [vmem:[#allocation3 + $0x4] sm:$0xff]
        %v1595 = vld [vmem:[#allocation3 + $0xc] sm:$0xf]
        %v1596 = vld [vmem:[%s4] sm:$0xf]
        %v1597 = vsel %vm1592, 1, 0
        %v1598 = vsel %vm1593, 1, 0
        %vm1599 = vcmp.eq.s32.totalorder %v1597, 1
        %vm1600 = vcmp.eq.s32.totalorder %v1598, 1
        %v1603 = vcombine.high %v1594, %v1594
        %1604 = vrot.lane.b32.xlu0 %v1594, 113
        %v1605 = vpop.permute.xlu0 %1604
        %1606 = vrot.lane.b32.xlu0 %v1603, 113
        %v1607 = vpop.permute.xlu0 %1606
        %1608 = vrot.lane.b32.xlu0 %v1595, 113
        %v1609 = vpop.permute.xlu0 %1608
        %vm1610 = vcmask 924672
        %v1611 = vsel %vm1610, %v1605, %v1607
        %v1612 = vsel %vm1610, %v1607, %v1609
        %v1615 = vsel %vm1599, %v1611, 0.0
        %v1616 = vsel %vm1600, %v1612, 0.0
        %1618 = vset.pattern.permute.xlu0 30
        %1619 = vperm.xlu0 %1618, %v1596
        %v1620 = vpop.permute.xlu0 %1619
        %v1622 = vmul.f32 %v1615, %v1620
        %v1623 = vmul.f32 %v1616, %v1620
        %v1624 = vadd.f32 %v1556, %v1622
        %v1625 = vadd.f32 %v1557, %v1623
        %vm1626 = vmand %vm1522, %vm537
        %vm1627 = vmand %vm1523, %vm538
        %v1628 = vld [vmem:[#allocation3 + $0x4] sm:$0xff]
        %v1629 = vld [vmem:[#allocation3 + $0xc] sm:$0xf]
        %v1630 = vld [vmem:[%s4] sm:$0xf]
        %v1631 = vsel %vm1626, 1, 0
        %v1632 = vsel %vm1627, 1, 0
        %vm1633 = vcmp.eq.s32.totalorder %v1631, 1
        %vm1634 = vcmp.eq.s32.totalorder %v1632, 1
        %v1637 = vcombine.high %v1628, %v1628
        %1638 = vrot.lane.b32.xlu0 %v1628, 112
        %v1639 = vpop.permute.xlu0 %1638
        %1640 = vrot.lane.b32.xlu0 %v1637, 112
        %v1641 = vpop.permute.xlu0 %1640
        %1642 = vrot.lane.b32.xlu0 %v1629, 112
        %v1643 = vpop.permute.xlu0 %1642
        %vm1644 = vcmask 916480
        %v1645 = vsel %vm1644, %v1639, %v1641
        %v1646 = vsel %vm1644, %v1641, %v1643
        %v1649 = vsel %vm1633, %v1645, 0.0
        %v1650 = vsel %vm1634, %v1646, 0.0
        %1652 = vset.pattern.permute.xlu0 31
        %1653 = vperm.xlu0 %1652, %v1630
        %v1654 = vpop.permute.xlu0 %1653
        %v1656 = vmul.f32 %v1649, %v1654
        %v1657 = vmul.f32 %v1650, %v1654
        %v1658 = vadd.f32 %v1590, %v1656
        %v1659 = vadd.f32 %v1591, %v1657
        %vm1660 = vmand %vm1522, %vm543
        %vm1661 = vmand %vm1523, %vm544
        %v1662 = vld [vmem:[#allocation3 + $0x4] sm:$0xff]
        %v1663 = vld [vmem:[#allocation3 + $0xc] sm:$0xf]
        %v1664 = vld [vmem:[%s4] sm:$0xf]
        %v1665 = vsel %vm1660, 1, 0
        %v1666 = vsel %vm1661, 1, 0
        %vm1667 = vcmp.eq.s32.totalorder %v1665, 1
        %vm1668 = vcmp.eq.s32.totalorder %v1666, 1
        %v1671 = vcombine.high %v1662, %v1662
        %1672 = vrot.lane.b32.xlu0 %v1662, 111
        %v1673 = vpop.permute.xlu0 %1672
        %1674 = vrot.lane.b32.xlu0 %v1671, 111
        %v1675 = vpop.permute.xlu0 %1674
        %1676 = vrot.lane.b32.xlu0 %v1663, 111
        %v1677 = vpop.permute.xlu0 %1676
        %vm1678 = vcmask 908288
        %v1679 = vsel %vm1678, %v1673, %v1675
        %v1680 = vsel %vm1678, %v1675, %v1677
        %v1683 = vsel %vm1667, %v1679, 0.0
        %v1684 = vsel %vm1668, %v1680, 0.0
        %1686 = vset.pattern.permute.xlu0 32
        %1687 = vperm.xlu0 %1686, %v1664
        %v1688 = vpop.permute.xlu0 %1687
        %v1690 = vmul.f32 %v1683, %v1688
        %v1691 = vmul.f32 %v1684, %v1688
        %v1692 = vadd.f32 %v1624, %v1690
        %v1693 = vadd.f32 %v1625, %v1691
        %vm1694 = vmand %vm1522, %vm549
        %vm1695 = vmand %vm1523, %vm550
        %v1696 = vld [vmem:[#allocation3 + $0x4] sm:$0xff]
        %v1697 = vld [vmem:[#allocation3 + $0xc] sm:$0xf]
        %v1698 = vld [vmem:[%s4] sm:$0xf]
        %v1699 = vsel %vm1694, 1, 0
        %v1700 = vsel %vm1695, 1, 0
        %vm1701 = vcmp.eq.s32.totalorder %v1699, 1
        %vm1702 = vcmp.eq.s32.totalorder %v1700, 1
        %v1705 = vcombine.high %v1696, %v1696
        %1706 = vrot.lane.b32.xlu0 %v1696, 110
        %v1707 = vpop.permute.xlu0 %1706
        %1708 = vrot.lane.b32.xlu0 %v1705, 110
        %v1709 = vpop.permute.xlu0 %1708
        %1710 = vrot.lane.b32.xlu0 %v1697, 110
        %v1711 = vpop.permute.xlu0 %1710
        %vm1712 = vcmask 900096
        %v1713 = vsel %vm1712, %v1707, %v1709
        %v1714 = vsel %vm1712, %v1709, %v1711
        %v1717 = vsel %vm1701, %v1713, 0.0
        %v1718 = vsel %vm1702, %v1714, 0.0
        %1720 = vset.pattern.permute.xlu0 33
        %1721 = vperm.xlu0 %1720, %v1698
        %v1722 = vpop.permute.xlu0 %1721
        %v1724 = vmul.f32 %v1717, %v1722
        %v1725 = vmul.f32 %v1718, %v1722
        %v1726 = vadd.f32 %v1658, %v1724
        %v1727 = vadd.f32 %v1659, %v1725
        %vm1728 = vmand %vm1522, %vm555
        %vm1729 = vmand %vm1523, %vm556
        %v1730 = vld [vmem:[#allocation3 + $0x4] sm:$0xff]
        %v1731 = vld [vmem:[#allocation3 + $0xc] sm:$0xf]
        %v1732 = vld [vmem:[%s4] sm:$0xf]
        %v1733 = vsel %vm1728, 1, 0
        %v1734 = vsel %vm1729, 1, 0
        %vm1735 = vcmp.eq.s32.totalorder %v1733, 1
        %vm1736 = vcmp.eq.s32.totalorder %v1734, 1
        %v1739 = vcombine.high %v1730, %v1730
        %1740 = vrot.lane.b32.xlu0 %v1730, 109
        %v1741 = vpop.permute.xlu0 %1740
        %1742 = vrot.lane.b32.xlu0 %v1739, 109
        %v1743 = vpop.permute.xlu0 %1742
        %1744 = vrot.lane.b32.xlu0 %v1731, 109
        %v1745 = vpop.permute.xlu0 %1744
        %vm1746 = vcmask 891904
        %v1747 = vsel %vm1746, %v1741, %v1743
        %v1748 = vsel %vm1746, %v1743, %v1745
        %v1751 = vsel %vm1735, %v1747, 0.0
        %v1752 = vsel %vm1736, %v1748, 0.0
        %1754 = vset.pattern.permute.xlu0 34
        %1755 = vperm.xlu0 %1754, %v1732
        %v1756 = vpop.permute.xlu0 %1755
        %v1758 = vmul.f32 %v1751, %v1756
        %v1759 = vmul.f32 %v1752, %v1756
        %v1760 = vadd.f32 %v1692, %v1758
        %v1761 = vadd.f32 %v1693, %v1759
        %vm1762 = vcmp.ge.s32.totalorder %v513, 4294967294
        %vm1763 = vcmp.ge.s32.totalorder %v514, 4294967294
        %vm1764 = vcmp.le.s32.totalorder %v513, 13
        %vm1765 = vcmp.le.s32.totalorder %v514, 13
        %vm1766 = vmand %vm1762, %vm1764
        %vm1767 = vmand %vm1763, %vm1765
        %vm1768 = vmand %vm1766, %vm519
        %vm1769 = vmand %vm1767, %vm520
        %v1770 = vld [vmem:[#allocation3 + $0x4] sm:$0xff]
        %v1771 = vld [vmem:[#allocation3 + $0xc] sm:$0xf]
        %v1772 = vld [vmem:[%s4] sm:$0xf]
        %v1773 = vsel %vm1768, 1, 0
        %v1774 = vsel %vm1769, 1, 0
        %vm1775 = vcmp.eq.s32.totalorder %v1773, 1
        %vm1776 = vcmp.eq.s32.totalorder %v1774, 1
        %v1779 = vcombine.high %v1770, %v1770
        %1780 = vrot.lane.b32.xlu0 %v1770, 99
        %v1781 = vpop.permute.xlu0 %1780
        %1782 = vrot.lane.b32.xlu0 %v1779, 99
        %v1783 = vpop.permute.xlu0 %1782
        %1784 = vrot.lane.b32.xlu0 %v1771, 99
        %v1785 = vpop.permute.xlu0 %1784
        %vm1786 = vcmask 809984
        %v1787 = vsel %vm1786, %v1781, %v1783
        %v1788 = vsel %vm1786, %v1783, %v1785
        %v1791 = vsel %vm1775, %v1787, 0.0
        %v1792 = vsel %vm1776, %v1788, 0.0
        %1794 = vset.pattern.permute.xlu0 35
        %1795 = vperm.xlu0 %1794, %v1772
        %v1796 = vpop.permute.xlu0 %1795
        %v1798 = vmul.f32 %v1791, %v1796
        %v1799 = vmul.f32 %v1792, %v1796
        %v1800 = vadd.f32 %v1726, %v1798
        %v1801 = vadd.f32 %v1727, %v1799
        %vm1802 = vmand %vm1766, %vm525
        %vm1803 = vmand %vm1767, %vm526
        %v1804 = vld [vmem:[#allocation3 + $0x4] sm:$0xff]
        %v1805 = vld [vmem:[#allocation3 + $0xc] sm:$0xf]
        %v1806 = vld [vmem:[%s4] sm:$0xf]
        %v1807 = vsel %vm1802, 1, 0
        %v1808 = vsel %vm1803, 1, 0
        %vm1809 = vcmp.eq.s32.totalorder %v1807, 1
        %vm1810 = vcmp.eq.s32.totalorder %v1808, 1
        %v1813 = vcombine.high %v1804, %v1804
        %1814 = vrot.lane.b32.xlu0 %v1804, 98
        %v1815 = vpop.permute.xlu0 %1814
        %1816 = vrot.lane.b32.xlu0 %v1813, 98
        %v1817 = vpop.permute.xlu0 %1816
        %1818 = vrot.lane.b32.xlu0 %v1805, 98
        %v1819 = vpop.permute.xlu0 %1818
        %vm1820 = vcmask 801792
        %v1821 = vsel %vm1820, %v1815, %v1817
        %v1822 = vsel %vm1820, %v1817, %v1819
        %v1825 = vsel %vm1809, %v1821, 0.0
        %v1826 = vsel %vm1810, %v1822, 0.0
        %1828 = vset.pattern.permute.xlu0 36
        %1829 = vperm.xlu0 %1828, %v1806
        %v1830 = vpop.permute.xlu0 %1829
        %v1832 = vmul.f32 %v1825, %v1830
        %v1833 = vmul.f32 %v1826, %v1830
        %v1834 = vadd.f32 %v1760, %v1832
        %v1835 = vadd.f32 %v1761, %v1833
        %vm1836 = vmand %vm1766, %vm531
        %vm1837 = vmand %vm1767, %vm532
        %v1838 = vld [vmem:[#allocation3 + $0x4] sm:$0xff]
        %v1839 = vld [vmem:[#allocation3 + $0xc] sm:$0xf]
        %v1840 = vld [vmem:[%s4] sm:$0xf]
        %v1841 = vsel %vm1836, 1, 0
        %v1842 = vsel %vm1837, 1, 0
        %vm1843 = vcmp.eq.s32.totalorder %v1841, 1
        %vm1844 = vcmp.eq.s32.totalorder %v1842, 1
        %v1847 = vcombine.high %v1838, %v1838
        %1848 = vrot.lane.b32.xlu0 %v1838, 97
        %v1849 = vpop.permute.xlu0 %1848
        %1850 = vrot.lane.b32.xlu0 %v1847, 97
        %v1851 = vpop.permute.xlu0 %1850
        %1852 = vrot.lane.b32.xlu0 %v1839, 97
        %v1853 = vpop.permute.xlu0 %1852
        %vm1854 = vcmask 793600
        %v1855 = vsel %vm1854, %v1849, %v1851
        %v1856 = vsel %vm1854, %v1851, %v1853
        %v1859 = vsel %vm1843, %v1855, 0.0
        %v1860 = vsel %vm1844, %v1856, 0.0
        %1862 = vset.pattern.permute.xlu0 37
        %1863 = vperm.xlu0 %1862, %v1840
        %v1864 = vpop.permute.xlu0 %1863
        %v1866 = vmul.f32 %v1859, %v1864
        %v1867 = vmul.f32 %v1860, %v1864
        %v1868 = vadd.f32 %v1800, %v1866
        %v1869 = vadd.f32 %v1801, %v1867
        %vm1870 = vmand %vm1766, %vm537
        %vm1871 = vmand %vm1767, %vm538
        %v1872 = vld [vmem:[#allocation3 + $0x4] sm:$0xff]
        %v1873 = vld [vmem:[#allocation3 + $0xc] sm:$0xf]
        %v1874 = vld [vmem:[%s4] sm:$0xf]
        %v1875 = vsel %vm1870, 1, 0
        %v1876 = vsel %vm1871, 1, 0
        %vm1877 = vcmp.eq.s32.totalorder %v1875, 1
        %vm1878 = vcmp.eq.s32.totalorder %v1876, 1
        %v1881 = vcombine.high %v1872, %v1872
        %1882 = vrot.lane.b32.xlu0 %v1872, 96
        %v1883 = vpop.permute.xlu0 %1882
        %1884 = vrot.lane.b32.xlu0 %v1881, 96
        %v1885 = vpop.permute.xlu0 %1884
        %1886 = vrot.lane.b32.xlu0 %v1873, 96
        %v1887 = vpop.permute.xlu0 %1886
        %vm1888 = vcmask 785408
        %v1889 = vsel %vm1888, %v1883, %v1885
        %v1890 = vsel %vm1888, %v1885, %v1887
        %v1893 = vsel %vm1877, %v1889, 0.0
        %v1894 = vsel %vm1878, %v1890, 0.0
        %1896 = vset.pattern.permute.xlu0 38
        %1897 = vperm.xlu0 %1896, %v1874
        %v1898 = vpop.permute.xlu0 %1897
        %v1900 = vmul.f32 %v1893, %v1898
        %v1901 = vmul.f32 %v1894, %v1898
        %v1902 = vadd.f32 %v1834, %v1900
        %v1903 = vadd.f32 %v1835, %v1901
        %vm1904 = vmand %vm1766, %vm543
        %vm1905 = vmand %vm1767, %vm544
        %v1906 = vld [vmem:[#allocation3 + $0x4] sm:$0xff]
        %v1907 = vld [vmem:[#allocation3 + $0xc] sm:$0xf]
        %v1908 = vld [vmem:[%s4] sm:$0xf]
        %v1909 = vsel %vm1904, 1, 0
        %v1910 = vsel %vm1905, 1, 0
        %vm1911 = vcmp.eq.s32.totalorder %v1909, 1
        %vm1912 = vcmp.eq.s32.totalorder %v1910, 1
        %v1915 = vcombine.high %v1906, %v1906
        %1916 = vrot.lane.b32.xlu0 %v1906, 95
        %v1917 = vpop.permute.xlu0 %1916
        %1918 = vrot.lane.b32.xlu0 %v1915, 95
        %v1919 = vpop.permute.xlu0 %1918
        %1920 = vrot.lane.b32.xlu0 %v1907, 95
        %v1921 = vpop.permute.xlu0 %1920
        %vm1922 = vcmask 777216
        %v1923 = vsel %vm1922, %v1917, %v1919
        %v1924 = vsel %vm1922, %v1919, %v1921
        %v1927 = vsel %vm1911, %v1923, 0.0
        %v1928 = vsel %vm1912, %v1924, 0.0
        %1930 = vset.pattern.permute.xlu0 39
        %1931 = vperm.xlu0 %1930, %v1908
        %v1932 = vpop.permute.xlu0 %1931
        %v1934 = vmul.f32 %v1927, %v1932
        %v1935 = vmul.f32 %v1928, %v1932
        %v1936 = vadd.f32 %v1868, %v1934
        %v1937 = vadd.f32 %v1869, %v1935
        %vm1938 = vmand %vm1766, %vm549
        %vm1939 = vmand %vm1767, %vm550
        %v1940 = vld [vmem:[#allocation3 + $0x4] sm:$0xff]
        %v1941 = vld [vmem:[#allocation3 + $0xc] sm:$0xf]
        %v1942 = vld [vmem:[%s4] sm:$0xf]
        %v1943 = vsel %vm1938, 1, 0
        %v1944 = vsel %vm1939, 1, 0
        %vm1945 = vcmp.eq.s32.totalorder %v1943, 1
        %vm1946 = vcmp.eq.s32.totalorder %v1944, 1
        %v1949 = vcombine.high %v1940, %v1940
        %1950 = vrot.lane.b32.xlu0 %v1940, 94
        %v1951 = vpop.permute.xlu0 %1950
        %1952 = vrot.lane.b32.xlu0 %v1949, 94
        %v1953 = vpop.permute.xlu0 %1952
        %1954 = vrot.lane.b32.xlu0 %v1941, 94
        %v1955 = vpop.permute.xlu0 %1954
        %vm1956 = vcmask 769024
        %v1957 = vsel %vm1956, %v1951, %v1953
        %v1958 = vsel %vm1956, %v1953, %v1955
        %v1961 = vsel %vm1945, %v1957, 0.0
        %v1962 = vsel %vm1946, %v1958, 0.0
        %1964 = vset.pattern.permute.xlu0 40
        %1965 = vperm.xlu0 %1964, %v1942
        %v1966 = vpop.permute.xlu0 %1965
        %v1968 = vmul.f32 %v1961, %v1966
        %v1969 = vmul.f32 %v1962, %v1966
        %v1970 = vadd.f32 %v1902, %v1968
        %v1971 = vadd.f32 %v1903, %v1969
        %vm1972 = vmand %vm1766, %vm555
        %vm1973 = vmand %vm1767, %vm556
        %v1974 = vld [vmem:[#allocation3 + $0x4] sm:$0xff]
        %v1975 = vld [vmem:[#allocation3 + $0xc] sm:$0xf]
        %v1976 = vld [vmem:[%s4] sm:$0xf]
        %v1977 = vsel %vm1972, 1, 0
        %v1978 = vsel %vm1973, 1, 0
        %vm1979 = vcmp.eq.s32.totalorder %v1977, 1
        %vm1980 = vcmp.eq.s32.totalorder %v1978, 1
        %v1983 = vcombine.high %v1974, %v1974
        %1984 = vrot.lane.b32.xlu0 %v1974, 93
        %v1985 = vpop.permute.xlu0 %1984
        %1986 = vrot.lane.b32.xlu0 %v1983, 93
        %v1987 = vpop.permute.xlu0 %1986
        %1988 = vrot.lane.b32.xlu0 %v1975, 93
        %v1989 = vpop.permute.xlu0 %1988
        %vm1990 = vcmask 760832
        %v1991 = vsel %vm1990, %v1985, %v1987
        %v1992 = vsel %vm1990, %v1987, %v1989
        %v1995 = vsel %vm1979, %v1991, 0.0
        %v1996 = vsel %vm1980, %v1992, 0.0
        %1998 = vset.pattern.permute.xlu0 41
        %1999 = vperm.xlu0 %1998, %v1976
        %v2000 = vpop.permute.xlu0 %1999
        %v2002 = vmul.f32 %v1995, %v2000
        %v2003 = vmul.f32 %v1996, %v2000
        %v2004 = vadd.f32 %v1936, %v2002
        %v2005 = vadd.f32 %v1937, %v2003
        %vm2006 = vcmp.ge.s32.totalorder %v513, 4294967293
        %vm2007 = vcmp.ge.s32.totalorder %v514, 4294967293
        %vm2008 = vcmp.le.s32.totalorder %v513, 12
        %vm2009 = vcmp.le.s32.totalorder %v514, 12
        %vm2010 = vmand %vm2006, %vm2008
        %vm2011 = vmand %vm2007, %vm2009
        %vm2012 = vmand %vm2010, %vm519
        %vm2013 = vmand %vm2011, %vm520
        %v2014 = vld [vmem:[#allocation3 + $0x4] sm:$0xff]
        %v2015 = vld [vmem:[#allocation3 + $0xc] sm:$0xf]
        %v2016 = vld [vmem:[%s4] sm:$0xf]
        %v2017 = vsel %vm2012, 1, 0
        %v2018 = vsel %vm2013, 1, 0
        %vm2019 = vcmp.eq.s32.totalorder %v2017, 1
        %vm2020 = vcmp.eq.s32.totalorder %v2018, 1
        %v2023 = vcombine.high %v2014, %v2014
        %2024 = vrot.lane.b32.xlu0 %v2014, 83
        %v2025 = vpop.permute.xlu0 %2024
        %2026 = vrot.lane.b32.xlu0 %v2023, 83
        %v2027 = vpop.permute.xlu0 %2026
        %2028 = vrot.lane.b32.xlu0 %v2015, 83
        %v2029 = vpop.permute.xlu0 %2028
        %vm2030 = vcmask 678912
        %v2031 = vsel %vm2030, %v2025, %v2027
        %v2032 = vsel %vm2030, %v2027, %v2029
        %v2035 = vsel %vm2019, %v2031, 0.0
        %v2036 = vsel %vm2020, %v2032, 0.0
        %2038 = vset.pattern.permute.xlu0 42
        %2039 = vperm.xlu0 %2038, %v2016
        %v2040 = vpop.permute.xlu0 %2039
        %v2042 = vmul.f32 %v2035, %v2040
        %v2043 = vmul.f32 %v2036, %v2040
        %v2044 = vadd.f32 %v1970, %v2042
        %v2045 = vadd.f32 %v1971, %v2043
        %vm2046 = vmand %vm2010, %vm525
        %vm2047 = vmand %vm2011, %vm526
        %v2048 = vld [vmem:[#allocation3 + $0x4] sm:$0xff]
        %v2049 = vld [vmem:[#allocation3 + $0xc] sm:$0xf]
        %v2050 = vld [vmem:[%s4] sm:$0xf]
        %v2051 = vsel %vm2046, 1, 0
        %v2052 = vsel %vm2047, 1, 0
        %vm2053 = vcmp.eq.s32.totalorder %v2051, 1
        %vm2054 = vcmp.eq.s32.totalorder %v2052, 1
        %v2057 = vcombine.high %v2048, %v2048
        %2058 = vrot.lane.b32.xlu0 %v2048, 82
        %v2059 = vpop.permute.xlu0 %2058
        %2060 = vrot.lane.b32.xlu0 %v2057, 82
        %v2061 = vpop.permute.xlu0 %2060
        %2062 = vrot.lane.b32.xlu0 %v2049, 82
        %v2063 = vpop.permute.xlu0 %2062
        %vm2064 = vcmask 670720
        %v2065 = vsel %vm2064, %v2059, %v2061
        %v2066 = vsel %vm2064, %v2061, %v2063
        %v2069 = vsel %vm2053, %v2065, 0.0
        %v2070 = vsel %vm2054, %v2066, 0.0
        %2072 = vset.pattern.permute.xlu0 43
        %2073 = vperm.xlu0 %2072, %v2050
        %v2074 = vpop.permute.xlu0 %2073
        %v2076 = vmul.f32 %v2069, %v2074
        %v2077 = vmul.f32 %v2070, %v2074
        %v2078 = vadd.f32 %v2004, %v2076
        %v2079 = vadd.f32 %v2005, %v2077
        %vm2080 = vmand %vm2010, %vm531
        %vm2081 = vmand %vm2011, %vm532
        %v2082 = vld [vmem:[#allocation3 + $0x4] sm:$0xff]
        %v2083 = vld [vmem:[#allocation3 + $0xc] sm:$0xf]
        %v2084 = vld [vmem:[%s4] sm:$0xf]
        %v2085 = vsel %vm2080, 1, 0
        %v2086 = vsel %vm2081, 1, 0
        %vm2087 = vcmp.eq.s32.totalorder %v2085, 1
        %vm2088 = vcmp.eq.s32.totalorder %v2086, 1
        %v2091 = vcombine.high %v2082, %v2082
        %2092 = vrot.lane.b32.xlu0 %v2082, 81
        %v2093 = vpop.permute.xlu0 %2092
        %2094 = vrot.lane.b32.xlu0 %v2091, 81
        %v2095 = vpop.permute.xlu0 %2094
        %2096 = vrot.lane.b32.xlu0 %v2083, 81
        %v2097 = vpop.permute.xlu0 %2096
        %vm2098 = vcmask 662528
        %v2099 = vsel %vm2098, %v2093, %v2095
        %v2100 = vsel %vm2098, %v2095, %v2097
        %v2103 = vsel %vm2087, %v2099, 0.0
        %v2104 = vsel %vm2088, %v2100, 0.0
        %2106 = vset.pattern.permute.xlu0 44
        %2107 = vperm.xlu0 %2106, %v2084
        %v2108 = vpop.permute.xlu0 %2107
        %v2110 = vmul.f32 %v2103, %v2108
        %v2111 = vmul.f32 %v2104, %v2108
        %v2112 = vadd.f32 %v2044, %v2110
        %v2113 = vadd.f32 %v2045, %v2111
        %vm2114 = vmand %vm2010, %vm537
        %vm2115 = vmand %vm2011, %vm538
        %v2116 = vld [vmem:[#allocation3 + $0x4] sm:$0xff]
        %v2117 = vld [vmem:[#allocation3 + $0xc] sm:$0xf]
        %v2118 = vld [vmem:[%s4] sm:$0xf]
        %v2119 = vsel %vm2114, 1, 0
        %v2120 = vsel %vm2115, 1, 0
        %vm2121 = vcmp.eq.s32.totalorder %v2119, 1
        %vm2122 = vcmp.eq.s32.totalorder %v2120, 1
        %v2125 = vcombine.high %v2116, %v2116
        %2126 = vrot.lane.b32.xlu0 %v2116, 80
        %v2127 = vpop.permute.xlu0 %2126
        %2128 = vrot.lane.b32.xlu0 %v2125, 80
        %v2129 = vpop.permute.xlu0 %2128
        %2130 = vrot.lane.b32.xlu0 %v2117, 80
        %v2131 = vpop.permute.xlu0 %2130
        %vm2132 = vcmask 654336
        %v2133 = vsel %vm2132, %v2127, %v2129
        %v2134 = vsel %vm2132, %v2129, %v2131
        %v2137 = vsel %vm2121, %v2133, 0.0
        %v2138 = vsel %vm2122, %v2134, 0.0
        %2140 = vset.pattern.permute.xlu0 45
        %2141 = vperm.xlu0 %2140, %v2118
        %v2142 = vpop.permute.xlu0 %2141
        %v2144 = vmul.f32 %v2137, %v2142
        %v2145 = vmul.f32 %v2138, %v2142
        %v2146 = vadd.f32 %v2078, %v2144
        %v2147 = vadd.f32 %v2079, %v2145
        %vm2148 = vmand %vm2010, %vm543
        %vm2149 = vmand %vm2011, %vm544
        %v2150 = vld [vmem:[#allocation3 + $0x4] sm:$0xff]
        %v2151 = vld [vmem:[#allocation3 + $0xc] sm:$0xf]
        %v2152 = vld [vmem:[%s4] sm:$0xf]
        %v2153 = vsel %vm2148, 1, 0
        %v2154 = vsel %vm2149, 1, 0
        %vm2155 = vcmp.eq.s32.totalorder %v2153, 1
        %vm2156 = vcmp.eq.s32.totalorder %v2154, 1
        %v2159 = vcombine.high %v2150, %v2150
        %2160 = vrot.lane.b32.xlu0 %v2150, 79
        %v2161 = vpop.permute.xlu0 %2160
        %2162 = vrot.lane.b32.xlu0 %v2159, 79
        %v2163 = vpop.permute.xlu0 %2162
        %2164 = vrot.lane.b32.xlu0 %v2151, 79
        %v2165 = vpop.permute.xlu0 %2164
        %vm2166 = vcmask 646144
        %v2167 = vsel %vm2166, %v2161, %v2163
        %v2168 = vsel %vm2166, %v2163, %v2165
        %v2171 = vsel %vm2155, %v2167, 0.0
        %v2172 = vsel %vm2156, %v2168, 0.0
        %2174 = vset.pattern.permute.xlu0 46
        %2175 = vperm.xlu0 %2174, %v2152
        %v2176 = vpop.permute.xlu0 %2175
        %v2178 = vmul.f32 %v2171, %v2176
        %v2179 = vmul.f32 %v2172, %v2176
        %v2180 = vadd.f32 %v2112, %v2178
        %v2181 = vadd.f32 %v2113, %v2179
        %vm2182 = vmand %vm2010, %vm549
        %vm2183 = vmand %vm2011, %vm550
        %v2184 = vld [vmem:[#allocation3 + $0x4] sm:$0xff]
        %v2185 = vld [vmem:[#allocation3 + $0xc] sm:$0xf]
        %v2186 = vld [vmem:[%s4] sm:$0xf]
        %v2187 = vsel %vm2182, 1, 0
        %v2188 = vsel %vm2183, 1, 0
        %vm2189 = vcmp.eq.s32.totalorder %v2187, 1
        %vm2190 = vcmp.eq.s32.totalorder %v2188, 1
        %v2193 = vcombine.high %v2184, %v2184
        %2194 = vrot.lane.b32.xlu0 %v2184, 78
        %v2195 = vpop.permute.xlu0 %2194
        %2196 = vrot.lane.b32.xlu0 %v2193, 78
        %v2197 = vpop.permute.xlu0 %2196
        %2198 = vrot.lane.b32.xlu0 %v2185, 78
        %v2199 = vpop.permute.xlu0 %2198
        %vm2200 = vcmask 637952
        %v2201 = vsel %vm2200, %v2195, %v2197
        %v2202 = vsel %vm2200, %v2197, %v2199
        %v2205 = vsel %vm2189, %v2201, 0.0
        %v2206 = vsel %vm2190, %v2202, 0.0
        %2208 = vset.pattern.permute.xlu0 47
        %2209 = vperm.xlu0 %2208, %v2186
        %v2210 = vpop.permute.xlu0 %2209
        %v2212 = vmul.f32 %v2205, %v2210
        %v2213 = vmul.f32 %v2206, %v2210
        %v2214 = vadd.f32 %v2146, %v2212
        %v2215 = vadd.f32 %v2147, %v2213
        %vm2216 = vmand %vm2010, %vm555
        %vm2217 = vmand %vm2011, %vm556
        %v2218 = vld [vmem:[#allocation3 + $0x4] sm:$0xff]
        %v2219 = vld [vmem:[#allocation3 + $0xc] sm:$0xf]
        %v2220 = vld [vmem:[%s4] sm:$0xf]
        %v2221 = vsel %vm2216, 1, 0
        %v2222 = vsel %vm2217, 1, 0
        %vm2223 = vcmp.eq.s32.totalorder %v2221, 1
        %vm2224 = vcmp.eq.s32.totalorder %v2222, 1
        %v2227 = vcombine.high %v2218, %v2218
        %2228 = vrot.lane.b32.xlu0 %v2218, 77
        %v2229 = vpop.permute.xlu0 %2228
        %2230 = vrot.lane.b32.xlu0 %v2227, 77
        %v2231 = vpop.permute.xlu0 %2230
        %2232 = vrot.lane.b32.xlu0 %v2219, 77
        %v2233 = vpop.permute.xlu0 %2232
        %vm2234 = vcmask 629760
        %v2235 = vsel %vm2234, %v2229, %v2231
        %v2236 = vsel %vm2234, %v2231, %v2233
        %v2239 = vsel %vm2223, %v2235, 0.0
        %v2240 = vsel %vm2224, %v2236, 0.0
        %2242 = vset.pattern.permute.xlu0 48
        %2243 = vperm.xlu0 %2242, %v2220
        %v2244 = vpop.permute.xlu0 %2243
        %v2246 = vmul.f32 %v2239, %v2244
        %v2247 = vmul.f32 %v2240, %v2244
        %v2248 = vadd.f32 %v2180, %v2246
        %v2249 = vadd.f32 %v2181, %v2247
        %v2250 = vadd.f32 %v2248, %v2214
        %v2251 = vadd.f32 %v2249, %v2215
        %vm2252 = vcmask 1043456
        %v2253 = vsel %vm2252, %v2250, 0.0
        %v2254 = vrot.slane %v2253, 4
        %v2255 = vadd.f32 %v2253, %v2254
        %v2256 = vrot.slane %v2255, 2
        %v2257 = vadd.f32 %v2255, %v2256
        %v2258 = vrot.slane %v2257, 1
        %v2259 = vadd.f32 %v2257, %v2258
        %v2260 = vsel %vm2252, %v2251, 0.0
        %v2261 = vrot.slane %v2260, 4
        %v2262 = vadd.f32 %v2260, %v2261
        %v2263 = vrot.slane %v2262, 2
        %v2264 = vadd.f32 %v2262, %v2263
        %v2265 = vrot.slane %v2264, 1
        %v2266 = vadd.f32 %v2264, %v2265
        %s2267 = sld [smem:[#allocation5]]
        %v2268 = vstv %s2267
        %v2269 = vadd.f32 %v2259, %v2268
        %v2270 = vadd.f32 %v2266, %v2268
        %v2271 = vxor.u32 %v2269, 2147483648
        %v2272 = vxor.u32 %v2270, 2147483648
        %v2273 = vmul.f32 %v2271, 1.442695
        %v2274 = vpow.pop %v2273
        %v2275 = vmul.f32 %v2272, 1.442695
        %v2276 = vpow.pop %v2275
        %v2277 = vadd.f32 %v2274, 1.0
        %v2278 = vadd.f32 %v2276, 1.0
        %v2279 = vrcp.pop %v2277
        %v2280 = vmul.f32 1.0, %v2279
        %v2281 = vrcp.pop %v2278
        %v2282 = vmul.f32 1.0, %v2281
        %v2283 = vadd.f32 %v428, %v2280
        %v2284 = vadd.f32 %v428, %v2282
        %v2285 = vadd.f32 %v430, %v2280
        %v2286 = vadd.f32 %v430, %v2282
        %v2287 = vadd.f32 %v2283, 1.0
        %v2288 = vadd.f32 %v2284, 1.0
        %v2289 = vadd.f32 %v2285, 1.0
        %v2290 = vadd.f32 %v2286, 1.0
        %v2291 = vsub.f32 %v312, %v316
        %v2292 = vsub.f32 %v313, %v317
        %v2293 = vsub.f32 %v314, %v318
        %v2294 = vsub.f32 %v315, %v319
        %v2295 = vmul.f32 %v2287, %v2291
        %v2296 = vmul.f32 %v2288, %v2292
        %v2297 = vmul.f32 %v2289, %v2293
        %v2298 = vmul.f32 %v2290, %v2294
        %v2299 = vmul.f32 %v316, 4.0
        %v2300 = vmul.f32 %v317, 4.0
        %v2301 = vmul.f32 %v318, 4.0
        %v2302 = vmul.f32 %v319, 4.0
        %v2303 = vadd.f32 %v2295, %v2299
        %v2304 = vadd.f32 %v2296, %v2300
        %v2305 = vadd.f32 %v2297, %v2301
        %v2306 = vadd.f32 %v2298, %v2302
        %2307 = vst [vmem:[%s311] sm:$0xff] %v2303
        %2308 = vst [vmem:[%s311 + $0x8] sm:$0xff] %v2304
        %2309 = vst [vmem:[%s311 + $0x10] sm:$0xff] %v2305
        %2310 = vst [vmem:[%s311 + $0x18] sm:$0xff] %v2306
        %s2311 = sand.u32 %s172, 1
        %s2312 = scalar_lea.sflag [#allocation8], %s2311
        %s2313 = sand.u32 %s172, 1
        %s2314 = smul.addr %s2313, 32
        %s2315 = scalar_lea.vmem [#allocation11], %s2314
        // Predicated region
        $region53: #{tpu_custom_call.1} parent=43 // pred_check
          %p2316 = pneg %p182
        $region54: #{tpu_custom_call.1} parent=43 // pred_check_branch
          %2318 = sbr.rel (%p2316) target = $region56
        $region55: #{tpu_custom_call.1} parent=43 // pred_region
          %s2320 = ssub.s32 512, 512
          %2321 = vsyncadd %s2312, %s2320
          %s2322 = smul.addr %s28, 4
          %s2323 = smul.addr %s2322, 128
          %s2324 = scalar_lea.hbm %s6, %s2323
          %s2325 = sshll.u32 %s2315, 4
          %s2326 = int_to_ptr.vmem [resolvable:$true] %s2325
          %2331 = dma.vmem_to_hbm [thread:$0]  %s2326, 512, %s2324, %s2312, 256, 256, 16
        $region56: #{tpu_custom_call.1} parent=43 // pred_fallthru
          _
      $region44: #{tpu_custom_call.1} parent=5 // pred_fallthru
        _
      %p2332 = scmp.le.s32.totalorder 2, %s23
      // Predicated region
      $region57: #{tpu_custom_call.1} parent=5 // pred_check
        %p2333 = pneg %p2332
      $region58: #{tpu_custom_call.1} parent=5 // pred_check_branch
        %2335 = sbr.rel (%p2333) target = $region60
      $region59: #{tpu_custom_call.1} parent=5 // pred_region
        %s2336 = ssub.s32 %s23, 2
        // Predicated region
        $region61: #{tpu_custom_call.1} parent=59 // pred_check
          %p2337 = pneg %p188
        $region62: #{tpu_custom_call.1} parent=59 // pred_check_branch
          %2339 = sbr.rel (%p2337) target = $region64
        $region63: #{tpu_custom_call.1} parent=59 // pred_region
          %s2340 = sand.u32 %s173, 1
          %s2341 = scalar_lea.sflag [#allocation8], %s2340
          %s2342 = sand.u32 %s173, 1
          %s2343 = smul.addr %s2342, 32
          %s2344 = scalar_lea.vmem [#allocation11], %s2343
          %2345 = dma.done %s2341, 512
        $region64: #{tpu_custom_call.1} parent=59 // pred_fallthru
          _
      $region60: #{tpu_custom_call.1} parent=5 // pred_fallthru
        _
    $region6: #{tpu_custom_call.1} parent=1 // loop_footer
      %s27 = sadd.s32 1, %s23
    $region7: #{tpu_custom_call.1} parent=1 // loop_footer_branch
      %22 = sbr.rel target = $region3
    $region8: #{tpu_custom_call.1} parent=1 // loop_exit
      _
    %2346 = vsyncpa [#allocation7], 1
    %s2347 = scalar_lea.sflag [#allocation7], 1
    %2348 = vsyncpa %s2347, 1
    %2349 = vsyncpa [#allocation10], 1
    %s2350 = scalar_lea.sflag [#allocation10], 1
    %2351 = vsyncpa %s2350, 1
    %2352 = vsyncpa [#allocation8], 1
    %s2353 = scalar_lea.sflag [#allocation8], 1
    %2354 = vsyncpa %s2353, 1

</llo_original>
